<compile_context>
chip_gen: v7x
topology: tpu7x:2x2x1
jax: 0.10.0
libtpu: 0.0.40
codegen_flags: <defaults>
</compile_context>

<pallas_src>
import jax
import jax.numpy as jnp
from jax.experimental import pallas as pl
from jax.experimental.pallas import tpu as pltpu


# ----------------------------------------------------------------------------
# Shared slab layouts (row offsets are static Python ints derived from S, H).
# ----------------------------------------------------------------------------
def _round8(n):
    return (n + 7) // 8 * 8


def _lstm_layout(H):
    """Row layout of one layer's section in the packed LSTM-parameter slab (width 8*Hd)."""
    Hd = H // 2
    wih_rows = 2 * H          # [W_ih fwd block ; W_ih bwd block], each [H, 8*Hd]
    whh_rows = 2 * Hd         # block-diagonal hidden->gate weights
    layer_rows = _round8(wih_rows + whh_rows + 1)   # +1 fused-bias row, pad to sublane tile
    return wih_rows, whh_rows, layer_rows


def _mlp_layout(S, H):
    """Row layout of the packed embedding + MLP slab (width H). All offsets multiples of 8."""
    emb0 = 0
    w1_0 = _round8(S)
    b1_0 = w1_0 + H
    w2_0 = _round8(b1_0 + 1)
    b2_0 = w2_0 + H
    total = _round8(b2_0 + 1)
    return emb0, w1_0, b1_0, w2_0, b2_0, total


# ----------------------------------------------------------------------------
# Pallas kernel: fused 2-layer bidirectional LSTM + MLP head, all in VMEM/vregs.
# ----------------------------------------------------------------------------
def prompt_encoder_kernel(lstm_ref, mlp_ref, out_ref):
    S, H = out_ref.shape
    Hd = H // 2
    G = 2 * Hd                       # width of one fused gate chunk (== H)
    wih_rows, whh_rows, layer_rows = _lstm_layout(H)
    emb0, w1_0, b1_0, w2_0, b2_0, _ = _mlp_layout(S, H)

    # Row-reversal permutation (anti-diagonal).  Used (a) to feed the bwd direction the
    # time-reversed sequence through its own fused input projection and (b) to un-reverse
    # the bwd outputs when assembling a layer's output.  Two tiny off-chain MXU ops per
    # layer replace all per-step fwd/bwd selection work.
    rr = jax.lax.broadcasted_iota(jnp.int32, (S, S), 0)
    cc = jax.lax.broadcasted_iota(jnp.int32, (S, S), 1)
    p_rev = (rr + cc == S - 1).astype(jnp.float32)

    row_ids = jax.lax.broadcasted_iota(jnp.int32, (S, 1), 0)
    is_fwd_lane = jax.lax.broadcasted_iota(jnp.int32, (S, 2 * Hd), 1) < Hd

    x = mlp_ref[emb0:emb0 + S, :]    # layer-0 input: embedding weight (arange gather == weight)

    for layer in range(2):
        base = layer * layer_rows
        # Static ref slices of the packed slab (zero runtime cost, sublane-aligned).
        wih_f = lstm_ref[base:base + H, :]                         # fwd-dir input weights
        wih_b = lstm_ref[base + H:base + 2 * H, :]                 # bwd-dir input weights
        whh = lstm_ref[base + wih_rows:base + wih_rows + whh_rows, :]
        bias = lstm_ref[base + wih_rows + whh_rows:
                        base + wih_rows + whh_rows + 1, :]         # b_ih + b_hh, both dirs

        # All S time steps' input projections for BOTH directions, hoisted out of the
        # recurrence: row t of gx_all already holds fwd(t) and bwd(S-1-t) gate
        # pre-activations, so the time loop does no per-step selection at all.
        x_rev = jnp.dot(p_rev, x, preferred_element_type=jnp.float32)
        gx_all = (jnp.dot(x, wih_f, preferred_element_type=jnp.float32)
                  + jnp.dot(x_rev, wih_b, preferred_element_type=jnp.float32)
                  + bias)                                          # [S, 8*Hd]

        # Recurrent state lives in vregs for the whole recurrence.
        h = jnp.zeros((1, 2 * Hd), jnp.float32)                    # [h_fwd | h_bwd]
        c = jnp.zeros((1, 2 * Hd), jnp.float32)                    # [c_fwd | c_bwd]
        # Layer output accumulates as a vreg-resident value (no VMEM scratch round trip).
        y = jnp.zeros((S, 2 * Hd), jnp.float32)

        # Fused fwd/bwd time loop, fully unrolled (S static & tiny): iteration t advances
        # the fwd direction at time t and the bwd direction at time S-1-t.
        # TODO(synk): see header — recurrent dot kept on the MXU pending benchmarking of a
        #             weight-stationary explicit-MXU / VPU alternative.
        for t in range(S):
            gates = gx_all[t:t + 1, :] + jnp.dot(
                h, whh, preferred_element_type=jnp.float32)        # [1, 8*Hd]
            # One EUP push over the full 128-lane gate row; the g-gate columns were
            # pre-scaled by 2 in the wrapper, so tanh(g_pre) == 2*sigmoid(2*g_pre) - 1.
            sig = jax.nn.sigmoid(gates)
            i_g = sig[:, 0 * G:1 * G]
            f_g = sig[:, 1 * G:2 * G]
            g_g = 2.0 * sig[:, 2 * G:3 * G] - 1.0
            o_g = sig[:, 3 * G:4 * G]
            c = f_g * c + i_g * g_g
            h = o_g * jnp.tanh(c)      # 2nd (short) EUP push; 2 pushes/step total (was 3)
            # Collect this step's output off the critical h/c chain: row t of y gets
            # [h_fwd(t) | h_bwd(reverse-time t)]; bwd lanes are un-reversed after the loop.
            y = jnp.where(row_ids == t, h, y)

        # Bidirectional layer output: fwd lanes straight from y, bwd lanes from the
        # row-reversed copy.  Feeds the next layer / the MLP head, stays in vregs.
        y_rev = jnp.dot(p_rev, y, preferred_element_type=jnp.float32)
        x = jnp.where(is_fwd_lane, y, y_rev)
        # TODO(synk): nn.LSTM inter-layer dropout (train only) skipped — inference semantics.

    # MLP head: Linear -> ReLU -> Linear.
    w1 = mlp_ref[w1_0:w1_0 + H, :]
    b1 = mlp_ref[b1_0:b1_0 + 1, :]
    w2 = mlp_ref[w2_0:w2_0 + H, :]
    b2 = mlp_ref[b2_0:b2_0 + 1, :]
    h1 = jnp.maximum(jnp.dot(x, w1, preferred_element_type=jnp.float32) + b1, 0.0)
    out_ref[...] = jnp.dot(h1, w2, preferred_element_type=jnp.float32) + b2


# ----------------------------------------------------------------------------
# JAX wrapper: weight packing (direction fusion, bias folding, g-gate pre-scale,
# slab assembly) + pallas_call.
# ----------------------------------------------------------------------------
def prompt_encoder_forward(emb, w_ih, w_hh, b_ih, b_hh, w1, b1, w2, b2):
    """All weight args are in PyTorch layout:
       w_ih: [4, 4*Hd, H], w_hh: [4, 4*Hd, Hd], b_*: [4, 1, 4*Hd]  (index = 2*layer + dir),
       w1/w2: [H, H] (out, in), b1/b2: [1, H].  Returns [S, H]."""
    S, H = emb.shape
    Hd = H // 2
    wih_rows, whh_rows, layer_rows = _lstm_layout(H)
    emb0, w1_0, b1_0, w2_0, b2_0, mlp_rows = _mlp_layout(S, H)

    def fuse_cols(a_f, a_b):
        # a_*: [..., 4*Hd] per direction (PyTorch gate order i, f, g, o).
        # Returns [..., 8*Hd] with columns interleaved per gate:
        #   [i_f, i_b, f_f, f_b, g_f, g_b, o_f, o_b]  (each chunk Hd wide).
        lead = a_f.shape[:-1]
        af = a_f.reshape(lead + (4, Hd))
        ab = a_b.reshape(lead + (4, Hd))
        return jnp.stack([af, ab], axis=-2).reshape(lead + (8 * Hd,))

    # tanh(x) = 2*sigmoid(2x) - 1: fold the x2 into the g-gate columns (free at runtime).
    gate_scale = jnp.ones((1, 8 * Hd), jnp.float32).at[:, 4 * Hd:6 * Hd].set(2.0)

    # Slab 1: all LSTM parameters in one lane-dense [*, 8*Hd] array (one DMA instead of 3).
    lstm_slab = jnp.zeros((2 * layer_rows, 8 * Hd), jnp.float32)
    for layer in range(2):
        f, b = 2 * layer, 2 * layer + 1
        zh = jnp.zeros((H, 4 * Hd), jnp.float32)
        zd = jnp.zeros((Hd, 4 * Hd), jnp.float32)
        wih_f = fuse_cols(w_ih[f].T, zh) * gate_scale            # [H, 8*Hd], fwd columns only
        wih_b = fuse_cols(zh, w_ih[b].T) * gate_scale            # [H, 8*Hd], bwd columns only
        whh2 = jnp.concatenate([fuse_cols(w_hh[f].T, zd),        # block-diagonal [2*Hd, 8*Hd]
                                fuse_cols(zd, w_hh[b].T)], axis=0) * gate_scale
        bias = fuse_cols(b_ih[f] + b_hh[f], b_ih[b] + b_hh[b]) * gate_scale   # [1, 8*Hd]
        base = layer * layer_rows
        lstm_slab = lstm_slab.at[base:base + H].set(wih_f)
        lstm_slab = lstm_slab.at[base + H:base + 2 * H].set(wih_b)
        lstm_slab = lstm_slab.at[base + wih_rows:base + wih_rows + whh_rows].set(whh2)
        lstm_slab = lstm_slab.at[base + wih_rows + whh_rows].set(bias[0])

    # Slab 2: embedding output (arange indices => the embedding weight itself) plus the MLP
    # head weights pre-transposed to [in, out] layout.
    mlp_slab = jnp.zeros((mlp_rows, H), jnp.float32)
    mlp_slab = mlp_slab.at[emb0:emb0 + S].set(emb)
    mlp_slab = mlp_slab.at[w1_0:w1_0 + H].set(w1.T)
    mlp_slab = mlp_slab.at[b1_0].set(b1[0])
    mlp_slab = mlp_slab.at[w2_0:w2_0 + H].set(w2.T)
    mlp_slab = mlp_slab.at[b2_0].set(b2[0])

    vmem = pl.BlockSpec(memory_space=pltpu.MemorySpace.VMEM)
    return pl.pallas_call(
        prompt_encoder_kernel,
        out_shape=jax.ShapeDtypeStruct((S, H), jnp.float32),
        in_specs=[vmem, vmem],
        out_specs=vmem,
        # Single invocation: no grid / pipelining / dimension_semantics — total footprint is
        # well under VMEM on v5e/v6e/v7x, and any grid step would cost more than it wraps.
    )(lstm_slab, mlp_slab)


# ----------------------------------------------------------------------------
# Pure-JAX reference (for correctness check only).
# ----------------------------------------------------------------------------
def _lstm_dir_ref(x, w_ih, w_hh, b_ih, b_hh, reverse):
    Hd = w_hh.shape[1]

    def step(carry, xt):
        h, c = carry
        gates = xt @ w_ih.T + b_ih + h @ w_hh.T + b_hh
        i = jax.nn.sigmoid(gates[0 * Hd:1 * Hd])
        f = jax.nn.sigmoid(gates[1 * Hd:2 * Hd])
        g = jnp.tanh(gates[2 * Hd:3 * Hd])
        o = jax.nn.sigmoid(gates[3 * Hd:4 * Hd])
        c = f * c + i * g
        h = o * jnp.tanh(c)
        return (h, c), h

    xs = x[::-1] if reverse else x
    init = (jnp.zeros((Hd,), jnp.float32), jnp.zeros((Hd,), jnp.float32))
    _, hs = jax.lax.scan(step, init, xs)
    return hs[::-1] if reverse else hs


def prompt_encoder_ref(emb, w_ih, w_hh, b_ih, b_hh, w1, b1, w2, b2):
    x = emb
    for layer in range(2):
        fwd = _lstm_dir_ref(x, w_ih[2 * layer], w_hh[2 * layer],
                            b_ih[2 * layer, 0], b_hh[2 * layer, 0], False)
        bwd = _lstm_dir_ref(x, w_ih[2 * layer + 1], w_hh[2 * layer + 1],
                            b_ih[2 * layer + 1, 0], b_hh[2 * layer + 1, 0], True)
        x = jnp.concatenate([fwd, bwd], axis=-1)
    h1 = jnp.maximum(x @ w1.T + b1, 0.0)
    return h1 @ w2.T + b2


# ----------------------------------------------------------------------------
# Main.
# ----------------------------------------------------------------------------
if __name__ == "__main__":
    H = 32                       # hidden_size
    template = (3, 3, 2)         # args.model.template -> spell_length = 8
    S = sum(template)
    Hd = H // 2

    key = jax.random.PRNGKey(0)
    keys = jax.random.split(key, 9)
    k = 1.0 / (Hd ** 0.5)

    # Deterministic parameter init (shapes mirror the PyTorch module's __init__).
    emb = jax.random.normal(keys[0], (S, H), jnp.float32)                       # Embedding weight
    w_ih = jax.random.uniform(keys[1], (4, 4 * Hd, H), jnp.float32, -k, k)      # (layer,dir) x W_ih
    w_hh = jax.random.uniform(keys[2], (4, 4 * Hd, Hd), jnp.float32, -k, k)     # (layer,dir) x W_hh
    b_ih = jax.random.uniform(keys[3], (4, 1, 4 * Hd), jnp.float32, -k, k)
    b_hh = jax.random.uniform(keys[4], (4, 1, 4 * Hd), jnp.float32, -k, k)
    kl = 1.0 / (H ** 0.5)
    w1 = jax.random.uniform(keys[5], (H, H), jnp.float32, -kl, kl)              # mlp Linear 1
    b1 = jax.random.uniform(keys[6], (1, H), jnp.float32, -kl, kl)
    w2 = jax.random.uniform(keys[7], (H, H), jnp.float32, -kl, kl)              # mlp Linear 2
    b2 = jax.random.uniform(keys[8], (1, H), jnp.float32, -kl, kl)

    out = prompt_encoder_forward(emb, w_ih, w_hh, b_ih, b_hh, w1, b1, w2, b2)
    out = jax.block_until_ready(out)

    ref = prompt_encoder_ref(emb, w_ih, w_hh, b_ih, b_hh, w1, b1, w2, b2)
    ref = jax.block_until_ready(ref)

    assert out.shape == (S, H), out.shape
    assert jnp.allclose(out, ref, rtol=1e-4, atol=1e-4), \
        float(jnp.max(jnp.abs(out - ref)))

    print("KERNEL_OK")
</pallas_src>

<mosaic_0001>
module attributes {stable_mosaic.version = 11 : i64} {
  func.func @prompt_encoder_kernel(%arg0: memref<208x128xf32, #tpu.memory_space<vmem>>, %arg1: memref<88x32xf32, #tpu.memory_space<vmem>>, %arg2: memref<8x32xf32, #tpu.memory_space<vmem>>) attributes {dimension_semantics = [], scalar_prefetch = 0 : i64, scratch_operands = 0 : i64, tpu.core_type = #tpu.core_type<tc>} {
    %0 = tpu.iota {dimensions = array<i32: 0>} : vector<8x8xi32>
    %1 = tpu.iota {dimensions = array<i32: 1>} : vector<8x8xi32>
    %2 = arith.addi %0, %1 : vector<8x8xi32>
    %c7_i32 = arith.constant 7 : i32
    %3 = vector.broadcast %c7_i32 : i32 to vector<8x8xi32>
    %4 = arith.cmpi eq, %2, %3 : vector<8x8xi32>
    %5 = arith.extui %4 : vector<8x8xi1> to vector<8x8xi32>
    %6 = arith.sitofp %5 : vector<8x8xi32> to vector<8x8xf32>
    %7 = tpu.iota {dimensions = array<i32: 0>} : vector<8x1xi32>
    %8 = tpu.iota {dimensions = array<i32: 1>} : vector<8x32xi32>
    %c16_i32 = arith.constant 16 : i32
    %9 = vector.broadcast %c16_i32 : i32 to vector<8x32xi32>
    %10 = arith.cmpi slt, %8, %9 : vector<8x32xi32>
    %c0 = arith.constant 0 : index
    %c0_0 = arith.constant 0 : index
    %11 = vector.load %arg1[%c0, %c0_0] : memref<88x32xf32, #tpu.memory_space<vmem>>, vector<8x32xf32>
    %c0_1 = arith.constant 0 : index
    %c0_2 = arith.constant 0 : index
    %12 = vector.load %arg0[%c0_1, %c0_2] : memref<208x128xf32, #tpu.memory_space<vmem>>, vector<32x128xf32>
    %c32 = arith.constant 32 : index
    %c0_3 = arith.constant 0 : index
    %13 = vector.load %arg0[%c32, %c0_3] : memref<208x128xf32, #tpu.memory_space<vmem>>, vector<32x128xf32>
    %c64 = arith.constant 64 : index
    %c0_4 = arith.constant 0 : index
    %14 = vector.load %arg0[%c64, %c0_4] : memref<208x128xf32, #tpu.memory_space<vmem>>, vector<32x128xf32>
    %c96 = arith.constant 96 : index
    %c0_5 = arith.constant 0 : index
    %15 = vector.load %arg0[%c96, %c0_5] : memref<208x128xf32, #tpu.memory_space<vmem>>, vector<1x128xf32>
    %cst = arith.constant dense<0.000000e+00> : vector<8x32xf32>
    %16 = tpu.matmul %6, %11, %cst {dimension_numbers = #tpu.dot_dimension_numbers<[1], [0], [0], [1], [0, 0, 1, 1], [], []>} : vector<8x8xf32>, vector<8x32xf32>, vector<8x32xf32> -> vector<8x32xf32>
    %cst_6 = arith.constant dense<0.000000e+00> : vector<8x128xf32>
    %17 = tpu.matmul %11, %12, %cst_6 {dimension_numbers = #tpu.dot_dimension_numbers<[1], [0], [0], [1], [0, 0, 1, 1], [], []>} : vector<8x32xf32>, vector<32x128xf32>, vector<8x128xf32> -> vector<8x128xf32>
    %cst_7 = arith.constant dense<0.000000e+00> : vector<8x128xf32>
    %18 = tpu.matmul %16, %13, %cst_7 {dimension_numbers = #tpu.dot_dimension_numbers<[1], [0], [0], [1], [0, 0, 1, 1], [], []>} : vector<8x32xf32>, vector<32x128xf32>, vector<8x128xf32> -> vector<8x128xf32>
    %19 = arith.addf %17, %18 : vector<8x128xf32>
    %20 = vector.broadcast %15 : vector<1x128xf32> to vector<8x128xf32>
    %21 = arith.addf %19, %20 : vector<8x128xf32>
    %cst_8 = arith.constant 0.000000e+00 : f32
    %22 = vector.broadcast %cst_8 : f32 to vector<1x32xf32>
    %cst_9 = arith.constant 0.000000e+00 : f32
    %23 = vector.broadcast %cst_9 : f32 to vector<1x32xf32>
    %cst_10 = arith.constant 0.000000e+00 : f32
    %24 = vector.broadcast %cst_10 : f32 to vector<8x32xf32>
    %25 = vector.extract_strided_slice %21 {offsets = [0, 0], sizes = [1, 128], strides = [1, 1]} : vector<8x128xf32> to vector<1x128xf32>
    %cst_11 = arith.constant dense<0.000000e+00> : vector<1x128xf32>
    %26 = tpu.matmul %22, %14, %cst_11 {dimension_numbers = #tpu.dot_dimension_numbers<[1], [0], [0], [1], [0, 0, 1, 1], [], []>} : vector<1x32xf32>, vector<32x128xf32>, vector<1x128xf32> -> vector<1x128xf32>
    %27 = arith.addf %25, %26 : vector<1x128xf32>
    %28 = arith.negf %27 : vector<1x128xf32>
    %29 = math.exp %28 : vector<1x128xf32>
    %cst_12 = arith.constant 1.000000e+00 : f32
    %30 = vector.broadcast %cst_12 : f32 to vector<1x128xf32>
    %31 = arith.addf %30, %29 : vector<1x128xf32>
    %32 = arith.divf %30, %31 : vector<1x128xf32>
    %33 = vector.extract_strided_slice %32 {offsets = [0, 0], sizes = [1, 32], strides = [1, 1]} : vector<1x128xf32> to vector<1x32xf32>
    %34 = vector.extract_strided_slice %32 {offsets = [0, 32], sizes = [1, 32], strides = [1, 1]} : vector<1x128xf32> to vector<1x32xf32>
    %35 = vector.extract_strided_slice %32 {offsets = [0, 64], sizes = [1, 32], strides = [1, 1]} : vector<1x128xf32> to vector<1x32xf32>
    %cst_13 = arith.constant 2.000000e+00 : f32
    %36 = vector.broadcast %cst_13 : f32 to vector<1x32xf32>
    %37 = arith.mulf %36, %35 : vector<1x32xf32>
    %cst_14 = arith.constant 1.000000e+00 : f32
    %38 = vector.broadcast %cst_14 : f32 to vector<1x32xf32>
    %39 = arith.subf %37, %38 : vector<1x32xf32>
    %40 = vector.extract_strided_slice %32 {offsets = [0, 96], sizes = [1, 32], strides = [1, 1]} : vector<1x128xf32> to vector<1x32xf32>
    %41 = arith.mulf %34, %23 : vector<1x32xf32>
    %42 = arith.mulf %33, %39 : vector<1x32xf32>
    %43 = arith.addf %41, %42 : vector<1x32xf32>
    %44 = math.tanh %43 : vector<1x32xf32>
    %45 = arith.mulf %40, %44 : vector<1x32xf32>
    %c0_i32 = arith.constant 0 : i32
    %46 = vector.broadcast %c0_i32 : i32 to vector<8x1xi32>
    %47 = arith.cmpi eq, %7, %46 : vector<8x1xi32>
    %48 = vector.shape_cast %47 : vector<8x1xi1> to vector<8x1xi1>
    %49 = vector.broadcast %48 : vector<8x1xi1> to vector<8x32xi1>
    %50 = vector.shape_cast %45 : vector<1x32xf32> to vector<1x32xf32>
    %51 = vector.broadcast %50 : vector<1x32xf32> to vector<8x32xf32>
    %52 = arith.select %49, %51, %24 : vector<8x32xi1>, vector<8x32xf32>
    %53 = vector.extract_strided_slice %21 {offsets = [1, 0], sizes = [1, 128], strides = [1, 1]} : vector<8x128xf32> to vector<1x128xf32>
    %cst_15 = arith.constant dense<0.000000e+00> : vector<1x128xf32>
    %54 = tpu.matmul %45, %14, %cst_15 {dimension_numbers = #tpu.dot_dimension_numbers<[1], [0], [0], [1], [0, 0, 1, 1], [], []>} : vector<1x32xf32>, vector<32x128xf32>, vector<1x128xf32> -> vector<1x128xf32>
    %55 = arith.addf %53, %54 : vector<1x128xf32>
    %56 = arith.negf %55 : vector<1x128xf32>
    %57 = math.exp %56 : vector<1x128xf32>
    %cst_16 = arith.constant 1.000000e+00 : f32
    %58 = vector.broadcast %cst_16 : f32 to vector<1x128xf32>
    %59 = arith.addf %58, %57 : vector<1x128xf32>
    %60 = arith.divf %58, %59 : vector<1x128xf32>
    %61 = vector.extract_strided_slice %60 {offsets = [0, 0], sizes = [1, 32], strides = [1, 1]} : vector<1x128xf32> to vector<1x32xf32>
    %62 = vector.extract_strided_slice %60 {offsets = [0, 32], sizes = [1, 32], strides = [1, 1]} : vector<1x128xf32> to vector<1x32xf32>
    %63 = vector.extract_strided_slice %60 {offsets = [0, 64], sizes = [1, 32], strides = [1, 1]} : vector<1x128xf32> to vector<1x32xf32>
    %cst_17 = arith.constant 2.000000e+00 : f32
    %64 = vector.broadcast %cst_17 : f32 to vector<1x32xf32>
    %65 = arith.mulf %64, %63 : vector<1x32xf32>
    %cst_18 = arith.constant 1.000000e+00 : f32
    %66 = vector.broadcast %cst_18 : f32 to vector<1x32xf32>
    %67 = arith.subf %65, %66 : vector<1x32xf32>
    %68 = vector.extract_strided_slice %60 {offsets = [0, 96], sizes = [1, 32], strides = [1, 1]} : vector<1x128xf32> to vector<1x32xf32>
    %69 = arith.mulf %62, %43 : vector<1x32xf32>
    %70 = arith.mulf %61, %67 : vector<1x32xf32>
    %71 = arith.addf %69, %70 : vector<1x32xf32>
    %72 = math.tanh %71 : vector<1x32xf32>
    %73 = arith.mulf %68, %72 : vector<1x32xf32>
    %c1_i32 = arith.constant 1 : i32
    %74 = vector.broadcast %c1_i32 : i32 to vector<8x1xi32>
    %75 = arith.cmpi eq, %7, %74 : vector<8x1xi32>
    %76 = vector.shape_cast %75 : vector<8x1xi1> to vector<8x1xi1>
    %77 = vector.broadcast %76 : vector<8x1xi1> to vector<8x32xi1>
    %78 = vector.shape_cast %73 : vector<1x32xf32> to vector<1x32xf32>
    %79 = vector.broadcast %78 : vector<1x32xf32> to vector<8x32xf32>
    %80 = arith.select %77, %79, %52 : vector<8x32xi1>, vector<8x32xf32>
    %81 = vector.extract_strided_slice %21 {offsets = [2, 0], sizes = [1, 128], strides = [1, 1]} : vector<8x128xf32> to vector<1x128xf32>
    %cst_19 = arith.constant dense<0.000000e+00> : vector<1x128xf32>
    %82 = tpu.matmul %73, %14, %cst_19 {dimension_numbers = #tpu.dot_dimension_numbers<[1], [0], [0], [1], [0, 0, 1, 1], [], []>} : vector<1x32xf32>, vector<32x128xf32>, vector<1x128xf32> -> vector<1x128xf32>
    %83 = arith.addf %81, %82 : vector<1x128xf32>
    %84 = arith.negf %83 : vector<1x128xf32>
    %85 = math.exp %84 : vector<1x128xf32>
    %cst_20 = arith.constant 1.000000e+00 : f32
    %86 = vector.broadcast %cst_20 : f32 to vector<1x128xf32>
    %87 = arith.addf %86, %85 : vector<1x128xf32>
    %88 = arith.divf %86, %87 : vector<1x128xf32>
    %89 = vector.extract_strided_slice %88 {offsets = [0, 0], sizes = [1, 32], strides = [1, 1]} : vector<1x128xf32> to vector<1x32xf32>
    %90 = vector.extract_strided_slice %88 {offsets = [0, 32], sizes = [1, 32], strides = [1, 1]} : vector<1x128xf32> to vector<1x32xf32>
    %91 = vector.extract_strided_slice %88 {offsets = [0, 64], sizes = [1, 32], strides = [1, 1]} : vector<1x128xf32> to vector<1x32xf32>
    %cst_21 = arith.constant 2.000000e+00 : f32
    %92 = vector.broadcast %cst_21 : f32 to vector<1x32xf32>
    %93 = arith.mulf %92, %91 : vector<1x32xf32>
    %cst_22 = arith.constant 1.000000e+00 : f32
    %94 = vector.broadcast %cst_22 : f32 to vector<1x32xf32>
    %95 = arith.subf %93, %94 : vector<1x32xf32>
    %96 = vector.extract_strided_slice %88 {offsets = [0, 96], sizes = [1, 32], strides = [1, 1]} : vector<1x128xf32> to vector<1x32xf32>
    %97 = arith.mulf %90, %71 : vector<1x32xf32>
    %98 = arith.mulf %89, %95 : vector<1x32xf32>
    %99 = arith.addf %97, %98 : vector<1x32xf32>
    %100 = math.tanh %99 : vector<1x32xf32>
    %101 = arith.mulf %96, %100 : vector<1x32xf32>
    %c2_i32 = arith.constant 2 : i32
    %102 = vector.broadcast %c2_i32 : i32 to vector<8x1xi32>
    %103 = arith.cmpi eq, %7, %102 : vector<8x1xi32>
    %104 = vector.shape_cast %103 : vector<8x1xi1> to vector<8x1xi1>
    %105 = vector.broadcast %104 : vector<8x1xi1> to vector<8x32xi1>
    %106 = vector.shape_cast %101 : vector<1x32xf32> to vector<1x32xf32>
    %107 = vector.broadcast %106 : vector<1x32xf32> to vector<8x32xf32>
    %108 = arith.select %105, %107, %80 : vector<8x32xi1>, vector<8x32xf32>
    %109 = vector.extract_strided_slice %21 {offsets = [3, 0], sizes = [1, 128], strides = [1, 1]} : vector<8x128xf32> to vector<1x128xf32>
    %cst_23 = arith.constant dense<0.000000e+00> : vector<1x128xf32>
    %110 = tpu.matmul %101, %14, %cst_23 {dimension_numbers = #tpu.dot_dimension_numbers<[1], [0], [0], [1], [0, 0, 1, 1], [], []>} : vector<1x32xf32>, vector<32x128xf32>, vector<1x128xf32> -> vector<1x128xf32>
    %111 = arith.addf %109, %110 : vector<1x128xf32>
    %112 = arith.negf %111 : vector<1x128xf32>
    %113 = math.exp %112 : vector<1x128xf32>
    %cst_24 = arith.constant 1.000000e+00 : f32
    %114 = vector.broadcast %cst_24 : f32 to vector<1x128xf32>
    %115 = arith.addf %114, %113 : vector<1x128xf32>
    %116 = arith.divf %114, %115 : vector<1x128xf32>
    %117 = vector.extract_strided_slice %116 {offsets = [0, 0], sizes = [1, 32], strides = [1, 1]} : vector<1x128xf32> to vector<1x32xf32>
    %118 = vector.extract_strided_slice %116 {offsets = [0, 32], sizes = [1, 32], strides = [1, 1]} : vector<1x128xf32> to vector<1x32xf32>
    %119 = vector.extract_strided_slice %116 {offsets = [0, 64], sizes = [1, 32], strides = [1, 1]} : vector<1x128xf32> to vector<1x32xf32>
    %cst_25 = arith.constant 2.000000e+00 : f32
    %120 = vector.broadcast %cst_25 : f32 to vector<1x32xf32>
    %121 = arith.mulf %120, %119 : vector<1x32xf32>
    %cst_26 = arith.constant 1.000000e+00 : f32
    %122 = vector.broadcast %cst_26 : f32 to vector<1x32xf32>
    %123 = arith.subf %121, %122 : vector<1x32xf32>
    %124 = vector.extract_strided_slice %116 {offsets = [0, 96], sizes = [1, 32], strides = [1, 1]} : vector<1x128xf32> to vector<1x32xf32>
    %125 = arith.mulf %118, %99 : vector<1x32xf32>
    %126 = arith.mulf %117, %123 : vector<1x32xf32>
    %127 = arith.addf %125, %126 : vector<1x32xf32>
    %128 = math.tanh %127 : vector<1x32xf32>
    %129 = arith.mulf %124, %128 : vector<1x32xf32>
    %c3_i32 = arith.constant 3 : i32
    %130 = vector.broadcast %c3_i32 : i32 to vector<8x1xi32>
    %131 = arith.cmpi eq, %7, %130 : vector<8x1xi32>
    %132 = vector.shape_cast %131 : vector<8x1xi1> to vector<8x1xi1>
    %133 = vector.broadcast %132 : vector<8x1xi1> to vector<8x32xi1>
    %134 = vector.shape_cast %129 : vector<1x32xf32> to vector<1x32xf32>
    %135 = vector.broadcast %134 : vector<1x32xf32> to vector<8x32xf32>
    %136 = arith.select %133, %135, %108 : vector<8x32xi1>, vector<8x32xf32>
    %137 = vector.extract_strided_slice %21 {offsets = [4, 0], sizes = [1, 128], strides = [1, 1]} : vector<8x128xf32> to vector<1x128xf32>
    %cst_27 = arith.constant dense<0.000000e+00> : vector<1x128xf32>
    %138 = tpu.matmul %129, %14, %cst_27 {dimension_numbers = #tpu.dot_dimension_numbers<[1], [0], [0], [1], [0, 0, 1, 1], [], []>} : vector<1x32xf32>, vector<32x128xf32>, vector<1x128xf32> -> vector<1x128xf32>
    %139 = arith.addf %137, %138 : vector<1x128xf32>
    %140 = arith.negf %139 : vector<1x128xf32>
    %141 = math.exp %140 : vector<1x128xf32>
    %cst_28 = arith.constant 1.000000e+00 : f32
    %142 = vector.broadcast %cst_28 : f32 to vector<1x128xf32>
    %143 = arith.addf %142, %141 : vector<1x128xf32>
    %144 = arith.divf %142, %143 : vector<1x128xf32>
    %145 = vector.extract_strided_slice %144 {offsets = [0, 0], sizes = [1, 32], strides = [1, 1]} : vector<1x128xf32> to vector<1x32xf32>
    %146 = vector.extract_strided_slice %144 {offsets = [0, 32], sizes = [1, 32], strides = [1, 1]} : vector<1x128xf32> to vector<1x32xf32>
    %147 = vector.extract_strided_slice %144 {offsets = [0, 64], sizes = [1, 32], strides = [1, 1]} : vector<1x128xf32> to vector<1x32xf32>
    %cst_29 = arith.constant 2.000000e+00 : f32
    %148 = vector.broadcast %cst_29 : f32 to vector<1x32xf32>
    %149 = arith.mulf %148, %147 : vector<1x32xf32>
    %cst_30 = arith.constant 1.000000e+00 : f32
    %150 = vector.broadcast %cst_30 : f32 to vector<1x32xf32>
    %151 = arith.subf %149, %150 : vector<1x32xf32>
    %152 = vector.extract_strided_slice %144 {offsets = [0, 96], sizes = [1, 32], strides = [1, 1]} : vector<1x128xf32> to vector<1x32xf32>
    %153 = arith.mulf %146, %127 : vector<1x32xf32>
    %154 = arith.mulf %145, %151 : vector<1x32xf32>
    %155 = arith.addf %153, %154 : vector<1x32xf32>
    %156 = math.tanh %155 : vector<1x32xf32>
    %157 = arith.mulf %152, %156 : vector<1x32xf32>
    %c4_i32 = arith.constant 4 : i32
    %158 = vector.broadcast %c4_i32 : i32 to vector<8x1xi32>
    %159 = arith.cmpi eq, %7, %158 : vector<8x1xi32>
    %160 = vector.shape_cast %159 : vector<8x1xi1> to vector<8x1xi1>
    %161 = vector.broadcast %160 : vector<8x1xi1> to vector<8x32xi1>
    %162 = vector.shape_cast %157 : vector<1x32xf32> to vector<1x32xf32>
    %163 = vector.broadcast %162 : vector<1x32xf32> to vector<8x32xf32>
    %164 = arith.select %161, %163, %136 : vector<8x32xi1>, vector<8x32xf32>
    %165 = vector.extract_strided_slice %21 {offsets = [5, 0], sizes = [1, 128], strides = [1, 1]} : vector<8x128xf32> to vector<1x128xf32>
    %cst_31 = arith.constant dense<0.000000e+00> : vector<1x128xf32>
    %166 = tpu.matmul %157, %14, %cst_31 {dimension_numbers = #tpu.dot_dimension_numbers<[1], [0], [0], [1], [0, 0, 1, 1], [], []>} : vector<1x32xf32>, vector<32x128xf32>, vector<1x128xf32> -> vector<1x128xf32>
    %167 = arith.addf %165, %166 : vector<1x128xf32>
    %168 = arith.negf %167 : vector<1x128xf32>
    %169 = math.exp %168 : vector<1x128xf32>
    %cst_32 = arith.constant 1.000000e+00 : f32
    %170 = vector.broadcast %cst_32 : f32 to vector<1x128xf32>
    %171 = arith.addf %170, %169 : vector<1x128xf32>
    %172 = arith.divf %170, %171 : vector<1x128xf32>
    %173 = vector.extract_strided_slice %172 {offsets = [0, 0], sizes = [1, 32], strides = [1, 1]} : vector<1x128xf32> to vector<1x32xf32>
    %174 = vector.extract_strided_slice %172 {offsets = [0, 32], sizes = [1, 32], strides = [1, 1]} : vector<1x128xf32> to vector<1x32xf32>
    %175 = vector.extract_strided_slice %172 {offsets = [0, 64], sizes = [1, 32], strides = [1, 1]} : vector<1x128xf32> to vector<1x32xf32>
    %cst_33 = arith.constant 2.000000e+00 : f32
    %176 = vector.broadcast %cst_33 : f32 to vector<1x32xf32>
    %177 = arith.mulf %176, %175 : vector<1x32xf32>
    %cst_34 = arith.constant 1.000000e+00 : f32
    %178 = vector.broadcast %cst_34 : f32 to vector<1x32xf32>
    %179 = arith.subf %177, %178 : vector<1x32xf32>
    %180 = vector.extract_strided_slice %172 {offsets = [0, 96], sizes = [1, 32], strides = [1, 1]} : vector<1x128xf32> to vector<1x32xf32>
    %181 = arith.mulf %174, %155 : vector<1x32xf32>
    %182 = arith.mulf %173, %179 : vector<1x32xf32>
    %183 = arith.addf %181, %182 : vector<1x32xf32>
    %184 = math.tanh %183 : vector<1x32xf32>
    %185 = arith.mulf %180, %184 : vector<1x32xf32>
    %c5_i32 = arith.constant 5 : i32
    %186 = vector.broadcast %c5_i32 : i32 to vector<8x1xi32>
    %187 = arith.cmpi eq, %7, %186 : vector<8x1xi32>
    %188 = vector.shape_cast %187 : vector<8x1xi1> to vector<8x1xi1>
    %189 = vector.broadcast %188 : vector<8x1xi1> to vector<8x32xi1>
    %190 = vector.shape_cast %185 : vector<1x32xf32> to vector<1x32xf32>
    %191 = vector.broadcast %190 : vector<1x32xf32> to vector<8x32xf32>
    %192 = arith.select %189, %191, %164 : vector<8x32xi1>, vector<8x32xf32>
    %193 = vector.extract_strided_slice %21 {offsets = [6, 0], sizes = [1, 128], strides = [1, 1]} : vector<8x128xf32> to vector<1x128xf32>
    %cst_35 = arith.constant dense<0.000000e+00> : vector<1x128xf32>
    %194 = tpu.matmul %185, %14, %cst_35 {dimension_numbers = #tpu.dot_dimension_numbers<[1], [0], [0], [1], [0, 0, 1, 1], [], []>} : vector<1x32xf32>, vector<32x128xf32>, vector<1x128xf32> -> vector<1x128xf32>
    %195 = arith.addf %193, %194 : vector<1x128xf32>
    %196 = arith.negf %195 : vector<1x128xf32>
    %197 = math.exp %196 : vector<1x128xf32>
    %cst_36 = arith.constant 1.000000e+00 : f32
    %198 = vector.broadcast %cst_36 : f32 to vector<1x128xf32>
    %199 = arith.addf %198, %197 : vector<1x128xf32>
    %200 = arith.divf %198, %199 : vector<1x128xf32>
    %201 = vector.extract_strided_slice %200 {offsets = [0, 0], sizes = [1, 32], strides = [1, 1]} : vector<1x128xf32> to vector<1x32xf32>
    %202 = vector.extract_strided_slice %200 {offsets = [0, 32], sizes = [1, 32], strides = [1, 1]} : vector<1x128xf32> to vector<1x32xf32>
    %203 = vector.extract_strided_slice %200 {offsets = [0, 64], sizes = [1, 32], strides = [1, 1]} : vector<1x128xf32> to vector<1x32xf32>
    %cst_37 = arith.constant 2.000000e+00 : f32
    %204 = vector.broadcast %cst_37 : f32 to vector<1x32xf32>
    %205 = arith.mulf %204, %203 : vector<1x32xf32>
    %cst_38 = arith.constant 1.000000e+00 : f32
    %206 = vector.broadcast %cst_38 : f32 to vector<1x32xf32>
    %207 = arith.subf %205, %206 : vector<1x32xf32>
    %208 = vector.extract_strided_slice %200 {offsets = [0, 96], sizes = [1, 32], strides = [1, 1]} : vector<1x128xf32> to vector<1x32xf32>
    %209 = arith.mulf %202, %183 : vector<1x32xf32>
    %210 = arith.mulf %201, %207 : vector<1x32xf32>
    %211 = arith.addf %209, %210 : vector<1x32xf32>
    %212 = math.tanh %211 : vector<1x32xf32>
    %213 = arith.mulf %208, %212 : vector<1x32xf32>
    %c6_i32 = arith.constant 6 : i32
    %214 = vector.broadcast %c6_i32 : i32 to vector<8x1xi32>
    %215 = arith.cmpi eq, %7, %214 : vector<8x1xi32>
    %216 = vector.shape_cast %215 : vector<8x1xi1> to vector<8x1xi1>
    %217 = vector.broadcast %216 : vector<8x1xi1> to vector<8x32xi1>
    %218 = vector.shape_cast %213 : vector<1x32xf32> to vector<1x32xf32>
    %219 = vector.broadcast %218 : vector<1x32xf32> to vector<8x32xf32>
    %220 = arith.select %217, %219, %192 : vector<8x32xi1>, vector<8x32xf32>
    %221 = vector.extract_strided_slice %21 {offsets = [7, 0], sizes = [1, 128], strides = [1, 1]} : vector<8x128xf32> to vector<1x128xf32>
    %cst_39 = arith.constant dense<0.000000e+00> : vector<1x128xf32>
    %222 = tpu.matmul %213, %14, %cst_39 {dimension_numbers = #tpu.dot_dimension_numbers<[1], [0], [0], [1], [0, 0, 1, 1], [], []>} : vector<1x32xf32>, vector<32x128xf32>, vector<1x128xf32> -> vector<1x128xf32>
    %223 = arith.addf %221, %222 : vector<1x128xf32>
    %224 = arith.negf %223 : vector<1x128xf32>
    %225 = math.exp %224 : vector<1x128xf32>
    %cst_40 = arith.constant 1.000000e+00 : f32
    %226 = vector.broadcast %cst_40 : f32 to vector<1x128xf32>
    %227 = arith.addf %226, %225 : vector<1x128xf32>
    %228 = arith.divf %226, %227 : vector<1x128xf32>
    %229 = vector.extract_strided_slice %228 {offsets = [0, 0], sizes = [1, 32], strides = [1, 1]} : vector<1x128xf32> to vector<1x32xf32>
    %230 = vector.extract_strided_slice %228 {offsets = [0, 32], sizes = [1, 32], strides = [1, 1]} : vector<1x128xf32> to vector<1x32xf32>
    %231 = vector.extract_strided_slice %228 {offsets = [0, 64], sizes = [1, 32], strides = [1, 1]} : vector<1x128xf32> to vector<1x32xf32>
    %cst_41 = arith.constant 2.000000e+00 : f32
    %232 = vector.broadcast %cst_41 : f32 to vector<1x32xf32>
    %233 = arith.mulf %232, %231 : vector<1x32xf32>
    %cst_42 = arith.constant 1.000000e+00 : f32
    %234 = vector.broadcast %cst_42 : f32 to vector<1x32xf32>
    %235 = arith.subf %233, %234 : vector<1x32xf32>
    %236 = vector.extract_strided_slice %228 {offsets = [0, 96], sizes = [1, 32], strides = [1, 1]} : vector<1x128xf32> to vector<1x32xf32>
    %237 = arith.mulf %230, %211 : vector<1x32xf32>
    %238 = arith.mulf %229, %235 : vector<1x32xf32>
    %239 = arith.addf %237, %238 : vector<1x32xf32>
    %240 = math.tanh %239 : vector<1x32xf32>
    %241 = arith.mulf %236, %240 : vector<1x32xf32>
    %c7_i32_43 = arith.constant 7 : i32
    %242 = vector.broadcast %c7_i32_43 : i32 to vector<8x1xi32>
    %243 = arith.cmpi eq, %7, %242 : vector<8x1xi32>
    %244 = vector.shape_cast %243 : vector<8x1xi1> to vector<8x1xi1>
    %245 = vector.broadcast %244 : vector<8x1xi1> to vector<8x32xi1>
    %246 = vector.shape_cast %241 : vector<1x32xf32> to vector<1x32xf32>
    %247 = vector.broadcast %246 : vector<1x32xf32> to vector<8x32xf32>
    %248 = arith.select %245, %247, %220 : vector<8x32xi1>, vector<8x32xf32>
    %cst_44 = arith.constant dense<0.000000e+00> : vector<8x32xf32>
    %249 = tpu.matmul %6, %248, %cst_44 {dimension_numbers = #tpu.dot_dimension_numbers<[1], [0], [0], [1], [0, 0, 1, 1], [], []>} : vector<8x8xf32>, vector<8x32xf32>, vector<8x32xf32> -> vector<8x32xf32>
    %250 = arith.select %10, %248, %249 : vector<8x32xi1>, vector<8x32xf32>
    %c104 = arith.constant 104 : index
    %c0_45 = arith.constant 0 : index
    %251 = vector.load %arg0[%c104, %c0_45] : memref<208x128xf32, #tpu.memory_space<vmem>>, vector<32x128xf32>
    %c136 = arith.constant 136 : index
    %c0_46 = arith.constant 0 : index
    %252 = vector.load %arg0[%c136, %c0_46] : memref<208x128xf32, #tpu.memory_space<vmem>>, vector<32x128xf32>
    %c168 = arith.constant 168 : index
    %c0_47 = arith.constant 0 : index
    %253 = vector.load %arg0[%c168, %c0_47] : memref<208x128xf32, #tpu.memory_space<vmem>>, vector<32x128xf32>
    %c200 = arith.constant 200 : index
    %c0_48 = arith.constant 0 : index
    %254 = vector.load %arg0[%c200, %c0_48] : memref<208x128xf32, #tpu.memory_space<vmem>>, vector<1x128xf32>
    %cst_49 = arith.constant dense<0.000000e+00> : vector<8x32xf32>
    %255 = tpu.matmul %6, %250, %cst_49 {dimension_numbers = #tpu.dot_dimension_numbers<[1], [0], [0], [1], [0, 0, 1, 1], [], []>} : vector<8x8xf32>, vector<8x32xf32>, vector<8x32xf32> -> vector<8x32xf32>
    %cst_50 = arith.constant dense<0.000000e+00> : vector<8x128xf32>
    %256 = tpu.matmul %250, %251, %cst_50 {dimension_numbers = #tpu.dot_dimension_numbers<[1], [0], [0], [1], [0, 0, 1, 1], [], []>} : vector<8x32xf32>, vector<32x128xf32>, vector<8x128xf32> -> vector<8x128xf32>
    %cst_51 = arith.constant dense<0.000000e+00> : vector<8x128xf32>
    %257 = tpu.matmul %255, %252, %cst_51 {dimension_numbers = #tpu.dot_dimension_numbers<[1], [0], [0], [1], [0, 0, 1, 1], [], []>} : vector<8x32xf32>, vector<32x128xf32>, vector<8x128xf32> -> vector<8x128xf32>
    %258 = arith.addf %256, %257 : vector<8x128xf32>
    %259 = vector.broadcast %254 : vector<1x128xf32> to vector<8x128xf32>
    %260 = arith.addf %258, %259 : vector<8x128xf32>
    %cst_52 = arith.constant 0.000000e+00 : f32
    %261 = vector.broadcast %cst_52 : f32 to vector<1x32xf32>
    %cst_53 = arith.constant 0.000000e+00 : f32
    %262 = vector.broadcast %cst_53 : f32 to vector<1x32xf32>
    %cst_54 = arith.constant 0.000000e+00 : f32
    %263 = vector.broadcast %cst_54 : f32 to vector<8x32xf32>
    %264 = vector.extract_strided_slice %260 {offsets = [0, 0], sizes = [1, 128], strides = [1, 1]} : vector<8x128xf32> to vector<1x128xf32>
    %cst_55 = arith.constant dense<0.000000e+00> : vector<1x128xf32>
    %265 = tpu.matmul %261, %253, %cst_55 {dimension_numbers = #tpu.dot_dimension_numbers<[1], [0], [0], [1], [0, 0, 1, 1], [], []>} : vector<1x32xf32>, vector<32x128xf32>, vector<1x128xf32> -> vector<1x128xf32>
    %266 = arith.addf %264, %265 : vector<1x128xf32>
    %267 = arith.negf %266 : vector<1x128xf32>
    %268 = math.exp %267 : vector<1x128xf32>
    %cst_56 = arith.constant 1.000000e+00 : f32
    %269 = vector.broadcast %cst_56 : f32 to vector<1x128xf32>
    %270 = arith.addf %269, %268 : vector<1x128xf32>
    %271 = arith.divf %269, %270 : vector<1x128xf32>
    %272 = vector.extract_strided_slice %271 {offsets = [0, 0], sizes = [1, 32], strides = [1, 1]} : vector<1x128xf32> to vector<1x32xf32>
    %273 = vector.extract_strided_slice %271 {offsets = [0, 32], sizes = [1, 32], strides = [1, 1]} : vector<1x128xf32> to vector<1x32xf32>
    %274 = vector.extract_strided_slice %271 {offsets = [0, 64], sizes = [1, 32], strides = [1, 1]} : vector<1x128xf32> to vector<1x32xf32>
    %cst_57 = arith.constant 2.000000e+00 : f32
    %275 = vector.broadcast %cst_57 : f32 to vector<1x32xf32>
    %276 = arith.mulf %275, %274 : vector<1x32xf32>
    %cst_58 = arith.constant 1.000000e+00 : f32
    %277 = vector.broadcast %cst_58 : f32 to vector<1x32xf32>
    %278 = arith.subf %276, %277 : vector<1x32xf32>
    %279 = vector.extract_strided_slice %271 {offsets = [0, 96], sizes = [1, 32], strides = [1, 1]} : vector<1x128xf32> to vector<1x32xf32>
    %280 = arith.mulf %273, %262 : vector<1x32xf32>
    %281 = arith.mulf %272, %278 : vector<1x32xf32>
    %282 = arith.addf %280, %281 : vector<1x32xf32>
    %283 = math.tanh %282 : vector<1x32xf32>
    %284 = arith.mulf %279, %283 : vector<1x32xf32>
    %c0_i32_59 = arith.constant 0 : i32
    %285 = vector.broadcast %c0_i32_59 : i32 to vector<8x1xi32>
    %286 = arith.cmpi eq, %7, %285 : vector<8x1xi32>
    %287 = vector.shape_cast %286 : vector<8x1xi1> to vector<8x1xi1>
    %288 = vector.broadcast %287 : vector<8x1xi1> to vector<8x32xi1>
    %289 = vector.shape_cast %284 : vector<1x32xf32> to vector<1x32xf32>
    %290 = vector.broadcast %289 : vector<1x32xf32> to vector<8x32xf32>
    %291 = arith.select %288, %290, %263 : vector<8x32xi1>, vector<8x32xf32>
    %292 = vector.extract_strided_slice %260 {offsets = [1, 0], sizes = [1, 128], strides = [1, 1]} : vector<8x128xf32> to vector<1x128xf32>
    %cst_60 = arith.constant dense<0.000000e+00> : vector<1x128xf32>
    %293 = tpu.matmul %284, %253, %cst_60 {dimension_numbers = #tpu.dot_dimension_numbers<[1], [0], [0], [1], [0, 0, 1, 1], [], []>} : vector<1x32xf32>, vector<32x128xf32>, vector<1x128xf32> -> vector<1x128xf32>
    %294 = arith.addf %292, %293 : vector<1x128xf32>
    %295 = arith.negf %294 : vector<1x128xf32>
    %296 = math.exp %295 : vector<1x128xf32>
    %cst_61 = arith.constant 1.000000e+00 : f32
    %297 = vector.broadcast %cst_61 : f32 to vector<1x128xf32>
    %298 = arith.addf %297, %296 : vector<1x128xf32>
    %299 = arith.divf %297, %298 : vector<1x128xf32>
    %300 = vector.extract_strided_slice %299 {offsets = [0, 0], sizes = [1, 32], strides = [1, 1]} : vector<1x128xf32> to vector<1x32xf32>
    %301 = vector.extract_strided_slice %299 {offsets = [0, 32], sizes = [1, 32], strides = [1, 1]} : vector<1x128xf32> to vector<1x32xf32>
    %302 = vector.extract_strided_slice %299 {offsets = [0, 64], sizes = [1, 32], strides = [1, 1]} : vector<1x128xf32> to vector<1x32xf32>
    %cst_62 = arith.constant 2.000000e+00 : f32
    %303 = vector.broadcast %cst_62 : f32 to vector<1x32xf32>
    %304 = arith.mulf %303, %302 : vector<1x32xf32>
    %cst_63 = arith.constant 1.000000e+00 : f32
    %305 = vector.broadcast %cst_63 : f32 to vector<1x32xf32>
    %306 = arith.subf %304, %305 : vector<1x32xf32>
    %307 = vector.extract_strided_slice %299 {offsets = [0, 96], sizes = [1, 32], strides = [1, 1]} : vector<1x128xf32> to vector<1x32xf32>
    %308 = arith.mulf %301, %282 : vector<1x32xf32>
    %309 = arith.mulf %300, %306 : vector<1x32xf32>
    %310 = arith.addf %308, %309 : vector<1x32xf32>
    %311 = math.tanh %310 : vector<1x32xf32>
    %312 = arith.mulf %307, %311 : vector<1x32xf32>
    %c1_i32_64 = arith.constant 1 : i32
    %313 = vector.broadcast %c1_i32_64 : i32 to vector<8x1xi32>
    %314 = arith.cmpi eq, %7, %313 : vector<8x1xi32>
    %315 = vector.shape_cast %314 : vector<8x1xi1> to vector<8x1xi1>
    %316 = vector.broadcast %315 : vector<8x1xi1> to vector<8x32xi1>
    %317 = vector.shape_cast %312 : vector<1x32xf32> to vector<1x32xf32>
    %318 = vector.broadcast %317 : vector<1x32xf32> to vector<8x32xf32>
    %319 = arith.select %316, %318, %291 : vector<8x32xi1>, vector<8x32xf32>
    %320 = vector.extract_strided_slice %260 {offsets = [2, 0], sizes = [1, 128], strides = [1, 1]} : vector<8x128xf32> to vector<1x128xf32>
    %cst_65 = arith.constant dense<0.000000e+00> : vector<1x128xf32>
    %321 = tpu.matmul %312, %253, %cst_65 {dimension_numbers = #tpu.dot_dimension_numbers<[1], [0], [0], [1], [0, 0, 1, 1], [], []>} : vector<1x32xf32>, vector<32x128xf32>, vector<1x128xf32> -> vector<1x128xf32>
    %322 = arith.addf %320, %321 : vector<1x128xf32>
    %323 = arith.negf %322 : vector<1x128xf32>
    %324 = math.exp %323 : vector<1x128xf32>
    %cst_66 = arith.constant 1.000000e+00 : f32
    %325 = vector.broadcast %cst_66 : f32 to vector<1x128xf32>
    %326 = arith.addf %325, %324 : vector<1x128xf32>
    %327 = arith.divf %325, %326 : vector<1x128xf32>
    %328 = vector.extract_strided_slice %327 {offsets = [0, 0], sizes = [1, 32], strides = [1, 1]} : vector<1x128xf32> to vector<1x32xf32>
    %329 = vector.extract_strided_slice %327 {offsets = [0, 32], sizes = [1, 32], strides = [1, 1]} : vector<1x128xf32> to vector<1x32xf32>
    %330 = vector.extract_strided_slice %327 {offsets = [0, 64], sizes = [1, 32], strides = [1, 1]} : vector<1x128xf32> to vector<1x32xf32>
    %cst_67 = arith.constant 2.000000e+00 : f32
    %331 = vector.broadcast %cst_67 : f32 to vector<1x32xf32>
    %332 = arith.mulf %331, %330 : vector<1x32xf32>
    %cst_68 = arith.constant 1.000000e+00 : f32
    %333 = vector.broadcast %cst_68 : f32 to vector<1x32xf32>
    %334 = arith.subf %332, %333 : vector<1x32xf32>
    %335 = vector.extract_strided_slice %327 {offsets = [0, 96], sizes = [1, 32], strides = [1, 1]} : vector<1x128xf32> to vector<1x32xf32>
    %336 = arith.mulf %329, %310 : vector<1x32xf32>
    %337 = arith.mulf %328, %334 : vector<1x32xf32>
    %338 = arith.addf %336, %337 : vector<1x32xf32>
    %339 = math.tanh %338 : vector<1x32xf32>
    %340 = arith.mulf %335, %339 : vector<1x32xf32>
    %c2_i32_69 = arith.constant 2 : i32
    %341 = vector.broadcast %c2_i32_69 : i32 to vector<8x1xi32>
    %342 = arith.cmpi eq, %7, %341 : vector<8x1xi32>
    %343 = vector.shape_cast %342 : vector<8x1xi1> to vector<8x1xi1>
    %344 = vector.broadcast %343 : vector<8x1xi1> to vector<8x32xi1>
    %345 = vector.shape_cast %340 : vector<1x32xf32> to vector<1x32xf32>
    %346 = vector.broadcast %345 : vector<1x32xf32> to vector<8x32xf32>
    %347 = arith.select %344, %346, %319 : vector<8x32xi1>, vector<8x32xf32>
    %348 = vector.extract_strided_slice %260 {offsets = [3, 0], sizes = [1, 128], strides = [1, 1]} : vector<8x128xf32> to vector<1x128xf32>
    %cst_70 = arith.constant dense<0.000000e+00> : vector<1x128xf32>
    %349 = tpu.matmul %340, %253, %cst_70 {dimension_numbers = #tpu.dot_dimension_numbers<[1], [0], [0], [1], [0, 0, 1, 1], [], []>} : vector<1x32xf32>, vector<32x128xf32>, vector<1x128xf32> -> vector<1x128xf32>
    %350 = arith.addf %348, %349 : vector<1x128xf32>
    %351 = arith.negf %350 : vector<1x128xf32>
    %352 = math.exp %351 : vector<1x128xf32>
    %cst_71 = arith.constant 1.000000e+00 : f32
    %353 = vector.broadcast %cst_71 : f32 to vector<1x128xf32>
    %354 = arith.addf %353, %352 : vector<1x128xf32>
    %355 = arith.divf %353, %354 : vector<1x128xf32>
    %356 = vector.extract_strided_slice %355 {offsets = [0, 0], sizes = [1, 32], strides = [1, 1]} : vector<1x128xf32> to vector<1x32xf32>
    %357 = vector.extract_strided_slice %355 {offsets = [0, 32], sizes = [1, 32], strides = [1, 1]} : vector<1x128xf32> to vector<1x32xf32>
    %358 = vector.extract_strided_slice %355 {offsets = [0, 64], sizes = [1, 32], strides = [1, 1]} : vector<1x128xf32> to vector<1x32xf32>
    %cst_72 = arith.constant 2.000000e+00 : f32
    %359 = vector.broadcast %cst_72 : f32 to vector<1x32xf32>
    %360 = arith.mulf %359, %358 : vector<1x32xf32>
    %cst_73 = arith.constant 1.000000e+00 : f32
    %361 = vector.broadcast %cst_73 : f32 to vector<1x32xf32>
    %362 = arith.subf %360, %361 : vector<1x32xf32>
    %363 = vector.extract_strided_slice %355 {offsets = [0, 96], sizes = [1, 32], strides = [1, 1]} : vector<1x128xf32> to vector<1x32xf32>
    %364 = arith.mulf %357, %338 : vector<1x32xf32>
    %365 = arith.mulf %356, %362 : vector<1x32xf32>
    %366 = arith.addf %364, %365 : vector<1x32xf32>
    %367 = math.tanh %366 : vector<1x32xf32>
    %368 = arith.mulf %363, %367 : vector<1x32xf32>
    %c3_i32_74 = arith.constant 3 : i32
    %369 = vector.broadcast %c3_i32_74 : i32 to vector<8x1xi32>
    %370 = arith.cmpi eq, %7, %369 : vector<8x1xi32>
    %371 = vector.shape_cast %370 : vector<8x1xi1> to vector<8x1xi1>
    %372 = vector.broadcast %371 : vector<8x1xi1> to vector<8x32xi1>
    %373 = vector.shape_cast %368 : vector<1x32xf32> to vector<1x32xf32>
    %374 = vector.broadcast %373 : vector<1x32xf32> to vector<8x32xf32>
    %375 = arith.select %372, %374, %347 : vector<8x32xi1>, vector<8x32xf32>
    %376 = vector.extract_strided_slice %260 {offsets = [4, 0], sizes = [1, 128], strides = [1, 1]} : vector<8x128xf32> to vector<1x128xf32>
    %cst_75 = arith.constant dense<0.000000e+00> : vector<1x128xf32>
    %377 = tpu.matmul %368, %253, %cst_75 {dimension_numbers = #tpu.dot_dimension_numbers<[1], [0], [0], [1], [0, 0, 1, 1], [], []>} : vector<1x32xf32>, vector<32x128xf32>, vector<1x128xf32> -> vector<1x128xf32>
    %378 = arith.addf %376, %377 : vector<1x128xf32>
    %379 = arith.negf %378 : vector<1x128xf32>
    %380 = math.exp %379 : vector<1x128xf32>
    %cst_76 = arith.constant 1.000000e+00 : f32
    %381 = vector.broadcast %cst_76 : f32 to vector<1x128xf32>
    %382 = arith.addf %381, %380 : vector<1x128xf32>
    %383 = arith.divf %381, %382 : vector<1x128xf32>
    %384 = vector.extract_strided_slice %383 {offsets = [0, 0], sizes = [1, 32], strides = [1, 1]} : vector<1x128xf32> to vector<1x32xf32>
    %385 = vector.extract_strided_slice %383 {offsets = [0, 32], sizes = [1, 32], strides = [1, 1]} : vector<1x128xf32> to vector<1x32xf32>
    %386 = vector.extract_strided_slice %383 {offsets = [0, 64], sizes = [1, 32], strides = [1, 1]} : vector<1x128xf32> to vector<1x32xf32>
    %cst_77 = arith.constant 2.000000e+00 : f32
    %387 = vector.broadcast %cst_77 : f32 to vector<1x32xf32>
    %388 = arith.mulf %387, %386 : vector<1x32xf32>
    %cst_78 = arith.constant 1.000000e+00 : f32
    %389 = vector.broadcast %cst_78 : f32 to vector<1x32xf32>
    %390 = arith.subf %388, %389 : vector<1x32xf32>
    %391 = vector.extract_strided_slice %383 {offsets = [0, 96], sizes = [1, 32], strides = [1, 1]} : vector<1x128xf32> to vector<1x32xf32>
    %392 = arith.mulf %385, %366 : vector<1x32xf32>
    %393 = arith.mulf %384, %390 : vector<1x32xf32>
    %394 = arith.addf %392, %393 : vector<1x32xf32>
    %395 = math.tanh %394 : vector<1x32xf32>
    %396 = arith.mulf %391, %395 : vector<1x32xf32>
    %c4_i32_79 = arith.constant 4 : i32
    %397 = vector.broadcast %c4_i32_79 : i32 to vector<8x1xi32>
    %398 = arith.cmpi eq, %7, %397 : vector<8x1xi32>
    %399 = vector.shape_cast %398 : vector<8x1xi1> to vector<8x1xi1>
    %400 = vector.broadcast %399 : vector<8x1xi1> to vector<8x32xi1>
    %401 = vector.shape_cast %396 : vector<1x32xf32> to vector<1x32xf32>
    %402 = vector.broadcast %401 : vector<1x32xf32> to vector<8x32xf32>
    %403 = arith.select %400, %402, %375 : vector<8x32xi1>, vector<8x32xf32>
    %404 = vector.extract_strided_slice %260 {offsets = [5, 0], sizes = [1, 128], strides = [1, 1]} : vector<8x128xf32> to vector<1x128xf32>
    %cst_80 = arith.constant dense<0.000000e+00> : vector<1x128xf32>
    %405 = tpu.matmul %396, %253, %cst_80 {dimension_numbers = #tpu.dot_dimension_numbers<[1], [0], [0], [1], [0, 0, 1, 1], [], []>} : vector<1x32xf32>, vector<32x128xf32>, vector<1x128xf32> -> vector<1x128xf32>
    %406 = arith.addf %404, %405 : vector<1x128xf32>
    %407 = arith.negf %406 : vector<1x128xf32>
    %408 = math.exp %407 : vector<1x128xf32>
    %cst_81 = arith.constant 1.000000e+00 : f32
    %409 = vector.broadcast %cst_81 : f32 to vector<1x128xf32>
    %410 = arith.addf %409, %408 : vector<1x128xf32>
    %411 = arith.divf %409, %410 : vector<1x128xf32>
    %412 = vector.extract_strided_slice %411 {offsets = [0, 0], sizes = [1, 32], strides = [1, 1]} : vector<1x128xf32> to vector<1x32xf32>
    %413 = vector.extract_strided_slice %411 {offsets = [0, 32], sizes = [1, 32], strides = [1, 1]} : vector<1x128xf32> to vector<1x32xf32>
    %414 = vector.extract_strided_slice %411 {offsets = [0, 64], sizes = [1, 32], strides = [1, 1]} : vector<1x128xf32> to vector<1x32xf32>
    %cst_82 = arith.constant 2.000000e+00 : f32
    %415 = vector.broadcast %cst_82 : f32 to vector<1x32xf32>
    %416 = arith.mulf %415, %414 : vector<1x32xf32>
    %cst_83 = arith.constant 1.000000e+00 : f32
    %417 = vector.broadcast %cst_83 : f32 to vector<1x32xf32>
    %418 = arith.subf %416, %417 : vector<1x32xf32>
    %419 = vector.extract_strided_slice %411 {offsets = [0, 96], sizes = [1, 32], strides = [1, 1]} : vector<1x128xf32> to vector<1x32xf32>
    %420 = arith.mulf %413, %394 : vector<1x32xf32>
    %421 = arith.mulf %412, %418 : vector<1x32xf32>
    %422 = arith.addf %420, %421 : vector<1x32xf32>
    %423 = math.tanh %422 : vector<1x32xf32>
    %424 = arith.mulf %419, %423 : vector<1x32xf32>
    %c5_i32_84 = arith.constant 5 : i32
    %425 = vector.broadcast %c5_i32_84 : i32 to vector<8x1xi32>
    %426 = arith.cmpi eq, %7, %425 : vector<8x1xi32>
    %427 = vector.shape_cast %426 : vector<8x1xi1> to vector<8x1xi1>
    %428 = vector.broadcast %427 : vector<8x1xi1> to vector<8x32xi1>
    %429 = vector.shape_cast %424 : vector<1x32xf32> to vector<1x32xf32>
    %430 = vector.broadcast %429 : vector<1x32xf32> to vector<8x32xf32>
    %431 = arith.select %428, %430, %403 : vector<8x32xi1>, vector<8x32xf32>
    %432 = vector.extract_strided_slice %260 {offsets = [6, 0], sizes = [1, 128], strides = [1, 1]} : vector<8x128xf32> to vector<1x128xf32>
    %cst_85 = arith.constant dense<0.000000e+00> : vector<1x128xf32>
    %433 = tpu.matmul %424, %253, %cst_85 {dimension_numbers = #tpu.dot_dimension_numbers<[1], [0], [0], [1], [0, 0, 1, 1], [], []>} : vector<1x32xf32>, vector<32x128xf32>, vector<1x128xf32> -> vector<1x128xf32>
    %434 = arith.addf %432, %433 : vector<1x128xf32>
    %435 = arith.negf %434 : vector<1x128xf32>
    %436 = math.exp %435 : vector<1x128xf32>
    %cst_86 = arith.constant 1.000000e+00 : f32
    %437 = vector.broadcast %cst_86 : f32 to vector<1x128xf32>
    %438 = arith.addf %437, %436 : vector<1x128xf32>
    %439 = arith.divf %437, %438 : vector<1x128xf32>
    %440 = vector.extract_strided_slice %439 {offsets = [0, 0], sizes = [1, 32], strides = [1, 1]} : vector<1x128xf32> to vector<1x32xf32>
    %441 = vector.extract_strided_slice %439 {offsets = [0, 32], sizes = [1, 32], strides = [1, 1]} : vector<1x128xf32> to vector<1x32xf32>
    %442 = vector.extract_strided_slice %439 {offsets = [0, 64], sizes = [1, 32], strides = [1, 1]} : vector<1x128xf32> to vector<1x32xf32>
    %cst_87 = arith.constant 2.000000e+00 : f32
    %443 = vector.broadcast %cst_87 : f32 to vector<1x32xf32>
    %444 = arith.mulf %443, %442 : vector<1x32xf32>
    %cst_88 = arith.constant 1.000000e+00 : f32
    %445 = vector.broadcast %cst_88 : f32 to vector<1x32xf32>
    %446 = arith.subf %444, %445 : vector<1x32xf32>
    %447 = vector.extract_strided_slice %439 {offsets = [0, 96], sizes = [1, 32], strides = [1, 1]} : vector<1x128xf32> to vector<1x32xf32>
    %448 = arith.mulf %441, %422 : vector<1x32xf32>
    %449 = arith.mulf %440, %446 : vector<1x32xf32>
    %450 = arith.addf %448, %449 : vector<1x32xf32>
    %451 = math.tanh %450 : vector<1x32xf32>
    %452 = arith.mulf %447, %451 : vector<1x32xf32>
    %c6_i32_89 = arith.constant 6 : i32
    %453 = vector.broadcast %c6_i32_89 : i32 to vector<8x1xi32>
    %454 = arith.cmpi eq, %7, %453 : vector<8x1xi32>
    %455 = vector.shape_cast %454 : vector<8x1xi1> to vector<8x1xi1>
    %456 = vector.broadcast %455 : vector<8x1xi1> to vector<8x32xi1>
    %457 = vector.shape_cast %452 : vector<1x32xf32> to vector<1x32xf32>
    %458 = vector.broadcast %457 : vector<1x32xf32> to vector<8x32xf32>
    %459 = arith.select %456, %458, %431 : vector<8x32xi1>, vector<8x32xf32>
    %460 = vector.extract_strided_slice %260 {offsets = [7, 0], sizes = [1, 128], strides = [1, 1]} : vector<8x128xf32> to vector<1x128xf32>
    %cst_90 = arith.constant dense<0.000000e+00> : vector<1x128xf32>
    %461 = tpu.matmul %452, %253, %cst_90 {dimension_numbers = #tpu.dot_dimension_numbers<[1], [0], [0], [1], [0, 0, 1, 1], [], []>} : vector<1x32xf32>, vector<32x128xf32>, vector<1x128xf32> -> vector<1x128xf32>
    %462 = arith.addf %460, %461 : vector<1x128xf32>
    %463 = arith.negf %462 : vector<1x128xf32>
    %464 = math.exp %463 : vector<1x128xf32>
    %cst_91 = arith.constant 1.000000e+00 : f32
    %465 = vector.broadcast %cst_91 : f32 to vector<1x128xf32>
    %466 = arith.addf %465, %464 : vector<1x128xf32>
    %467 = arith.divf %465, %466 : vector<1x128xf32>
    %468 = vector.extract_strided_slice %467 {offsets = [0, 0], sizes = [1, 32], strides = [1, 1]} : vector<1x128xf32> to vector<1x32xf32>
    %469 = vector.extract_strided_slice %467 {offsets = [0, 32], sizes = [1, 32], strides = [1, 1]} : vector<1x128xf32> to vector<1x32xf32>
    %470 = vector.extract_strided_slice %467 {offsets = [0, 64], sizes = [1, 32], strides = [1, 1]} : vector<1x128xf32> to vector<1x32xf32>
    %cst_92 = arith.constant 2.000000e+00 : f32
    %471 = vector.broadcast %cst_92 : f32 to vector<1x32xf32>
    %472 = arith.mulf %471, %470 : vector<1x32xf32>
    %cst_93 = arith.constant 1.000000e+00 : f32
    %473 = vector.broadcast %cst_93 : f32 to vector<1x32xf32>
    %474 = arith.subf %472, %473 : vector<1x32xf32>
    %475 = vector.extract_strided_slice %467 {offsets = [0, 96], sizes = [1, 32], strides = [1, 1]} : vector<1x128xf32> to vector<1x32xf32>
    %476 = arith.mulf %469, %450 : vector<1x32xf32>
    %477 = arith.mulf %468, %474 : vector<1x32xf32>
    %478 = arith.addf %476, %477 : vector<1x32xf32>
    %479 = math.tanh %478 : vector<1x32xf32>
    %480 = arith.mulf %475, %479 : vector<1x32xf32>
    %c7_i32_94 = arith.constant 7 : i32
    %481 = vector.broadcast %c7_i32_94 : i32 to vector<8x1xi32>
    %482 = arith.cmpi eq, %7, %481 : vector<8x1xi32>
    %483 = vector.shape_cast %482 : vector<8x1xi1> to vector<8x1xi1>
    %484 = vector.broadcast %483 : vector<8x1xi1> to vector<8x32xi1>
    %485 = vector.shape_cast %480 : vector<1x32xf32> to vector<1x32xf32>
    %486 = vector.broadcast %485 : vector<1x32xf32> to vector<8x32xf32>
    %487 = arith.select %484, %486, %459 : vector<8x32xi1>, vector<8x32xf32>
    %cst_95 = arith.constant dense<0.000000e+00> : vector<8x32xf32>
    %488 = tpu.matmul %6, %487, %cst_95 {dimension_numbers = #tpu.dot_dimension_numbers<[1], [0], [0], [1], [0, 0, 1, 1], [], []>} : vector<8x8xf32>, vector<8x32xf32>, vector<8x32xf32> -> vector<8x32xf32>
    %489 = arith.select %10, %487, %488 : vector<8x32xi1>, vector<8x32xf32>
    %c8 = arith.constant 8 : index
    %c0_96 = arith.constant 0 : index
    %490 = vector.load %arg1[%c8, %c0_96] : memref<88x32xf32, #tpu.memory_space<vmem>>, vector<32x32xf32>
    %c40 = arith.constant 40 : index
    %c0_97 = arith.constant 0 : index
    %491 = vector.load %arg1[%c40, %c0_97] : memref<88x32xf32, #tpu.memory_space<vmem>>, vector<1x32xf32>
    %c48 = arith.constant 48 : index
    %c0_98 = arith.constant 0 : index
    %492 = vector.load %arg1[%c48, %c0_98] : memref<88x32xf32, #tpu.memory_space<vmem>>, vector<32x32xf32>
    %c80 = arith.constant 80 : index
    %c0_99 = arith.constant 0 : index
    %493 = vector.load %arg1[%c80, %c0_99] : memref<88x32xf32, #tpu.memory_space<vmem>>, vector<1x32xf32>
    %cst_100 = arith.constant dense<0.000000e+00> : vector<8x32xf32>
    %494 = tpu.matmul %489, %490, %cst_100 {dimension_numbers = #tpu.dot_dimension_numbers<[1], [0], [0], [1], [0, 0, 1, 1], [], []>} : vector<8x32xf32>, vector<32x32xf32>, vector<8x32xf32> -> vector<8x32xf32>
    %495 = vector.broadcast %491 : vector<1x32xf32> to vector<8x32xf32>
    %496 = arith.addf %494, %495 : vector<8x32xf32>
    %cst_101 = arith.constant 0.000000e+00 : f32
    %497 = vector.broadcast %cst_101 : f32 to vector<8x32xf32>
    %498 = arith.maximumf %496, %497 : vector<8x32xf32>
    %cst_102 = arith.constant dense<0.000000e+00> : vector<8x32xf32>
    %499 = tpu.matmul %498, %492, %cst_102 {dimension_numbers = #tpu.dot_dimension_numbers<[1], [0], [0], [1], [0, 0, 1, 1], [], []>} : vector<8x32xf32>, vector<32x32xf32>, vector<8x32xf32> -> vector<8x32xf32>
    %500 = vector.broadcast %493 : vector<1x32xf32> to vector<8x32xf32>
    %501 = arith.addf %499, %500 : vector<8x32xf32>
    %c0_103 = arith.constant 0 : index
    %c0_104 = arith.constant 0 : index
    %502 = vector.load %arg2[%c0_103, %c0_104] : memref<8x32xf32, #tpu.memory_space<vmem>>, vector<8x32xf32>
    tpu.vector_store %arg2[%c0_103, %c0_104], %501 {strides = array<i32>} : memref<8x32xf32, #tpu.memory_space<vmem>>, vector<8x32xf32>,
    return
  }
}

</mosaic_0001>

<llo_original>
// kernel: tpu_custom_call.1
$region0: #{tpu_custom_call.1}
  #allocation0 [shape = 'u32[]', space=smem, size = 0x4, offset = 0x4, fixed_abs, tag = 'smem constant byte address 0x4 - core index']
  #allocation1 [shape = 'u32[144,128]{1,0:T(1,128)}', space=vmem, size = 0x12000, scoped, tag = 'internal scratch']
  %s0 = inlined_call_operand.hbm [shape: f32[208,128], index: 0, kind: input, shape index: {}]
  %s1 = inlined_call_operand.vmem [shape: f32[88,32], index: 1, kind: input, shape index: {}]
  %s2 = inlined_call_operand.hbm [shape: f32[8,32], index: 2, kind: output, shape index: {}]
  %s3 = sld [smem:[#allocation0]]
  $region22: #{tpu_custom_call.1} parent=0
    _
  %s5 = ssub.s32 1, %s3
  %s6 = scalar_select 0, %s5, %s3
  $region1: #{tpu_custom_call.1} parent=0
    #allocation2 [shape = 'u8[106496]{0}', space=vmem, size = 0x1a000, scoped, tag = 'input window, operand 0, single buffered']
    #allocation3 [shape = 's32[1]{0}', space=sflag, size = 0x4, scoped, tag = 'scoped memory for tpu_custom_call.1']
    #allocation4 [shape = 's32[1]{0}', space=sflag, size = 0x4, scoped, tag = 'scoped memory for tpu_custom_call.1']
    #allocation5 [shape = 'u8[4096]{0}', space=vmem, size = 0x1000, scoped, tag = 'output window, operand 0, single buffered']
    %7 = vsyncpa [#allocation3], 0
    %8 = vsyncpa [#allocation4], 0
    // Predicated region
    $region2: #{tpu_custom_call.1} parent=1 // pred_check
      _
    $region3: #{tpu_custom_call.1} parent=1 // pred_check_branch
      %10 = sbr.rel (0) target = $region5
    $region4: #{tpu_custom_call.1} parent=1 // pred_region
      %s12 = ssub.s32 3328, 3328
      %13 = vsyncadd [#allocation3], %s12
      %s14 = sshll.u32 [#allocation2], 4
      %s15 = int_to_ptr.vmem [resolvable:$true] %s14
      %20 = dma.hbm_to_vmem [thread:$0]  %s0, 3328, %s15, [#allocation3], 128, 128, 8
    $region5: #{tpu_custom_call.1} parent=1 // pred_fallthru
      _
    // Predicated region
    $region6: #{tpu_custom_call.1} parent=1 // pred_check
      _
    $region7: #{tpu_custom_call.1} parent=1 // pred_check_branch
      %22 = sbr.rel (0) target = $region9
    $region8: #{tpu_custom_call.1} parent=1 // pred_region
      _
    $region9: #{tpu_custom_call.1} parent=1 // pred_fallthru
      _
    // Predicated region
    $region10: #{tpu_custom_call.1} parent=1 // pred_check
      _
    $region11: #{tpu_custom_call.1} parent=1 // pred_check_branch
      %24 = sbr.rel (0) target = $region13
    $region12: #{tpu_custom_call.1} parent=1 // pred_region
      %25 = dma.done [#allocation3], 3328
    $region13: #{tpu_custom_call.1} parent=1 // pred_fallthru
      _
    %v26 = vlaneseq
    %v27 = vshrl.u32 %v26, 7
    %v28 = vlaneseq
    %v29 = vand.u32 %v28, 127
    %v30 = vadd.s32 %v27, %v29
    %vm31 = vcmp.eq.s32.totalorder %v30, 7
    %v32 = vsel %vm31, 1, 0
    %v33 = vcvt.s32.f32 %v32
    %vm34 = vcmp.lt.s32.totalorder %v29, 16
    %v35 = vld [vmem:[%s1] sm:$0xff]
    %v36 = vld [vmem:[#allocation2] sm:$0xff]
    %v37 = vld [vmem:[#allocation2 + $0x8] sm:$0xff]
    %v38 = vld [vmem:[#allocation2 + $0x10] sm:$0xff]
    %v39 = vld [vmem:[#allocation2 + $0x18] sm:$0xff]
    %v40 = vld [vmem:[#allocation2 + $0x20] sm:$0xff]
    %v41 = vld [vmem:[#allocation2 + $0x28] sm:$0xff]
    %v42 = vld [vmem:[#allocation2 + $0x30] sm:$0xff]
    %v43 = vld [vmem:[#allocation2 + $0x38] sm:$0xff]
    %v44 = vld [vmem:[#allocation2 + $0x40] sm:$0xff]
    %v45 = vld [vmem:[#allocation2 + $0x48] sm:$0xff]
    %v46 = vld [vmem:[#allocation2 + $0x50] sm:$0xff]
    %v47 = vld [vmem:[#allocation2 + $0x58] sm:$0xff]
    %v48 = vld [vmem:[#allocation2 + $0x60] sm:$0x1]
    %vm49 = vcmask 64512
    %v51 = vsel %vm49, %v33, 0
    %53 = vmatprep.subr.mxu0 0.0
    %54 = vmatpush1.msra.mxu0 %v35
    %55 = vmatprep.subr.mxu0 0.0
    %56 = vmatpush1.msra.mxu0 0.0
    %57 = vmatprep.subr.mxu0 0.0
    %58 = vmatpush1.msra.mxu0 0.0
    %59 = vmatprep.subr.mxu0 0.0
    %60 = vmatpush1.msra.mxu0 0.0
    %61 = vmatprep.subr.mxu0 0.0
    %62 = vmatpush1.msra.mxu0 0.0
    %63 = vmatprep.subr.mxu0 0.0
    %64 = vmatpush1.msra.mxu0 0.0
    %65 = vmatprep.subr.mxu0 0.0
    %66 = vmatpush1.msra.mxu0 0.0
    %67 = vmatprep.subr.mxu0 0.0
    %68 = vmatpush1.msra.mxu0 0.0
    %69 = vmatprep.subr.mxu0 0.0
    %70 = vmatpush1.msra.mxu0 0.0
    %71 = vmatprep.subr.mxu0 0.0
    %72 = vmatpush1.msra.mxu0 0.0
    %73 = vmatprep.subr.mxu0 0.0
    %74 = vmatpush1.msra.mxu0 0.0
    %75 = vmatprep.subr.mxu0 0.0
    %76 = vmatpush1.msra.mxu0 0.0
    %77 = vmatprep.subr.mxu0 0.0
    %78 = vmatpush1.msra.mxu0 0.0
    %79 = vmatprep.subr.mxu0 0.0
    %80 = vmatpush1.msra.mxu0 0.0
    %81 = vmatprep.subr.mxu0 0.0
    %82 = vmatpush1.msra.mxu0 0.0
    %83 = vmatprep.subr.mxu0 0.0
    %84 = vmatpush1.msra.mxu0 0.0
    %85 = vmatprep.subr.mxu0 0.0
    %86 = vmatpush1.msra.mxu0 0.0
    %87 = vmatprep.subr.mxu0 0.0
    %88 = vmatpush1.msra.mxu0 0.0
    %89 = vmatprep.subr.mxu0 0.0
    %90 = vmatpush1.msra.mxu0 0.0
    %91 = vmatprep.subr.mxu0 0.0
    %92 = vmatpush1.msra.mxu0 0.0
    %93 = vmatprep.subr.mxu0 0.0
    %94 = vmatpush1.msra.mxu0 0.0
    %95 = vmatprep.subr.mxu0 0.0
    %96 = vmatpush1.msra.mxu0 0.0
    %97 = vmatprep.subr.mxu0 0.0
    %98 = vmatpush1.msra.mxu0 0.0
    %99 = vmatprep.subr.mxu0 0.0
    %100 = vmatpush1.msra.mxu0 0.0
    %101 = vmatprep.subr.mxu0 0.0
    %102 = vmatpush1.msra.mxu0 0.0
    %103 = vmatprep.subr.mxu0 0.0
    %104 = vmatpush1.msra.mxu0 0.0
    %105 = vmatprep.subr.mxu0 0.0
    %106 = vmatpush1.msra.mxu0 0.0
    %107 = vmatprep.subr.mxu0 0.0
    %108 = vmatpush1.msra.mxu0 0.0
    %109 = vmatprep.subr.mxu0 0.0
    %110 = vmatpush1.msra.mxu0 0.0
    %111 = vmatprep.subr.mxu0 0.0
    %112 = vmatpush1.msra.mxu0 0.0
    %113 = vmatprep.subr.mxu0 0.0
    %114 = vmatpush1.msra.mxu0 0.0
    %115 = vmatprep.subr.mxu0 0.0
    %116 = vmatpush1.msra.mxu0 0.0
    %117 = vmatprep.mubr.f32.mxu0 0.0
    %118 = vmatmul.mubr.f32.gmra.mrb[0].mxu0 %v51
    %v119 = vpop.f32.mrb[0].mxu0
    %v120 = vadd.f32 0.0, %v119
    %v121 = vpop.f32.mrb[0].mxu0
    %122 = vdwg.mxu0
    %vm123 = vcmask 261120
    %v125 = vsel %vm123, %v120, 0
    %127 = vmatprep.subr.mxu0 0.0
    %128 = vmatpush1.msra.mxu0 %v40
    %129 = vmatprep.subr.mxu0 0.0
    %130 = vmatpush1.msra.mxu0 %v41
    %131 = vmatprep.subr.mxu0 0.0
    %132 = vmatpush1.msra.mxu0 %v42
    %133 = vmatprep.subr.mxu0 0.0
    %134 = vmatpush1.msra.mxu0 %v43
    %135 = vmatprep.subr.mxu0 0.0
    %136 = vmatpush1.msra.mxu0 0.0
    %137 = vmatprep.subr.mxu0 0.0
    %138 = vmatpush1.msra.mxu0 0.0
    %139 = vmatprep.subr.mxu0 0.0
    %140 = vmatpush1.msra.mxu0 0.0
    %141 = vmatprep.subr.mxu0 0.0
    %142 = vmatpush1.msra.mxu0 0.0
    %143 = vmatprep.subr.mxu0 0.0
    %144 = vmatpush1.msra.mxu0 0.0
    %145 = vmatprep.subr.mxu0 0.0
    %146 = vmatpush1.msra.mxu0 0.0
    %147 = vmatprep.subr.mxu0 0.0
    %148 = vmatpush1.msra.mxu0 0.0
    %149 = vmatprep.subr.mxu0 0.0
    %150 = vmatpush1.msra.mxu0 0.0
    %151 = vmatprep.subr.mxu0 0.0
    %152 = vmatpush1.msra.mxu0 0.0
    %153 = vmatprep.subr.mxu0 0.0
    %154 = vmatpush1.msra.mxu0 0.0
    %155 = vmatprep.subr.mxu0 0.0
    %156 = vmatpush1.msra.mxu0 0.0
    %157 = vmatprep.subr.mxu0 0.0
    %158 = vmatpush1.msra.mxu0 0.0
    %159 = vmatprep.subr.mxu0 0.0
    %160 = vmatpush1.msra.mxu0 0.0
    %161 = vmatprep.subr.mxu0 0.0
    %162 = vmatpush1.msra.mxu0 0.0
    %163 = vmatprep.subr.mxu0 0.0
    %164 = vmatpush1.msra.mxu0 0.0
    %165 = vmatprep.subr.mxu0 0.0
    %166 = vmatpush1.msra.mxu0 0.0
    %167 = vmatprep.subr.mxu0 0.0
    %168 = vmatpush1.msra.mxu0 0.0
    %169 = vmatprep.subr.mxu0 0.0
    %170 = vmatpush1.msra.mxu0 0.0
    %171 = vmatprep.subr.mxu0 0.0
    %172 = vmatpush1.msra.mxu0 0.0
    %173 = vmatprep.subr.mxu0 0.0
    %174 = vmatpush1.msra.mxu0 0.0
    %175 = vmatprep.subr.mxu0 0.0
    %176 = vmatpush1.msra.mxu0 0.0
    %177 = vmatprep.subr.mxu0 0.0
    %178 = vmatpush1.msra.mxu0 0.0
    %179 = vmatprep.subr.mxu0 0.0
    %180 = vmatpush1.msra.mxu0 0.0
    %181 = vmatprep.subr.mxu0 0.0
    %182 = vmatpush1.msra.mxu0 0.0
    %183 = vmatprep.subr.mxu0 0.0
    %184 = vmatpush1.msra.mxu0 0.0
    %185 = vmatprep.subr.mxu0 0.0
    %186 = vmatpush1.msra.mxu0 0.0
    %187 = vmatprep.subr.mxu0 0.0
    %188 = vmatpush1.msra.mxu0 0.0
    %189 = vmatprep.subr.mxu0 0.0
    %190 = vmatpush1.msra.mxu0 0.0
    %191 = vmatprep.mubr.f32.mxu0 0.0
    %192 = vmatmul.mubr.f32.gmra.mrb[0].mxu0 %v125
    %v193 = vpop.f32.mrb[0].mxu0
    %v194 = vadd.f32 0.0, %v193
    %v195 = vpop.f32.mrb[0].mxu0
    %196 = vdwg.mxu0
    %v198 = vsel %vm123, %v35, 0
    %200 = vmatprep.subr.mxu0 0.0
    %201 = vmatpush1.msra.mxu0 %v36
    %202 = vmatprep.subr.mxu0 0.0
    %203 = vmatpush1.msra.mxu0 %v37
    %204 = vmatprep.subr.mxu0 0.0
    %205 = vmatpush1.msra.mxu0 %v38
    %206 = vmatprep.subr.mxu0 0.0
    %207 = vmatpush1.msra.mxu0 %v39
    %208 = vmatprep.subr.mxu0 0.0
    %209 = vmatpush1.msra.mxu0 0.0
    %210 = vmatprep.subr.mxu0 0.0
    %211 = vmatpush1.msra.mxu0 0.0
    %212 = vmatprep.subr.mxu0 0.0
    %213 = vmatpush1.msra.mxu0 0.0
    %214 = vmatprep.subr.mxu0 0.0
    %215 = vmatpush1.msra.mxu0 0.0
    %216 = vmatprep.subr.mxu0 0.0
    %217 = vmatpush1.msra.mxu0 0.0
    %218 = vmatprep.subr.mxu0 0.0
    %219 = vmatpush1.msra.mxu0 0.0
    %220 = vmatprep.subr.mxu0 0.0
    %221 = vmatpush1.msra.mxu0 0.0
    %222 = vmatprep.subr.mxu0 0.0
    %223 = vmatpush1.msra.mxu0 0.0
    %224 = vmatprep.subr.mxu0 0.0
    %225 = vmatpush1.msra.mxu0 0.0
    %226 = vmatprep.subr.mxu0 0.0
    %227 = vmatpush1.msra.mxu0 0.0
    %228 = vmatprep.subr.mxu0 0.0
    %229 = vmatpush1.msra.mxu0 0.0
    %230 = vmatprep.subr.mxu0 0.0
    %231 = vmatpush1.msra.mxu0 0.0
    %232 = vmatprep.subr.mxu0 0.0
    %233 = vmatpush1.msra.mxu0 0.0
    %234 = vmatprep.subr.mxu0 0.0
    %235 = vmatpush1.msra.mxu0 0.0
    %236 = vmatprep.subr.mxu0 0.0
    %237 = vmatpush1.msra.mxu0 0.0
    %238 = vmatprep.subr.mxu0 0.0
    %239 = vmatpush1.msra.mxu0 0.0
    %240 = vmatprep.subr.mxu0 0.0
    %241 = vmatpush1.msra.mxu0 0.0
    %242 = vmatprep.subr.mxu0 0.0
    %243 = vmatpush1.msra.mxu0 0.0
    %244 = vmatprep.subr.mxu0 0.0
    %245 = vmatpush1.msra.mxu0 0.0
    %246 = vmatprep.subr.mxu0 0.0
    %247 = vmatpush1.msra.mxu0 0.0
    %248 = vmatprep.subr.mxu0 0.0
    %249 = vmatpush1.msra.mxu0 0.0
    %250 = vmatprep.subr.mxu0 0.0
    %251 = vmatpush1.msra.mxu0 0.0
    %252 = vmatprep.subr.mxu0 0.0
    %253 = vmatpush1.msra.mxu0 0.0
    %254 = vmatprep.subr.mxu0 0.0
    %255 = vmatpush1.msra.mxu0 0.0
    %256 = vmatprep.subr.mxu0 0.0
    %257 = vmatpush1.msra.mxu0 0.0
    %258 = vmatprep.subr.mxu0 0.0
    %259 = vmatpush1.msra.mxu0 0.0
    %260 = vmatprep.subr.mxu0 0.0
    %261 = vmatpush1.msra.mxu0 0.0
    %262 = vmatprep.subr.mxu0 0.0
    %263 = vmatpush1.msra.mxu0 0.0
    %264 = vmatprep.mubr.f32.mxu0 0.0
    %265 = vmatmul.mubr.f32.gmra.mrb[0].mxu0 %v198
    %v266 = vpop.f32.mrb[0].mxu0
    %v267 = vadd.f32 %v194, %v266
    %v268 = vpop.f32.mrb[0].mxu0
    %269 = vdwg.mxu0
    %v270 = vlaneseq
    %v271 = vshrl.u32 %v270, 7
    %v272 = vsub.s32 0, %v271
    %v273 = vrot.slane %v48, %v272
    %v274 = vadd.f32 %v267, %v273
    %v276 = vsel %vm123, 0.0, 0
    %278 = vmatprep.subr.mxu0 0.0
    %279 = vmatpush1.msra.mxu0 %v44
    %280 = vmatprep.subr.mxu0 0.0
    %281 = vmatpush1.msra.mxu0 %v45
    %282 = vmatprep.subr.mxu0 0.0
    %283 = vmatpush1.msra.mxu0 %v46
    %284 = vmatprep.subr.mxu0 0.0
    %285 = vmatpush1.msra.mxu0 %v47
    %286 = vmatprep.subr.mxu0 0.0
    %287 = vmatpush1.msra.mxu0 0.0
    %288 = vmatprep.subr.mxu0 0.0
    %289 = vmatpush1.msra.mxu0 0.0
    %290 = vmatprep.subr.mxu0 0.0
    %291 = vmatpush1.msra.mxu0 0.0
    %292 = vmatprep.subr.mxu0 0.0
    %293 = vmatpush1.msra.mxu0 0.0
    %294 = vmatprep.subr.mxu0 0.0
    %295 = vmatpush1.msra.mxu0 0.0
    %296 = vmatprep.subr.mxu0 0.0
    %297 = vmatpush1.msra.mxu0 0.0
    %298 = vmatprep.subr.mxu0 0.0
    %299 = vmatpush1.msra.mxu0 0.0
    %300 = vmatprep.subr.mxu0 0.0
    %301 = vmatpush1.msra.mxu0 0.0
    %302 = vmatprep.subr.mxu0 0.0
    %303 = vmatpush1.msra.mxu0 0.0
    %304 = vmatprep.subr.mxu0 0.0
    %305 = vmatpush1.msra.mxu0 0.0
    %306 = vmatprep.subr.mxu0 0.0
    %307 = vmatpush1.msra.mxu0 0.0
    %308 = vmatprep.subr.mxu0 0.0
    %309 = vmatpush1.msra.mxu0 0.0
    %310 = vmatprep.subr.mxu0 0.0
    %311 = vmatpush1.msra.mxu0 0.0
    %312 = vmatprep.subr.mxu0 0.0
    %313 = vmatpush1.msra.mxu0 0.0
    %314 = vmatprep.subr.mxu0 0.0
    %315 = vmatpush1.msra.mxu0 0.0
    %316 = vmatprep.subr.mxu0 0.0
    %317 = vmatpush1.msra.mxu0 0.0
    %318 = vmatprep.subr.mxu0 0.0
    %319 = vmatpush1.msra.mxu0 0.0
    %320 = vmatprep.subr.mxu0 0.0
    %321 = vmatpush1.msra.mxu0 0.0
    %322 = vmatprep.subr.mxu0 0.0
    %323 = vmatpush1.msra.mxu0 0.0
    %324 = vmatprep.subr.mxu0 0.0
    %325 = vmatpush1.msra.mxu0 0.0
    %326 = vmatprep.subr.mxu0 0.0
    %327 = vmatpush1.msra.mxu0 0.0
    %328 = vmatprep.subr.mxu0 0.0
    %329 = vmatpush1.msra.mxu0 0.0
    %330 = vmatprep.subr.mxu0 0.0
    %331 = vmatpush1.msra.mxu0 0.0
    %332 = vmatprep.subr.mxu0 0.0
    %333 = vmatpush1.msra.mxu0 0.0
    %334 = vmatprep.subr.mxu0 0.0
    %335 = vmatpush1.msra.mxu0 0.0
    %336 = vmatprep.subr.mxu0 0.0
    %337 = vmatpush1.msra.mxu0 0.0
    %338 = vmatprep.subr.mxu0 0.0
    %339 = vmatpush1.msra.mxu0 0.0
    %340 = vmatprep.subr.mxu0 0.0
    %341 = vmatpush1.msra.mxu0 0.0
    %342 = vmatprep.mubr.f32.mxu0 0.0
    %343 = vmatmul.mubr.f32.gmra.mrb[0].mxu0 %v276
    %v344 = vpop.f32.mrb[0].mxu0
    %v345 = vadd.f32 0.0, %v344
    %v346 = vpop.f32.mrb[0].mxu0
    %347 = vdwg.mxu0
    %v348 = vadd.f32 %v274, %v345
    %v349 = vxor.u32 %v348, 2147483648
    %v350 = vmul.f32 %v349, 1.442695
    %v351 = vpow.pop %v350
    %v352 = vadd.f32 %v351, 1.0
    %v353 = vrcp.pop %v352
    %v354 = vmul.f32 1.0, %v353
    %v355 = vmul.f32 %v354, 2.0
    %v356 = vsub.f32 %v355, 1.0
    %v357 = vmul.f32 %v354, 0.0
    %359 = vrot.lane.b32.xlu0 %v356, 64
    %v360 = vpop.permute.xlu0 %359
    %v362 = vmul.f32 %v354, %v360
    %364 = vrot.lane.b32.xlu0 %v362, 32
    %v365 = vpop.permute.xlu0 %364
    %v367 = vadd.f32 %v357, %v365
    %v368 = vtanh.pop %v367
    %370 = vrot.lane.b32.xlu0 %v368, 64
    %v371 = vpop.permute.xlu0 %370
    %v373 = vmul.f32 %v354, %v371
    %vm374 = vcmp.eq.s32.totalorder %v27, 0
    %v375 = vsel %vm374, 1, 0
    %vm376 = vcmp.eq.s32.totalorder %v375, 1
    %v377 = vlaneseq
    %v378 = vshrl.u32 %v377, 7
    %v379 = vsub.s32 0, %v378
    %v380 = vrot.slane %v373, %v379
    %v381 = vsel %vm376, %v380, 0.0
    %383 = vrot.lane.b32.xlu0 %v373, 32
    %v384 = vpop.permute.xlu0 %383
    %v385 = vsel %vm123, %v384, 0
    %387 = vmatprep.subr.mxu0 0.0
    %388 = vmatpush1.msra.mxu0 %v44
    %389 = vmatprep.subr.mxu0 0.0
    %390 = vmatpush1.msra.mxu0 %v45
    %391 = vmatprep.subr.mxu0 0.0
    %392 = vmatpush1.msra.mxu0 %v46
    %393 = vmatprep.subr.mxu0 0.0
    %394 = vmatpush1.msra.mxu0 %v47
    %395 = vmatprep.subr.mxu0 0.0
    %396 = vmatpush1.msra.mxu0 0.0
    %397 = vmatprep.subr.mxu0 0.0
    %398 = vmatpush1.msra.mxu0 0.0
    %399 = vmatprep.subr.mxu0 0.0
    %400 = vmatpush1.msra.mxu0 0.0
    %401 = vmatprep.subr.mxu0 0.0
    %402 = vmatpush1.msra.mxu0 0.0
    %403 = vmatprep.subr.mxu0 0.0
    %404 = vmatpush1.msra.mxu0 0.0
    %405 = vmatprep.subr.mxu0 0.0
    %406 = vmatpush1.msra.mxu0 0.0
    %407 = vmatprep.subr.mxu0 0.0
    %408 = vmatpush1.msra.mxu0 0.0
    %409 = vmatprep.subr.mxu0 0.0
    %410 = vmatpush1.msra.mxu0 0.0
    %411 = vmatprep.subr.mxu0 0.0
    %412 = vmatpush1.msra.mxu0 0.0
    %413 = vmatprep.subr.mxu0 0.0
    %414 = vmatpush1.msra.mxu0 0.0
    %415 = vmatprep.subr.mxu0 0.0
    %416 = vmatpush1.msra.mxu0 0.0
    %417 = vmatprep.subr.mxu0 0.0
    %418 = vmatpush1.msra.mxu0 0.0
    %419 = vmatprep.subr.mxu0 0.0
    %420 = vmatpush1.msra.mxu0 0.0
    %421 = vmatprep.subr.mxu0 0.0
    %422 = vmatpush1.msra.mxu0 0.0
    %423 = vmatprep.subr.mxu0 0.0
    %424 = vmatpush1.msra.mxu0 0.0
    %425 = vmatprep.subr.mxu0 0.0
    %426 = vmatpush1.msra.mxu0 0.0
    %427 = vmatprep.subr.mxu0 0.0
    %428 = vmatpush1.msra.mxu0 0.0
    %429 = vmatprep.subr.mxu0 0.0
    %430 = vmatpush1.msra.mxu0 0.0
    %431 = vmatprep.subr.mxu0 0.0
    %432 = vmatpush1.msra.mxu0 0.0
    %433 = vmatprep.subr.mxu0 0.0
    %434 = vmatpush1.msra.mxu0 0.0
    %435 = vmatprep.subr.mxu0 0.0
    %436 = vmatpush1.msra.mxu0 0.0
    %437 = vmatprep.subr.mxu0 0.0
    %438 = vmatpush1.msra.mxu0 0.0
    %439 = vmatprep.subr.mxu0 0.0
    %440 = vmatpush1.msra.mxu0 0.0
    %441 = vmatprep.subr.mxu0 0.0
    %442 = vmatpush1.msra.mxu0 0.0
    %443 = vmatprep.subr.mxu0 0.0
    %444 = vmatpush1.msra.mxu0 0.0
    %445 = vmatprep.subr.mxu0 0.0
    %446 = vmatpush1.msra.mxu0 0.0
    %447 = vmatprep.subr.mxu0 0.0
    %448 = vmatpush1.msra.mxu0 0.0
    %449 = vmatprep.subr.mxu0 0.0
    %450 = vmatpush1.msra.mxu0 0.0
    %451 = vmatprep.mubr.f32.mxu0 0.0
    %452 = vmatmul.mubr.f32.gmra.mrb[0].mxu0 %v385
    %v453 = vpop.f32.mrb[0].mxu0
    %v454 = vadd.f32 0.0, %v453
    %v455 = vpop.f32.mrb[0].mxu0
    %456 = vdwg.mxu0
    %v458 = vrot.slane %v454, 7
    %v460 = vadd.f32 %v274, %v458
    %v461 = vxor.u32 %v460, 2147483648
    %v462 = vmul.f32 %v461, 1.442695
    %v463 = vpow.pop %v462
    %v464 = vadd.f32 %v463, 1.0
    %v465 = vrcp.pop %v464
    %v466 = vmul.f32 1.0, %v465
    %v467 = vmul.f32 %v466, 2.0
    %v468 = vsub.f32 %v467, 1.0
    %v470 = vrot.slane %v367, 7
    %v472 = vmul.f32 %v466, %v470
    %474 = vrot.lane.b32.xlu0 %v468, 64
    %v475 = vpop.permute.xlu0 %474
    %v477 = vmul.f32 %v466, %v475
    %479 = vrot.lane.b32.xlu0 %v477, 32
    %v480 = vpop.permute.xlu0 %479
    %v482 = vadd.f32 %v472, %v480
    %v483 = vtanh.pop %v482
    %485 = vrot.lane.b32.xlu0 %v483, 64
    %v486 = vpop.permute.xlu0 %485
    %v488 = vmul.f32 %v466, %v486
    %vm489 = vcmp.eq.s32.totalorder %v27, 1
    %v490 = vsel %vm489, 1, 0
    %vm491 = vcmp.eq.s32.totalorder %v490, 1
    %v492 = vlaneseq
    %v493 = vshrl.u32 %v492, 7
    %v494 = vsub.s32 1, %v493
    %v495 = vrot.slane %v488, %v494
    %v496 = vsel %vm491, %v495, %v381
    %v498 = vrot.slane %v488, 1
    %499 = vrot.lane.b32.xlu0 %v498, 32
    %v500 = vpop.permute.xlu0 %499
    %v501 = vsel %vm123, %v500, 0
    %503 = vmatprep.subr.mxu0 0.0
    %504 = vmatpush1.msra.mxu0 %v44
    %505 = vmatprep.subr.mxu0 0.0
    %506 = vmatpush1.msra.mxu0 %v45
    %507 = vmatprep.subr.mxu0 0.0
    %508 = vmatpush1.msra.mxu0 %v46
    %509 = vmatprep.subr.mxu0 0.0
    %510 = vmatpush1.msra.mxu0 %v47
    %511 = vmatprep.subr.mxu0 0.0
    %512 = vmatpush1.msra.mxu0 0.0
    %513 = vmatprep.subr.mxu0 0.0
    %514 = vmatpush1.msra.mxu0 0.0
    %515 = vmatprep.subr.mxu0 0.0
    %516 = vmatpush1.msra.mxu0 0.0
    %517 = vmatprep.subr.mxu0 0.0
    %518 = vmatpush1.msra.mxu0 0.0
    %519 = vmatprep.subr.mxu0 0.0
    %520 = vmatpush1.msra.mxu0 0.0
    %521 = vmatprep.subr.mxu0 0.0
    %522 = vmatpush1.msra.mxu0 0.0
    %523 = vmatprep.subr.mxu0 0.0
    %524 = vmatpush1.msra.mxu0 0.0
    %525 = vmatprep.subr.mxu0 0.0
    %526 = vmatpush1.msra.mxu0 0.0
    %527 = vmatprep.subr.mxu0 0.0
    %528 = vmatpush1.msra.mxu0 0.0
    %529 = vmatprep.subr.mxu0 0.0
    %530 = vmatpush1.msra.mxu0 0.0
    %531 = vmatprep.subr.mxu0 0.0
    %532 = vmatpush1.msra.mxu0 0.0
    %533 = vmatprep.subr.mxu0 0.0
    %534 = vmatpush1.msra.mxu0 0.0
    %535 = vmatprep.subr.mxu0 0.0
    %536 = vmatpush1.msra.mxu0 0.0
    %537 = vmatprep.subr.mxu0 0.0
    %538 = vmatpush1.msra.mxu0 0.0
    %539 = vmatprep.subr.mxu0 0.0
    %540 = vmatpush1.msra.mxu0 0.0
    %541 = vmatprep.subr.mxu0 0.0
    %542 = vmatpush1.msra.mxu0 0.0
    %543 = vmatprep.subr.mxu0 0.0
    %544 = vmatpush1.msra.mxu0 0.0
    %545 = vmatprep.subr.mxu0 0.0
    %546 = vmatpush1.msra.mxu0 0.0
    %547 = vmatprep.subr.mxu0 0.0
    %548 = vmatpush1.msra.mxu0 0.0
    %549 = vmatprep.subr.mxu0 0.0
    %550 = vmatpush1.msra.mxu0 0.0
    %551 = vmatprep.subr.mxu0 0.0
    %552 = vmatpush1.msra.mxu0 0.0
    %553 = vmatprep.subr.mxu0 0.0
    %554 = vmatpush1.msra.mxu0 0.0
    %555 = vmatprep.subr.mxu0 0.0
    %556 = vmatpush1.msra.mxu0 0.0
    %557 = vmatprep.subr.mxu0 0.0
    %558 = vmatpush1.msra.mxu0 0.0
    %559 = vmatprep.subr.mxu0 0.0
    %560 = vmatpush1.msra.mxu0 0.0
    %561 = vmatprep.subr.mxu0 0.0
    %562 = vmatpush1.msra.mxu0 0.0
    %563 = vmatprep.subr.mxu0 0.0
    %564 = vmatpush1.msra.mxu0 0.0
    %565 = vmatprep.subr.mxu0 0.0
    %566 = vmatpush1.msra.mxu0 0.0
    %567 = vmatprep.mubr.f32.mxu0 0.0
    %568 = vmatmul.mubr.f32.gmra.mrb[0].mxu0 %v501
    %v569 = vpop.f32.mrb[0].mxu0
    %v570 = vadd.f32 0.0, %v569
    %v571 = vpop.f32.mrb[0].mxu0
    %572 = vdwg.mxu0
    %v574 = vrot.slane %v570, 6
    %v576 = vadd.f32 %v274, %v574
    %v577 = vxor.u32 %v576, 2147483648
    %v578 = vmul.f32 %v577, 1.442695
    %v579 = vpow.pop %v578
    %v580 = vadd.f32 %v579, 1.0
    %v581 = vrcp.pop %v580
    %v582 = vmul.f32 1.0, %v581
    %v583 = vmul.f32 %v582, 2.0
    %v584 = vsub.f32 %v583, 1.0
    %v586 = vrot.slane %v482, 7
    %v588 = vmul.f32 %v582, %v586
    %590 = vrot.lane.b32.xlu0 %v584, 64
    %v591 = vpop.permute.xlu0 %590
    %v593 = vmul.f32 %v582, %v591
    %595 = vrot.lane.b32.xlu0 %v593, 32
    %v596 = vpop.permute.xlu0 %595
    %v598 = vadd.f32 %v588, %v596
    %v599 = vtanh.pop %v598
    %601 = vrot.lane.b32.xlu0 %v599, 64
    %v602 = vpop.permute.xlu0 %601
    %v604 = vmul.f32 %v582, %v602
    %vm605 = vcmp.eq.s32.totalorder %v27, 2
    %v606 = vsel %vm605, 1, 0
    %vm607 = vcmp.eq.s32.totalorder %v606, 1
    %v608 = vlaneseq
    %v609 = vshrl.u32 %v608, 7
    %v610 = vsub.s32 2, %v609
    %v611 = vrot.slane %v604, %v610
    %v612 = vsel %vm607, %v611, %v496
    %v614 = vrot.slane %v604, 2
    %615 = vrot.lane.b32.xlu0 %v614, 32
    %v616 = vpop.permute.xlu0 %615
    %v617 = vsel %vm123, %v616, 0
    %619 = vmatprep.subr.mxu0 0.0
    %620 = vmatpush1.msra.mxu0 %v44
    %621 = vmatprep.subr.mxu0 0.0
    %622 = vmatpush1.msra.mxu0 %v45
    %623 = vmatprep.subr.mxu0 0.0
    %624 = vmatpush1.msra.mxu0 %v46
    %625 = vmatprep.subr.mxu0 0.0
    %626 = vmatpush1.msra.mxu0 %v47
    %627 = vmatprep.subr.mxu0 0.0
    %628 = vmatpush1.msra.mxu0 0.0
    %629 = vmatprep.subr.mxu0 0.0
    %630 = vmatpush1.msra.mxu0 0.0
    %631 = vmatprep.subr.mxu0 0.0
    %632 = vmatpush1.msra.mxu0 0.0
    %633 = vmatprep.subr.mxu0 0.0
    %634 = vmatpush1.msra.mxu0 0.0
    %635 = vmatprep.subr.mxu0 0.0
    %636 = vmatpush1.msra.mxu0 0.0
    %637 = vmatprep.subr.mxu0 0.0
    %638 = vmatpush1.msra.mxu0 0.0
    %639 = vmatprep.subr.mxu0 0.0
    %640 = vmatpush1.msra.mxu0 0.0
    %641 = vmatprep.subr.mxu0 0.0
    %642 = vmatpush1.msra.mxu0 0.0
    %643 = vmatprep.subr.mxu0 0.0
    %644 = vmatpush1.msra.mxu0 0.0
    %645 = vmatprep.subr.mxu0 0.0
    %646 = vmatpush1.msra.mxu0 0.0
    %647 = vmatprep.subr.mxu0 0.0
    %648 = vmatpush1.msra.mxu0 0.0
    %649 = vmatprep.subr.mxu0 0.0
    %650 = vmatpush1.msra.mxu0 0.0
    %651 = vmatprep.subr.mxu0 0.0
    %652 = vmatpush1.msra.mxu0 0.0
    %653 = vmatprep.subr.mxu0 0.0
    %654 = vmatpush1.msra.mxu0 0.0
    %655 = vmatprep.subr.mxu0 0.0
    %656 = vmatpush1.msra.mxu0 0.0
    %657 = vmatprep.subr.mxu0 0.0
    %658 = vmatpush1.msra.mxu0 0.0
    %659 = vmatprep.subr.mxu0 0.0
    %660 = vmatpush1.msra.mxu0 0.0
    %661 = vmatprep.subr.mxu0 0.0
    %662 = vmatpush1.msra.mxu0 0.0
    %663 = vmatprep.subr.mxu0 0.0
    %664 = vmatpush1.msra.mxu0 0.0
    %665 = vmatprep.subr.mxu0 0.0
    %666 = vmatpush1.msra.mxu0 0.0
    %667 = vmatprep.subr.mxu0 0.0
    %668 = vmatpush1.msra.mxu0 0.0
    %669 = vmatprep.subr.mxu0 0.0
    %670 = vmatpush1.msra.mxu0 0.0
    %671 = vmatprep.subr.mxu0 0.0
    %672 = vmatpush1.msra.mxu0 0.0
    %673 = vmatprep.subr.mxu0 0.0
    %674 = vmatpush1.msra.mxu0 0.0
    %675 = vmatprep.subr.mxu0 0.0
    %676 = vmatpush1.msra.mxu0 0.0
    %677 = vmatprep.subr.mxu0 0.0
    %678 = vmatpush1.msra.mxu0 0.0
    %679 = vmatprep.subr.mxu0 0.0
    %680 = vmatpush1.msra.mxu0 0.0
    %681 = vmatprep.subr.mxu0 0.0
    %682 = vmatpush1.msra.mxu0 0.0
    %683 = vmatprep.mubr.f32.mxu0 0.0
    %684 = vmatmul.mubr.f32.gmra.mrb[0].mxu0 %v617
    %v685 = vpop.f32.mrb[0].mxu0
    %v686 = vadd.f32 0.0, %v685
    %v687 = vpop.f32.mrb[0].mxu0
    %688 = vdwg.mxu0
    %v690 = vrot.slane %v686, 5
    %v692 = vadd.f32 %v274, %v690
    %v693 = vxor.u32 %v692, 2147483648
    %v694 = vmul.f32 %v693, 1.442695
    %v695 = vpow.pop %v694
    %v696 = vadd.f32 %v695, 1.0
    %v697 = vrcp.pop %v696
    %v698 = vmul.f32 1.0, %v697
    %v699 = vmul.f32 %v698, 2.0
    %v700 = vsub.f32 %v699, 1.0
    %v702 = vrot.slane %v598, 7
    %v704 = vmul.f32 %v698, %v702
    %706 = vrot.lane.b32.xlu0 %v700, 64
    %v707 = vpop.permute.xlu0 %706
    %v709 = vmul.f32 %v698, %v707
    %711 = vrot.lane.b32.xlu0 %v709, 32
    %v712 = vpop.permute.xlu0 %711
    %v714 = vadd.f32 %v704, %v712
    %v715 = vtanh.pop %v714
    %717 = vrot.lane.b32.xlu0 %v715, 64
    %v718 = vpop.permute.xlu0 %717
    %v720 = vmul.f32 %v698, %v718
    %vm721 = vcmp.eq.s32.totalorder %v27, 3
    %v722 = vsel %vm721, 1, 0
    %vm723 = vcmp.eq.s32.totalorder %v722, 1
    %v724 = vlaneseq
    %v725 = vshrl.u32 %v724, 7
    %v726 = vsub.s32 3, %v725
    %v727 = vrot.slane %v720, %v726
    %v728 = vsel %vm723, %v727, %v612
    %v730 = vrot.slane %v720, 3
    %731 = vrot.lane.b32.xlu0 %v730, 32
    %v732 = vpop.permute.xlu0 %731
    %v733 = vsel %vm123, %v732, 0
    %735 = vmatprep.subr.mxu0 0.0
    %736 = vmatpush1.msra.mxu0 %v44
    %737 = vmatprep.subr.mxu0 0.0
    %738 = vmatpush1.msra.mxu0 %v45
    %739 = vmatprep.subr.mxu0 0.0
    %740 = vmatpush1.msra.mxu0 %v46
    %741 = vmatprep.subr.mxu0 0.0
    %742 = vmatpush1.msra.mxu0 %v47
    %743 = vmatprep.subr.mxu0 0.0
    %744 = vmatpush1.msra.mxu0 0.0
    %745 = vmatprep.subr.mxu0 0.0
    %746 = vmatpush1.msra.mxu0 0.0
    %747 = vmatprep.subr.mxu0 0.0
    %748 = vmatpush1.msra.mxu0 0.0
    %749 = vmatprep.subr.mxu0 0.0
    %750 = vmatpush1.msra.mxu0 0.0
    %751 = vmatprep.subr.mxu0 0.0
    %752 = vmatpush1.msra.mxu0 0.0
    %753 = vmatprep.subr.mxu0 0.0
    %754 = vmatpush1.msra.mxu0 0.0
    %755 = vmatprep.subr.mxu0 0.0
    %756 = vmatpush1.msra.mxu0 0.0
    %757 = vmatprep.subr.mxu0 0.0
    %758 = vmatpush1.msra.mxu0 0.0
    %759 = vmatprep.subr.mxu0 0.0
    %760 = vmatpush1.msra.mxu0 0.0
    %761 = vmatprep.subr.mxu0 0.0
    %762 = vmatpush1.msra.mxu0 0.0
    %763 = vmatprep.subr.mxu0 0.0
    %764 = vmatpush1.msra.mxu0 0.0
    %765 = vmatprep.subr.mxu0 0.0
    %766 = vmatpush1.msra.mxu0 0.0
    %767 = vmatprep.subr.mxu0 0.0
    %768 = vmatpush1.msra.mxu0 0.0
    %769 = vmatprep.subr.mxu0 0.0
    %770 = vmatpush1.msra.mxu0 0.0
    %771 = vmatprep.subr.mxu0 0.0
    %772 = vmatpush1.msra.mxu0 0.0
    %773 = vmatprep.subr.mxu0 0.0
    %774 = vmatpush1.msra.mxu0 0.0
    %775 = vmatprep.subr.mxu0 0.0
    %776 = vmatpush1.msra.mxu0 0.0
    %777 = vmatprep.subr.mxu0 0.0
    %778 = vmatpush1.msra.mxu0 0.0
    %779 = vmatprep.subr.mxu0 0.0
    %780 = vmatpush1.msra.mxu0 0.0
    %781 = vmatprep.subr.mxu0 0.0
    %782 = vmatpush1.msra.mxu0 0.0
    %783 = vmatprep.subr.mxu0 0.0
    %784 = vmatpush1.msra.mxu0 0.0
    %785 = vmatprep.subr.mxu0 0.0
    %786 = vmatpush1.msra.mxu0 0.0
    %787 = vmatprep.subr.mxu0 0.0
    %788 = vmatpush1.msra.mxu0 0.0
    %789 = vmatprep.subr.mxu0 0.0
    %790 = vmatpush1.msra.mxu0 0.0
    %791 = vmatprep.subr.mxu0 0.0
    %792 = vmatpush1.msra.mxu0 0.0
    %793 = vmatprep.subr.mxu0 0.0
    %794 = vmatpush1.msra.mxu0 0.0
    %795 = vmatprep.subr.mxu0 0.0
    %796 = vmatpush1.msra.mxu0 0.0
    %797 = vmatprep.subr.mxu0 0.0
    %798 = vmatpush1.msra.mxu0 0.0
    %799 = vmatprep.mubr.f32.mxu0 0.0
    %800 = vmatmul.mubr.f32.gmra.mrb[0].mxu0 %v733
    %v801 = vpop.f32.mrb[0].mxu0
    %v802 = vadd.f32 0.0, %v801
    %v803 = vpop.f32.mrb[0].mxu0
    %804 = vdwg.mxu0
    %v806 = vrot.slane %v802, 4
    %v808 = vadd.f32 %v274, %v806
    %v809 = vxor.u32 %v808, 2147483648
    %v810 = vmul.f32 %v809, 1.442695
    %v811 = vpow.pop %v810
    %v812 = vadd.f32 %v811, 1.0
    %v813 = vrcp.pop %v812
    %v814 = vmul.f32 1.0, %v813
    %v815 = vmul.f32 %v814, 2.0
    %v816 = vsub.f32 %v815, 1.0
    %v818 = vrot.slane %v714, 7
    %v820 = vmul.f32 %v814, %v818
    %822 = vrot.lane.b32.xlu0 %v816, 64
    %v823 = vpop.permute.xlu0 %822
    %v825 = vmul.f32 %v814, %v823
    %827 = vrot.lane.b32.xlu0 %v825, 32
    %v828 = vpop.permute.xlu0 %827
    %v830 = vadd.f32 %v820, %v828
    %v831 = vtanh.pop %v830
    %833 = vrot.lane.b32.xlu0 %v831, 64
    %v834 = vpop.permute.xlu0 %833
    %v836 = vmul.f32 %v814, %v834
    %vm837 = vcmp.eq.s32.totalorder %v27, 4
    %v838 = vsel %vm837, 1, 0
    %vm839 = vcmp.eq.s32.totalorder %v838, 1
    %v840 = vlaneseq
    %v841 = vshrl.u32 %v840, 7
    %v842 = vsub.s32 4, %v841
    %v843 = vrot.slane %v836, %v842
    %v844 = vsel %vm839, %v843, %v728
    %v846 = vrot.slane %v836, 4
    %847 = vrot.lane.b32.xlu0 %v846, 32
    %v848 = vpop.permute.xlu0 %847
    %v849 = vsel %vm123, %v848, 0
    %851 = vmatprep.subr.mxu0 0.0
    %852 = vmatpush1.msra.mxu0 %v44
    %853 = vmatprep.subr.mxu0 0.0
    %854 = vmatpush1.msra.mxu0 %v45
    %855 = vmatprep.subr.mxu0 0.0
    %856 = vmatpush1.msra.mxu0 %v46
    %857 = vmatprep.subr.mxu0 0.0
    %858 = vmatpush1.msra.mxu0 %v47
    %859 = vmatprep.subr.mxu0 0.0
    %860 = vmatpush1.msra.mxu0 0.0
    %861 = vmatprep.subr.mxu0 0.0
    %862 = vmatpush1.msra.mxu0 0.0
    %863 = vmatprep.subr.mxu0 0.0
    %864 = vmatpush1.msra.mxu0 0.0
    %865 = vmatprep.subr.mxu0 0.0
    %866 = vmatpush1.msra.mxu0 0.0
    %867 = vmatprep.subr.mxu0 0.0
    %868 = vmatpush1.msra.mxu0 0.0
    %869 = vmatprep.subr.mxu0 0.0
    %870 = vmatpush1.msra.mxu0 0.0
    %871 = vmatprep.subr.mxu0 0.0
    %872 = vmatpush1.msra.mxu0 0.0
    %873 = vmatprep.subr.mxu0 0.0
    %874 = vmatpush1.msra.mxu0 0.0
    %875 = vmatprep.subr.mxu0 0.0
    %876 = vmatpush1.msra.mxu0 0.0
    %877 = vmatprep.subr.mxu0 0.0
    %878 = vmatpush1.msra.mxu0 0.0
    %879 = vmatprep.subr.mxu0 0.0
    %880 = vmatpush1.msra.mxu0 0.0
    %881 = vmatprep.subr.mxu0 0.0
    %882 = vmatpush1.msra.mxu0 0.0
    %883 = vmatprep.subr.mxu0 0.0
    %884 = vmatpush1.msra.mxu0 0.0
    %885 = vmatprep.subr.mxu0 0.0
    %886 = vmatpush1.msra.mxu0 0.0
    %887 = vmatprep.subr.mxu0 0.0
    %888 = vmatpush1.msra.mxu0 0.0
    %889 = vmatprep.subr.mxu0 0.0
    %890 = vmatpush1.msra.mxu0 0.0
    %891 = vmatprep.subr.mxu0 0.0
    %892 = vmatpush1.msra.mxu0 0.0
    %893 = vmatprep.subr.mxu0 0.0
    %894 = vmatpush1.msra.mxu0 0.0
    %895 = vmatprep.subr.mxu0 0.0
    %896 = vmatpush1.msra.mxu0 0.0
    %897 = vmatprep.subr.mxu0 0.0
    %898 = vmatpush1.msra.mxu0 0.0
    %899 = vmatprep.subr.mxu0 0.0
    %900 = vmatpush1.msra.mxu0 0.0
    %901 = vmatprep.subr.mxu0 0.0
    %902 = vmatpush1.msra.mxu0 0.0
    %903 = vmatprep.subr.mxu0 0.0
    %904 = vmatpush1.msra.mxu0 0.0
    %905 = vmatprep.subr.mxu0 0.0
    %906 = vmatpush1.msra.mxu0 0.0
    %907 = vmatprep.subr.mxu0 0.0
    %908 = vmatpush1.msra.mxu0 0.0
    %909 = vmatprep.subr.mxu0 0.0
    %910 = vmatpush1.msra.mxu0 0.0
    %911 = vmatprep.subr.mxu0 0.0
    %912 = vmatpush1.msra.mxu0 0.0
    %913 = vmatprep.subr.mxu0 0.0
    %914 = vmatpush1.msra.mxu0 0.0
    %915 = vmatprep.mubr.f32.mxu0 0.0
    %916 = vmatmul.mubr.f32.gmra.mrb[0].mxu0 %v849
    %v917 = vpop.f32.mrb[0].mxu0
    %v918 = vadd.f32 0.0, %v917
    %v919 = vpop.f32.mrb[0].mxu0
    %920 = vdwg.mxu0
    %v922 = vrot.slane %v918, 3
    %v924 = vadd.f32 %v274, %v922
    %v925 = vxor.u32 %v924, 2147483648
    %v926 = vmul.f32 %v925, 1.442695
    %v927 = vpow.pop %v926
    %v928 = vadd.f32 %v927, 1.0
    %v929 = vrcp.pop %v928
    %v930 = vmul.f32 1.0, %v929
    %v931 = vmul.f32 %v930, 2.0
    %v932 = vsub.f32 %v931, 1.0
    %v934 = vrot.slane %v830, 7
    %v936 = vmul.f32 %v930, %v934
    %938 = vrot.lane.b32.xlu0 %v932, 64
    %v939 = vpop.permute.xlu0 %938
    %v941 = vmul.f32 %v930, %v939
    %943 = vrot.lane.b32.xlu0 %v941, 32
    %v944 = vpop.permute.xlu0 %943
    %v946 = vadd.f32 %v936, %v944
    %v947 = vtanh.pop %v946
    %949 = vrot.lane.b32.xlu0 %v947, 64
    %v950 = vpop.permute.xlu0 %949
    %v952 = vmul.f32 %v930, %v950
    %vm953 = vcmp.eq.s32.totalorder %v27, 5
    %v954 = vsel %vm953, 1, 0
    %vm955 = vcmp.eq.s32.totalorder %v954, 1
    %v956 = vlaneseq
    %v957 = vshrl.u32 %v956, 7
    %v958 = vsub.s32 5, %v957
    %v959 = vrot.slane %v952, %v958
    %v960 = vsel %vm955, %v959, %v844
    %v962 = vrot.slane %v952, 5
    %963 = vrot.lane.b32.xlu0 %v962, 32
    %v964 = vpop.permute.xlu0 %963
    %v965 = vsel %vm123, %v964, 0
    %967 = vmatprep.subr.mxu0 0.0
    %968 = vmatpush1.msra.mxu0 %v44
    %969 = vmatprep.subr.mxu0 0.0
    %970 = vmatpush1.msra.mxu0 %v45
    %971 = vmatprep.subr.mxu0 0.0
    %972 = vmatpush1.msra.mxu0 %v46
    %973 = vmatprep.subr.mxu0 0.0
    %974 = vmatpush1.msra.mxu0 %v47
    %975 = vmatprep.subr.mxu0 0.0
    %976 = vmatpush1.msra.mxu0 0.0
    %977 = vmatprep.subr.mxu0 0.0
    %978 = vmatpush1.msra.mxu0 0.0
    %979 = vmatprep.subr.mxu0 0.0
    %980 = vmatpush1.msra.mxu0 0.0
    %981 = vmatprep.subr.mxu0 0.0
    %982 = vmatpush1.msra.mxu0 0.0
    %983 = vmatprep.subr.mxu0 0.0
    %984 = vmatpush1.msra.mxu0 0.0
    %985 = vmatprep.subr.mxu0 0.0
    %986 = vmatpush1.msra.mxu0 0.0
    %987 = vmatprep.subr.mxu0 0.0
    %988 = vmatpush1.msra.mxu0 0.0
    %989 = vmatprep.subr.mxu0 0.0
    %990 = vmatpush1.msra.mxu0 0.0
    %991 = vmatprep.subr.mxu0 0.0
    %992 = vmatpush1.msra.mxu0 0.0
    %993 = vmatprep.subr.mxu0 0.0
    %994 = vmatpush1.msra.mxu0 0.0
    %995 = vmatprep.subr.mxu0 0.0
    %996 = vmatpush1.msra.mxu0 0.0
    %997 = vmatprep.subr.mxu0 0.0
    %998 = vmatpush1.msra.mxu0 0.0
    %999 = vmatprep.subr.mxu0 0.0
    %1000 = vmatpush1.msra.mxu0 0.0
    %1001 = vmatprep.subr.mxu0 0.0
    %1002 = vmatpush1.msra.mxu0 0.0
    %1003 = vmatprep.subr.mxu0 0.0
    %1004 = vmatpush1.msra.mxu0 0.0
    %1005 = vmatprep.subr.mxu0 0.0
    %1006 = vmatpush1.msra.mxu0 0.0
    %1007 = vmatprep.subr.mxu0 0.0
    %1008 = vmatpush1.msra.mxu0 0.0
    %1009 = vmatprep.subr.mxu0 0.0
    %1010 = vmatpush1.msra.mxu0 0.0
    %1011 = vmatprep.subr.mxu0 0.0
    %1012 = vmatpush1.msra.mxu0 0.0
    %1013 = vmatprep.subr.mxu0 0.0
    %1014 = vmatpush1.msra.mxu0 0.0
    %1015 = vmatprep.subr.mxu0 0.0
    %1016 = vmatpush1.msra.mxu0 0.0
    %1017 = vmatprep.subr.mxu0 0.0
    %1018 = vmatpush1.msra.mxu0 0.0
    %1019 = vmatprep.subr.mxu0 0.0
    %1020 = vmatpush1.msra.mxu0 0.0
    %1021 = vmatprep.subr.mxu0 0.0
    %1022 = vmatpush1.msra.mxu0 0.0
    %1023 = vmatprep.subr.mxu0 0.0
    %1024 = vmatpush1.msra.mxu0 0.0
    %1025 = vmatprep.subr.mxu0 0.0
    %1026 = vmatpush1.msra.mxu0 0.0
    %1027 = vmatprep.subr.mxu0 0.0
    %1028 = vmatpush1.msra.mxu0 0.0
    %1029 = vmatprep.subr.mxu0 0.0
    %1030 = vmatpush1.msra.mxu0 0.0
    %1031 = vmatprep.mubr.f32.mxu0 0.0
    %1032 = vmatmul.mubr.f32.gmra.mrb[0].mxu0 %v965
    %v1033 = vpop.f32.mrb[0].mxu0
    %v1034 = vadd.f32 0.0, %v1033
    %v1035 = vpop.f32.mrb[0].mxu0
    %1036 = vdwg.mxu0
    %v1038 = vrot.slane %v1034, 2
    %v1040 = vadd.f32 %v274, %v1038
    %v1041 = vxor.u32 %v1040, 2147483648
    %v1042 = vmul.f32 %v1041, 1.442695
    %v1043 = vpow.pop %v1042
    %v1044 = vadd.f32 %v1043, 1.0
    %v1045 = vrcp.pop %v1044
    %v1046 = vmul.f32 1.0, %v1045
    %v1047 = vmul.f32 %v1046, 2.0
    %v1048 = vsub.f32 %v1047, 1.0
    %v1050 = vrot.slane %v946, 7
    %v1052 = vmul.f32 %v1046, %v1050
    %1054 = vrot.lane.b32.xlu0 %v1048, 64
    %v1055 = vpop.permute.xlu0 %1054
    %v1057 = vmul.f32 %v1046, %v1055
    %1059 = vrot.lane.b32.xlu0 %v1057, 32
    %v1060 = vpop.permute.xlu0 %1059
    %v1062 = vadd.f32 %v1052, %v1060
    %v1063 = vtanh.pop %v1062
    %1065 = vrot.lane.b32.xlu0 %v1063, 64
    %v1066 = vpop.permute.xlu0 %1065
    %v1068 = vmul.f32 %v1046, %v1066
    %vm1069 = vcmp.eq.s32.totalorder %v27, 6
    %v1070 = vsel %vm1069, 1, 0
    %vm1071 = vcmp.eq.s32.totalorder %v1070, 1
    %v1072 = vlaneseq
    %v1073 = vshrl.u32 %v1072, 7
    %v1074 = vsub.s32 6, %v1073
    %v1075 = vrot.slane %v1068, %v1074
    %v1076 = vsel %vm1071, %v1075, %v960
    %v1078 = vrot.slane %v1068, 6
    %1079 = vrot.lane.b32.xlu0 %v1078, 32
    %v1080 = vpop.permute.xlu0 %1079
    %v1081 = vsel %vm123, %v1080, 0
    %1083 = vmatprep.subr.mxu0 0.0
    %1084 = vmatpush1.msra.mxu0 %v44
    %1085 = vmatprep.subr.mxu0 0.0
    %1086 = vmatpush1.msra.mxu0 %v45
    %1087 = vmatprep.subr.mxu0 0.0
    %1088 = vmatpush1.msra.mxu0 %v46
    %1089 = vmatprep.subr.mxu0 0.0
    %1090 = vmatpush1.msra.mxu0 %v47
    %1091 = vmatprep.subr.mxu0 0.0
    %1092 = vmatpush1.msra.mxu0 0.0
    %1093 = vmatprep.subr.mxu0 0.0
    %1094 = vmatpush1.msra.mxu0 0.0
    %1095 = vmatprep.subr.mxu0 0.0
    %1096 = vmatpush1.msra.mxu0 0.0
    %1097 = vmatprep.subr.mxu0 0.0
    %1098 = vmatpush1.msra.mxu0 0.0
    %1099 = vmatprep.subr.mxu0 0.0
    %1100 = vmatpush1.msra.mxu0 0.0
    %1101 = vmatprep.subr.mxu0 0.0
    %1102 = vmatpush1.msra.mxu0 0.0
    %1103 = vmatprep.subr.mxu0 0.0
    %1104 = vmatpush1.msra.mxu0 0.0
    %1105 = vmatprep.subr.mxu0 0.0
    %1106 = vmatpush1.msra.mxu0 0.0
    %1107 = vmatprep.subr.mxu0 0.0
    %1108 = vmatpush1.msra.mxu0 0.0
    %1109 = vmatprep.subr.mxu0 0.0
    %1110 = vmatpush1.msra.mxu0 0.0
    %1111 = vmatprep.subr.mxu0 0.0
    %1112 = vmatpush1.msra.mxu0 0.0
    %1113 = vmatprep.subr.mxu0 0.0
    %1114 = vmatpush1.msra.mxu0 0.0
    %1115 = vmatprep.subr.mxu0 0.0
    %1116 = vmatpush1.msra.mxu0 0.0
    %1117 = vmatprep.subr.mxu0 0.0
    %1118 = vmatpush1.msra.mxu0 0.0
    %1119 = vmatprep.subr.mxu0 0.0
    %1120 = vmatpush1.msra.mxu0 0.0
    %1121 = vmatprep.subr.mxu0 0.0
    %1122 = vmatpush1.msra.mxu0 0.0
    %1123 = vmatprep.subr.mxu0 0.0
    %1124 = vmatpush1.msra.mxu0 0.0
    %1125 = vmatprep.subr.mxu0 0.0
    %1126 = vmatpush1.msra.mxu0 0.0
    %1127 = vmatprep.subr.mxu0 0.0
    %1128 = vmatpush1.msra.mxu0 0.0
    %1129 = vmatprep.subr.mxu0 0.0
    %1130 = vmatpush1.msra.mxu0 0.0
    %1131 = vmatprep.subr.mxu0 0.0
    %1132 = vmatpush1.msra.mxu0 0.0
    %1133 = vmatprep.subr.mxu0 0.0
    %1134 = vmatpush1.msra.mxu0 0.0
    %1135 = vmatprep.subr.mxu0 0.0
    %1136 = vmatpush1.msra.mxu0 0.0
    %1137 = vmatprep.subr.mxu0 0.0
    %1138 = vmatpush1.msra.mxu0 0.0
    %1139 = vmatprep.subr.mxu0 0.0
    %1140 = vmatpush1.msra.mxu0 0.0
    %1141 = vmatprep.subr.mxu0 0.0
    %1142 = vmatpush1.msra.mxu0 0.0
    %1143 = vmatprep.subr.mxu0 0.0
    %1144 = vmatpush1.msra.mxu0 0.0
    %1145 = vmatprep.subr.mxu0 0.0
    %1146 = vmatpush1.msra.mxu0 0.0
    %1147 = vmatprep.mubr.f32.mxu0 0.0
    %1148 = vmatmul.mubr.f32.gmra.mrb[0].mxu0 %v1081
    %v1149 = vpop.f32.mrb[0].mxu0
    %v1150 = vadd.f32 0.0, %v1149
    %v1151 = vpop.f32.mrb[0].mxu0
    %1152 = vdwg.mxu0
    %v1154 = vrot.slane %v1150, 1
    %v1156 = vadd.f32 %v274, %v1154
    %v1157 = vxor.u32 %v1156, 2147483648
    %v1158 = vmul.f32 %v1157, 1.442695
    %v1159 = vpow.pop %v1158
    %v1160 = vadd.f32 %v1159, 1.0
    %v1161 = vrcp.pop %v1160
    %v1162 = vmul.f32 1.0, %v1161
    %v1163 = vmul.f32 %v1162, 2.0
    %v1164 = vsub.f32 %v1163, 1.0
    %v1166 = vrot.slane %v1062, 7
    %v1168 = vmul.f32 %v1162, %v1166
    %1170 = vrot.lane.b32.xlu0 %v1164, 64
    %v1171 = vpop.permute.xlu0 %1170
    %v1173 = vmul.f32 %v1162, %v1171
    %1175 = vrot.lane.b32.xlu0 %v1173, 32
    %v1176 = vpop.permute.xlu0 %1175
    %v1178 = vadd.f32 %v1168, %v1176
    %v1179 = vtanh.pop %v1178
    %1181 = vrot.lane.b32.xlu0 %v1179, 64
    %v1182 = vpop.permute.xlu0 %1181
    %v1184 = vmul.f32 %v1162, %v1182
    %vm1185 = vcmp.eq.s32.totalorder %v27, 7
    %v1186 = vsel %vm1185, 1, 0
    %vm1187 = vcmp.eq.s32.totalorder %v1186, 1
    %v1188 = vlaneseq
    %v1189 = vshrl.u32 %v1188, 7
    %v1190 = vsub.s32 7, %v1189
    %v1191 = vrot.slane %v1184, %v1190
    %v1192 = vsel %vm1187, %v1191, %v1076
    %1194 = vrot.lane.b32.xlu0 %v1192, 32
    %v1195 = vpop.permute.xlu0 %1194
    %1197 = vmatprep.subr.mxu0 0.0
    %1198 = vmatpush1.msra.mxu0 %v1195
    %1199 = vmatprep.subr.mxu0 0.0
    %1200 = vmatpush1.msra.mxu0 0.0
    %1201 = vmatprep.subr.mxu0 0.0
    %1202 = vmatpush1.msra.mxu0 0.0
    %1203 = vmatprep.subr.mxu0 0.0
    %1204 = vmatpush1.msra.mxu0 0.0
    %1205 = vmatprep.subr.mxu0 0.0
    %1206 = vmatpush1.msra.mxu0 0.0
    %1207 = vmatprep.subr.mxu0 0.0
    %1208 = vmatpush1.msra.mxu0 0.0
    %1209 = vmatprep.subr.mxu0 0.0
    %1210 = vmatpush1.msra.mxu0 0.0
    %1211 = vmatprep.subr.mxu0 0.0
    %1212 = vmatpush1.msra.mxu0 0.0
    %1213 = vmatprep.subr.mxu0 0.0
    %1214 = vmatpush1.msra.mxu0 0.0
    %1215 = vmatprep.subr.mxu0 0.0
    %1216 = vmatpush1.msra.mxu0 0.0
    %1217 = vmatprep.subr.mxu0 0.0
    %1218 = vmatpush1.msra.mxu0 0.0
    %1219 = vmatprep.subr.mxu0 0.0
    %1220 = vmatpush1.msra.mxu0 0.0
    %1221 = vmatprep.subr.mxu0 0.0
    %1222 = vmatpush1.msra.mxu0 0.0
    %1223 = vmatprep.subr.mxu0 0.0
    %1224 = vmatpush1.msra.mxu0 0.0
    %1225 = vmatprep.subr.mxu0 0.0
    %1226 = vmatpush1.msra.mxu0 0.0
    %1227 = vmatprep.subr.mxu0 0.0
    %1228 = vmatpush1.msra.mxu0 0.0
    %1229 = vmatprep.subr.mxu0 0.0
    %1230 = vmatpush1.msra.mxu0 0.0
    %1231 = vmatprep.subr.mxu0 0.0
    %1232 = vmatpush1.msra.mxu0 0.0
    %1233 = vmatprep.subr.mxu0 0.0
    %1234 = vmatpush1.msra.mxu0 0.0
    %1235 = vmatprep.subr.mxu0 0.0
    %1236 = vmatpush1.msra.mxu0 0.0
    %1237 = vmatprep.subr.mxu0 0.0
    %1238 = vmatpush1.msra.mxu0 0.0
    %1239 = vmatprep.subr.mxu0 0.0
    %1240 = vmatpush1.msra.mxu0 0.0
    %1241 = vmatprep.subr.mxu0 0.0
    %1242 = vmatpush1.msra.mxu0 0.0
    %1243 = vmatprep.subr.mxu0 0.0
    %1244 = vmatpush1.msra.mxu0 0.0
    %1245 = vmatprep.subr.mxu0 0.0
    %1246 = vmatpush1.msra.mxu0 0.0
    %1247 = vmatprep.subr.mxu0 0.0
    %1248 = vmatpush1.msra.mxu0 0.0
    %1249 = vmatprep.subr.mxu0 0.0
    %1250 = vmatpush1.msra.mxu0 0.0
    %1251 = vmatprep.subr.mxu0 0.0
    %1252 = vmatpush1.msra.mxu0 0.0
    %1253 = vmatprep.subr.mxu0 0.0
    %1254 = vmatpush1.msra.mxu0 0.0
    %1255 = vmatprep.subr.mxu0 0.0
    %1256 = vmatpush1.msra.mxu0 0.0
    %1257 = vmatprep.subr.mxu0 0.0
    %1258 = vmatpush1.msra.mxu0 0.0
    %1259 = vmatprep.subr.mxu0 0.0
    %1260 = vmatpush1.msra.mxu0 0.0
    %1261 = vmatprep.mubr.f32.mxu0 0.0
    %1262 = vmatmul.mubr.f32.gmra.mrb[0].mxu0 %v51
    %v1263 = vpop.f32.mrb[0].mxu0
    %v1264 = vadd.f32 0.0, %v1263
    %v1265 = vpop.f32.mrb[0].mxu0
    %1266 = vdwg.mxu0
    %v1267 = vsel %vm34, %v1195, %v1264
    %v1268 = vld [vmem:[#allocation2 + $0x68] sm:$0xff]
    %v1269 = vld [vmem:[#allocation2 + $0x70] sm:$0xff]
    %v1270 = vld [vmem:[#allocation2 + $0x78] sm:$0xff]
    %v1271 = vld [vmem:[#allocation2 + $0x80] sm:$0xff]
    %v1272 = vld [vmem:[#allocation2 + $0x88] sm:$0xff]
    %v1273 = vld [vmem:[#allocation2 + $0x90] sm:$0xff]
    %v1274 = vld [vmem:[#allocation2 + $0x98] sm:$0xff]
    %v1275 = vld [vmem:[#allocation2 + $0xa0] sm:$0xff]
    %v1276 = vld [vmem:[#allocation2 + $0xa8] sm:$0xff]
    %v1277 = vld [vmem:[#allocation2 + $0xb0] sm:$0xff]
    %v1278 = vld [vmem:[#allocation2 + $0xb8] sm:$0xff]
    %v1279 = vld [vmem:[#allocation2 + $0xc0] sm:$0xff]
    %v1280 = vld [vmem:[#allocation2 + $0xc8] sm:$0x1]
    %1281 = vmatprep.subr.mxu0 0.0
    %1282 = vmatpush1.msra.mxu0 %v1267
    %1283 = vmatprep.subr.mxu0 0.0
    %1284 = vmatpush1.msra.mxu0 0.0
    %1285 = vmatprep.subr.mxu0 0.0
    %1286 = vmatpush1.msra.mxu0 0.0
    %1287 = vmatprep.subr.mxu0 0.0
    %1288 = vmatpush1.msra.mxu0 0.0
    %1289 = vmatprep.subr.mxu0 0.0
    %1290 = vmatpush1.msra.mxu0 0.0
    %1291 = vmatprep.subr.mxu0 0.0
    %1292 = vmatpush1.msra.mxu0 0.0
    %1293 = vmatprep.subr.mxu0 0.0
    %1294 = vmatpush1.msra.mxu0 0.0
    %1295 = vmatprep.subr.mxu0 0.0
    %1296 = vmatpush1.msra.mxu0 0.0
    %1297 = vmatprep.subr.mxu0 0.0
    %1298 = vmatpush1.msra.mxu0 0.0
    %1299 = vmatprep.subr.mxu0 0.0
    %1300 = vmatpush1.msra.mxu0 0.0
    %1301 = vmatprep.subr.mxu0 0.0
    %1302 = vmatpush1.msra.mxu0 0.0
    %1303 = vmatprep.subr.mxu0 0.0
    %1304 = vmatpush1.msra.mxu0 0.0
    %1305 = vmatprep.subr.mxu0 0.0
    %1306 = vmatpush1.msra.mxu0 0.0
    %1307 = vmatprep.subr.mxu0 0.0
    %1308 = vmatpush1.msra.mxu0 0.0
    %1309 = vmatprep.subr.mxu0 0.0
    %1310 = vmatpush1.msra.mxu0 0.0
    %1311 = vmatprep.subr.mxu0 0.0
    %1312 = vmatpush1.msra.mxu0 0.0
    %1313 = vmatprep.subr.mxu0 0.0
    %1314 = vmatpush1.msra.mxu0 0.0
    %1315 = vmatprep.subr.mxu0 0.0
    %1316 = vmatpush1.msra.mxu0 0.0
    %1317 = vmatprep.subr.mxu0 0.0
    %1318 = vmatpush1.msra.mxu0 0.0
    %1319 = vmatprep.subr.mxu0 0.0
    %1320 = vmatpush1.msra.mxu0 0.0
    %1321 = vmatprep.subr.mxu0 0.0
    %1322 = vmatpush1.msra.mxu0 0.0
    %1323 = vmatprep.subr.mxu0 0.0
    %1324 = vmatpush1.msra.mxu0 0.0
    %1325 = vmatprep.subr.mxu0 0.0
    %1326 = vmatpush1.msra.mxu0 0.0
    %1327 = vmatprep.subr.mxu0 0.0
    %1328 = vmatpush1.msra.mxu0 0.0
    %1329 = vmatprep.subr.mxu0 0.0
    %1330 = vmatpush1.msra.mxu0 0.0
    %1331 = vmatprep.subr.mxu0 0.0
    %1332 = vmatpush1.msra.mxu0 0.0
    %1333 = vmatprep.subr.mxu0 0.0
    %1334 = vmatpush1.msra.mxu0 0.0
    %1335 = vmatprep.subr.mxu0 0.0
    %1336 = vmatpush1.msra.mxu0 0.0
    %1337 = vmatprep.subr.mxu0 0.0
    %1338 = vmatpush1.msra.mxu0 0.0
    %1339 = vmatprep.subr.mxu0 0.0
    %1340 = vmatpush1.msra.mxu0 0.0
    %1341 = vmatprep.subr.mxu0 0.0
    %1342 = vmatpush1.msra.mxu0 0.0
    %1343 = vmatprep.subr.mxu0 0.0
    %1344 = vmatpush1.msra.mxu0 0.0
    %1345 = vmatprep.mubr.f32.mxu0 0.0
    %1346 = vmatmul.mubr.f32.gmra.mrb[0].mxu0 %v51
    %v1347 = vpop.f32.mrb[0].mxu0
    %v1348 = vadd.f32 0.0, %v1347
    %v1349 = vpop.f32.mrb[0].mxu0
    %1350 = vdwg.mxu0
    %v1352 = vsel %vm123, %v1348, 0
    %1354 = vmatprep.subr.mxu0 0.0
    %1355 = vmatpush1.msra.mxu0 %v1272
    %1356 = vmatprep.subr.mxu0 0.0
    %1357 = vmatpush1.msra.mxu0 %v1273
    %1358 = vmatprep.subr.mxu0 0.0
    %1359 = vmatpush1.msra.mxu0 %v1274
    %1360 = vmatprep.subr.mxu0 0.0
    %1361 = vmatpush1.msra.mxu0 %v1275
    %1362 = vmatprep.subr.mxu0 0.0
    %1363 = vmatpush1.msra.mxu0 0.0
    %1364 = vmatprep.subr.mxu0 0.0
    %1365 = vmatpush1.msra.mxu0 0.0
    %1366 = vmatprep.subr.mxu0 0.0
    %1367 = vmatpush1.msra.mxu0 0.0
    %1368 = vmatprep.subr.mxu0 0.0
    %1369 = vmatpush1.msra.mxu0 0.0
    %1370 = vmatprep.subr.mxu0 0.0
    %1371 = vmatpush1.msra.mxu0 0.0
    %1372 = vmatprep.subr.mxu0 0.0
    %1373 = vmatpush1.msra.mxu0 0.0
    %1374 = vmatprep.subr.mxu0 0.0
    %1375 = vmatpush1.msra.mxu0 0.0
    %1376 = vmatprep.subr.mxu0 0.0
    %1377 = vmatpush1.msra.mxu0 0.0
    %1378 = vmatprep.subr.mxu0 0.0
    %1379 = vmatpush1.msra.mxu0 0.0
    %1380 = vmatprep.subr.mxu0 0.0
    %1381 = vmatpush1.msra.mxu0 0.0
    %1382 = vmatprep.subr.mxu0 0.0
    %1383 = vmatpush1.msra.mxu0 0.0
    %1384 = vmatprep.subr.mxu0 0.0
    %1385 = vmatpush1.msra.mxu0 0.0
    %1386 = vmatprep.subr.mxu0 0.0
    %1387 = vmatpush1.msra.mxu0 0.0
    %1388 = vmatprep.subr.mxu0 0.0
    %1389 = vmatpush1.msra.mxu0 0.0
    %1390 = vmatprep.subr.mxu0 0.0
    %1391 = vmatpush1.msra.mxu0 0.0
    %1392 = vmatprep.subr.mxu0 0.0
    %1393 = vmatpush1.msra.mxu0 0.0
    %1394 = vmatprep.subr.mxu0 0.0
    %1395 = vmatpush1.msra.mxu0 0.0
    %1396 = vmatprep.subr.mxu0 0.0
    %1397 = vmatpush1.msra.mxu0 0.0
    %1398 = vmatprep.subr.mxu0 0.0
    %1399 = vmatpush1.msra.mxu0 0.0
    %1400 = vmatprep.subr.mxu0 0.0
    %1401 = vmatpush1.msra.mxu0 0.0
    %1402 = vmatprep.subr.mxu0 0.0
    %1403 = vmatpush1.msra.mxu0 0.0
    %1404 = vmatprep.subr.mxu0 0.0
    %1405 = vmatpush1.msra.mxu0 0.0
    %1406 = vmatprep.subr.mxu0 0.0
    %1407 = vmatpush1.msra.mxu0 0.0
    %1408 = vmatprep.subr.mxu0 0.0
    %1409 = vmatpush1.msra.mxu0 0.0
    %1410 = vmatprep.subr.mxu0 0.0
    %1411 = vmatpush1.msra.mxu0 0.0
    %1412 = vmatprep.subr.mxu0 0.0
    %1413 = vmatpush1.msra.mxu0 0.0
    %1414 = vmatprep.subr.mxu0 0.0
    %1415 = vmatpush1.msra.mxu0 0.0
    %1416 = vmatprep.subr.mxu0 0.0
    %1417 = vmatpush1.msra.mxu0 0.0
    %1418 = vmatprep.mubr.f32.mxu0 0.0
    %1419 = vmatmul.mubr.f32.gmra.mrb[0].mxu0 %v1352
    %v1420 = vpop.f32.mrb[0].mxu0
    %v1421 = vadd.f32 0.0, %v1420
    %v1422 = vpop.f32.mrb[0].mxu0
    %1423 = vdwg.mxu0
    %v1425 = vsel %vm123, %v1267, 0
    %1427 = vmatprep.subr.mxu0 0.0
    %1428 = vmatpush1.msra.mxu0 %v1268
    %1429 = vmatprep.subr.mxu0 0.0
    %1430 = vmatpush1.msra.mxu0 %v1269
    %1431 = vmatprep.subr.mxu0 0.0
    %1432 = vmatpush1.msra.mxu0 %v1270
    %1433 = vmatprep.subr.mxu0 0.0
    %1434 = vmatpush1.msra.mxu0 %v1271
    %1435 = vmatprep.subr.mxu0 0.0
    %1436 = vmatpush1.msra.mxu0 0.0
    %1437 = vmatprep.subr.mxu0 0.0
    %1438 = vmatpush1.msra.mxu0 0.0
    %1439 = vmatprep.subr.mxu0 0.0
    %1440 = vmatpush1.msra.mxu0 0.0
    %1441 = vmatprep.subr.mxu0 0.0
    %1442 = vmatpush1.msra.mxu0 0.0
    %1443 = vmatprep.subr.mxu0 0.0
    %1444 = vmatpush1.msra.mxu0 0.0
    %1445 = vmatprep.subr.mxu0 0.0
    %1446 = vmatpush1.msra.mxu0 0.0
    %1447 = vmatprep.subr.mxu0 0.0
    %1448 = vmatpush1.msra.mxu0 0.0
    %1449 = vmatprep.subr.mxu0 0.0
    %1450 = vmatpush1.msra.mxu0 0.0
    %1451 = vmatprep.subr.mxu0 0.0
    %1452 = vmatpush1.msra.mxu0 0.0
    %1453 = vmatprep.subr.mxu0 0.0
    %1454 = vmatpush1.msra.mxu0 0.0
    %1455 = vmatprep.subr.mxu0 0.0
    %1456 = vmatpush1.msra.mxu0 0.0
    %1457 = vmatprep.subr.mxu0 0.0
    %1458 = vmatpush1.msra.mxu0 0.0
    %1459 = vmatprep.subr.mxu0 0.0
    %1460 = vmatpush1.msra.mxu0 0.0
    %1461 = vmatprep.subr.mxu0 0.0
    %1462 = vmatpush1.msra.mxu0 0.0
    %1463 = vmatprep.subr.mxu0 0.0
    %1464 = vmatpush1.msra.mxu0 0.0
    %1465 = vmatprep.subr.mxu0 0.0
    %1466 = vmatpush1.msra.mxu0 0.0
    %1467 = vmatprep.subr.mxu0 0.0
    %1468 = vmatpush1.msra.mxu0 0.0
    %1469 = vmatprep.subr.mxu0 0.0
    %1470 = vmatpush1.msra.mxu0 0.0
    %1471 = vmatprep.subr.mxu0 0.0
    %1472 = vmatpush1.msra.mxu0 0.0
    %1473 = vmatprep.subr.mxu0 0.0
    %1474 = vmatpush1.msra.mxu0 0.0
    %1475 = vmatprep.subr.mxu0 0.0
    %1476 = vmatpush1.msra.mxu0 0.0
    %1477 = vmatprep.subr.mxu0 0.0
    %1478 = vmatpush1.msra.mxu0 0.0
    %1479 = vmatprep.subr.mxu0 0.0
    %1480 = vmatpush1.msra.mxu0 0.0
    %1481 = vmatprep.subr.mxu0 0.0
    %1482 = vmatpush1.msra.mxu0 0.0
    %1483 = vmatprep.subr.mxu0 0.0
    %1484 = vmatpush1.msra.mxu0 0.0
    %1485 = vmatprep.subr.mxu0 0.0
    %1486 = vmatpush1.msra.mxu0 0.0
    %1487 = vmatprep.subr.mxu0 0.0
    %1488 = vmatpush1.msra.mxu0 0.0
    %1489 = vmatprep.subr.mxu0 0.0
    %1490 = vmatpush1.msra.mxu0 0.0
    %1491 = vmatprep.mubr.f32.mxu0 0.0
    %1492 = vmatmul.mubr.f32.gmra.mrb[0].mxu0 %v1425
    %v1493 = vpop.f32.mrb[0].mxu0
    %v1494 = vadd.f32 %v1421, %v1493
    %v1495 = vpop.f32.mrb[0].mxu0
    %1496 = vdwg.mxu0
    %v1497 = vlaneseq
    %v1498 = vshrl.u32 %v1497, 7
    %v1499 = vsub.s32 0, %v1498
    %v1500 = vrot.slane %v1280, %v1499
    %v1501 = vadd.f32 %v1494, %v1500
    %1502 = vmatprep.subr.mxu0 0.0
    %1503 = vmatpush1.msra.mxu0 %v1276
    %1504 = vmatprep.subr.mxu0 0.0
    %1505 = vmatpush1.msra.mxu0 %v1277
    %1506 = vmatprep.subr.mxu0 0.0
    %1507 = vmatpush1.msra.mxu0 %v1278
    %1508 = vmatprep.subr.mxu0 0.0
    %1509 = vmatpush1.msra.mxu0 %v1279
    %1510 = vmatprep.subr.mxu0 0.0
    %1511 = vmatpush1.msra.mxu0 0.0
    %1512 = vmatprep.subr.mxu0 0.0
    %1513 = vmatpush1.msra.mxu0 0.0
    %1514 = vmatprep.subr.mxu0 0.0
    %1515 = vmatpush1.msra.mxu0 0.0
    %1516 = vmatprep.subr.mxu0 0.0
    %1517 = vmatpush1.msra.mxu0 0.0
    %1518 = vmatprep.subr.mxu0 0.0
    %1519 = vmatpush1.msra.mxu0 0.0
    %1520 = vmatprep.subr.mxu0 0.0
    %1521 = vmatpush1.msra.mxu0 0.0
    %1522 = vmatprep.subr.mxu0 0.0
    %1523 = vmatpush1.msra.mxu0 0.0
    %1524 = vmatprep.subr.mxu0 0.0
    %1525 = vmatpush1.msra.mxu0 0.0
    %1526 = vmatprep.subr.mxu0 0.0
    %1527 = vmatpush1.msra.mxu0 0.0
    %1528 = vmatprep.subr.mxu0 0.0
    %1529 = vmatpush1.msra.mxu0 0.0
    %1530 = vmatprep.subr.mxu0 0.0
    %1531 = vmatpush1.msra.mxu0 0.0
    %1532 = vmatprep.subr.mxu0 0.0
    %1533 = vmatpush1.msra.mxu0 0.0
    %1534 = vmatprep.subr.mxu0 0.0
    %1535 = vmatpush1.msra.mxu0 0.0
    %1536 = vmatprep.subr.mxu0 0.0
    %1537 = vmatpush1.msra.mxu0 0.0
    %1538 = vmatprep.subr.mxu0 0.0
    %1539 = vmatpush1.msra.mxu0 0.0
    %1540 = vmatprep.subr.mxu0 0.0
    %1541 = vmatpush1.msra.mxu0 0.0
    %1542 = vmatprep.subr.mxu0 0.0
    %1543 = vmatpush1.msra.mxu0 0.0
    %1544 = vmatprep.subr.mxu0 0.0
    %1545 = vmatpush1.msra.mxu0 0.0
    %1546 = vmatprep.subr.mxu0 0.0
    %1547 = vmatpush1.msra.mxu0 0.0
    %1548 = vmatprep.subr.mxu0 0.0
    %1549 = vmatpush1.msra.mxu0 0.0
    %1550 = vmatprep.subr.mxu0 0.0
    %1551 = vmatpush1.msra.mxu0 0.0
    %1552 = vmatprep.subr.mxu0 0.0
    %1553 = vmatpush1.msra.mxu0 0.0
    %1554 = vmatprep.subr.mxu0 0.0
    %1555 = vmatpush1.msra.mxu0 0.0
    %1556 = vmatprep.subr.mxu0 0.0
    %1557 = vmatpush1.msra.mxu0 0.0
    %1558 = vmatprep.subr.mxu0 0.0
    %1559 = vmatpush1.msra.mxu0 0.0
    %1560 = vmatprep.subr.mxu0 0.0
    %1561 = vmatpush1.msra.mxu0 0.0
    %1562 = vmatprep.subr.mxu0 0.0
    %1563 = vmatpush1.msra.mxu0 0.0
    %1564 = vmatprep.subr.mxu0 0.0
    %1565 = vmatpush1.msra.mxu0 0.0
    %1566 = vmatprep.mubr.f32.mxu0 0.0
    %1567 = vmatmul.mubr.f32.gmra.mrb[0].mxu0 %v276
    %v1568 = vpop.f32.mrb[0].mxu0
    %v1569 = vadd.f32 0.0, %v1568
    %v1570 = vpop.f32.mrb[0].mxu0
    %1571 = vdwg.mxu0
    %v1572 = vadd.f32 %v1501, %v1569
    %v1573 = vxor.u32 %v1572, 2147483648
    %v1574 = vmul.f32 %v1573, 1.442695
    %v1575 = vpow.pop %v1574
    %v1576 = vadd.f32 %v1575, 1.0
    %v1577 = vrcp.pop %v1576
    %v1578 = vmul.f32 1.0, %v1577
    %v1579 = vmul.f32 %v1578, 2.0
    %v1580 = vsub.f32 %v1579, 1.0
    %v1581 = vmul.f32 %v1578, 0.0
    %1583 = vrot.lane.b32.xlu0 %v1580, 64
    %v1584 = vpop.permute.xlu0 %1583
    %v1586 = vmul.f32 %v1578, %v1584
    %1588 = vrot.lane.b32.xlu0 %v1586, 32
    %v1589 = vpop.permute.xlu0 %1588
    %v1591 = vadd.f32 %v1581, %v1589
    %v1592 = vtanh.pop %v1591
    %1594 = vrot.lane.b32.xlu0 %v1592, 64
    %v1595 = vpop.permute.xlu0 %1594
    %v1597 = vmul.f32 %v1578, %v1595
    %v1598 = vlaneseq
    %v1599 = vshrl.u32 %v1598, 7
    %v1600 = vsub.s32 0, %v1599
    %v1601 = vrot.slane %v1597, %v1600
    %v1602 = vsel %vm376, %v1601, 0.0
    %1604 = vrot.lane.b32.xlu0 %v1597, 32
    %v1605 = vpop.permute.xlu0 %1604
    %v1606 = vsel %vm123, %v1605, 0
    %1608 = vmatprep.subr.mxu0 0.0
    %1609 = vmatpush1.msra.mxu0 %v1276
    %1610 = vmatprep.subr.mxu0 0.0
    %1611 = vmatpush1.msra.mxu0 %v1277
    %1612 = vmatprep.subr.mxu0 0.0
    %1613 = vmatpush1.msra.mxu0 %v1278
    %1614 = vmatprep.subr.mxu0 0.0
    %1615 = vmatpush1.msra.mxu0 %v1279
    %1616 = vmatprep.subr.mxu0 0.0
    %1617 = vmatpush1.msra.mxu0 0.0
    %1618 = vmatprep.subr.mxu0 0.0
    %1619 = vmatpush1.msra.mxu0 0.0
    %1620 = vmatprep.subr.mxu0 0.0
    %1621 = vmatpush1.msra.mxu0 0.0
    %1622 = vmatprep.subr.mxu0 0.0
    %1623 = vmatpush1.msra.mxu0 0.0
    %1624 = vmatprep.subr.mxu0 0.0
    %1625 = vmatpush1.msra.mxu0 0.0
    %1626 = vmatprep.subr.mxu0 0.0
    %1627 = vmatpush1.msra.mxu0 0.0
    %1628 = vmatprep.subr.mxu0 0.0
    %1629 = vmatpush1.msra.mxu0 0.0
    %1630 = vmatprep.subr.mxu0 0.0
    %1631 = vmatpush1.msra.mxu0 0.0
    %1632 = vmatprep.subr.mxu0 0.0
    %1633 = vmatpush1.msra.mxu0 0.0
    %1634 = vmatprep.subr.mxu0 0.0
    %1635 = vmatpush1.msra.mxu0 0.0
    %1636 = vmatprep.subr.mxu0 0.0
    %1637 = vmatpush1.msra.mxu0 0.0
    %1638 = vmatprep.subr.mxu0 0.0
    %1639 = vmatpush1.msra.mxu0 0.0
    %1640 = vmatprep.subr.mxu0 0.0
    %1641 = vmatpush1.msra.mxu0 0.0
    %1642 = vmatprep.subr.mxu0 0.0
    %1643 = vmatpush1.msra.mxu0 0.0
    %1644 = vmatprep.subr.mxu0 0.0
    %1645 = vmatpush1.msra.mxu0 0.0
    %1646 = vmatprep.subr.mxu0 0.0
    %1647 = vmatpush1.msra.mxu0 0.0
    %1648 = vmatprep.subr.mxu0 0.0
    %1649 = vmatpush1.msra.mxu0 0.0
    %1650 = vmatprep.subr.mxu0 0.0
    %1651 = vmatpush1.msra.mxu0 0.0
    %1652 = vmatprep.subr.mxu0 0.0
    %1653 = vmatpush1.msra.mxu0 0.0
    %1654 = vmatprep.subr.mxu0 0.0
    %1655 = vmatpush1.msra.mxu0 0.0
    %1656 = vmatprep.subr.mxu0 0.0
    %1657 = vmatpush1.msra.mxu0 0.0
    %1658 = vmatprep.subr.mxu0 0.0
    %1659 = vmatpush1.msra.mxu0 0.0
    %1660 = vmatprep.subr.mxu0 0.0
    %1661 = vmatpush1.msra.mxu0 0.0
    %1662 = vmatprep.subr.mxu0 0.0
    %1663 = vmatpush1.msra.mxu0 0.0
    %1664 = vmatprep.subr.mxu0 0.0
    %1665 = vmatpush1.msra.mxu0 0.0
    %1666 = vmatprep.subr.mxu0 0.0
    %1667 = vmatpush1.msra.mxu0 0.0
    %1668 = vmatprep.subr.mxu0 0.0
    %1669 = vmatpush1.msra.mxu0 0.0
    %1670 = vmatprep.subr.mxu0 0.0
    %1671 = vmatpush1.msra.mxu0 0.0
    %1672 = vmatprep.mubr.f32.mxu0 0.0
    %1673 = vmatmul.mubr.f32.gmra.mrb[0].mxu0 %v1606
    %v1674 = vpop.f32.mrb[0].mxu0
    %v1675 = vadd.f32 0.0, %v1674
    %v1676 = vpop.f32.mrb[0].mxu0
    %1677 = vdwg.mxu0
    %v1679 = vrot.slane %v1675, 7
    %v1681 = vadd.f32 %v1501, %v1679
    %v1682 = vxor.u32 %v1681, 2147483648
    %v1683 = vmul.f32 %v1682, 1.442695
    %v1684 = vpow.pop %v1683
    %v1685 = vadd.f32 %v1684, 1.0
    %v1686 = vrcp.pop %v1685
    %v1687 = vmul.f32 1.0, %v1686
    %v1688 = vmul.f32 %v1687, 2.0
    %v1689 = vsub.f32 %v1688, 1.0
    %v1691 = vrot.slane %v1591, 7
    %v1693 = vmul.f32 %v1687, %v1691
    %1695 = vrot.lane.b32.xlu0 %v1689, 64
    %v1696 = vpop.permute.xlu0 %1695
    %v1698 = vmul.f32 %v1687, %v1696
    %1700 = vrot.lane.b32.xlu0 %v1698, 32
    %v1701 = vpop.permute.xlu0 %1700
    %v1703 = vadd.f32 %v1693, %v1701
    %v1704 = vtanh.pop %v1703
    %1706 = vrot.lane.b32.xlu0 %v1704, 64
    %v1707 = vpop.permute.xlu0 %1706
    %v1709 = vmul.f32 %v1687, %v1707
    %v1710 = vlaneseq
    %v1711 = vshrl.u32 %v1710, 7
    %v1712 = vsub.s32 1, %v1711
    %v1713 = vrot.slane %v1709, %v1712
    %v1714 = vsel %vm491, %v1713, %v1602
    %v1716 = vrot.slane %v1709, 1
    %1717 = vrot.lane.b32.xlu0 %v1716, 32
    %v1718 = vpop.permute.xlu0 %1717
    %v1719 = vsel %vm123, %v1718, 0
    %1721 = vmatprep.subr.mxu0 0.0
    %1722 = vmatpush1.msra.mxu0 %v1276
    %1723 = vmatprep.subr.mxu0 0.0
    %1724 = vmatpush1.msra.mxu0 %v1277
    %1725 = vmatprep.subr.mxu0 0.0
    %1726 = vmatpush1.msra.mxu0 %v1278
    %1727 = vmatprep.subr.mxu0 0.0
    %1728 = vmatpush1.msra.mxu0 %v1279
    %1729 = vmatprep.subr.mxu0 0.0
    %1730 = vmatpush1.msra.mxu0 0.0
    %1731 = vmatprep.subr.mxu0 0.0
    %1732 = vmatpush1.msra.mxu0 0.0
    %1733 = vmatprep.subr.mxu0 0.0
    %1734 = vmatpush1.msra.mxu0 0.0
    %1735 = vmatprep.subr.mxu0 0.0
    %1736 = vmatpush1.msra.mxu0 0.0
    %1737 = vmatprep.subr.mxu0 0.0
    %1738 = vmatpush1.msra.mxu0 0.0
    %1739 = vmatprep.subr.mxu0 0.0
    %1740 = vmatpush1.msra.mxu0 0.0
    %1741 = vmatprep.subr.mxu0 0.0
    %1742 = vmatpush1.msra.mxu0 0.0
    %1743 = vmatprep.subr.mxu0 0.0
    %1744 = vmatpush1.msra.mxu0 0.0
    %1745 = vmatprep.subr.mxu0 0.0
    %1746 = vmatpush1.msra.mxu0 0.0
    %1747 = vmatprep.subr.mxu0 0.0
    %1748 = vmatpush1.msra.mxu0 0.0
    %1749 = vmatprep.subr.mxu0 0.0
    %1750 = vmatpush1.msra.mxu0 0.0
    %1751 = vmatprep.subr.mxu0 0.0
    %1752 = vmatpush1.msra.mxu0 0.0
    %1753 = vmatprep.subr.mxu0 0.0
    %1754 = vmatpush1.msra.mxu0 0.0
    %1755 = vmatprep.subr.mxu0 0.0
    %1756 = vmatpush1.msra.mxu0 0.0
    %1757 = vmatprep.subr.mxu0 0.0
    %1758 = vmatpush1.msra.mxu0 0.0
    %1759 = vmatprep.subr.mxu0 0.0
    %1760 = vmatpush1.msra.mxu0 0.0
    %1761 = vmatprep.subr.mxu0 0.0
    %1762 = vmatpush1.msra.mxu0 0.0
    %1763 = vmatprep.subr.mxu0 0.0
    %1764 = vmatpush1.msra.mxu0 0.0
    %1765 = vmatprep.subr.mxu0 0.0
    %1766 = vmatpush1.msra.mxu0 0.0
    %1767 = vmatprep.subr.mxu0 0.0
    %1768 = vmatpush1.msra.mxu0 0.0
    %1769 = vmatprep.subr.mxu0 0.0
    %1770 = vmatpush1.msra.mxu0 0.0
    %1771 = vmatprep.subr.mxu0 0.0
    %1772 = vmatpush1.msra.mxu0 0.0
    %1773 = vmatprep.subr.mxu0 0.0
    %1774 = vmatpush1.msra.mxu0 0.0
    %1775 = vmatprep.subr.mxu0 0.0
    %1776 = vmatpush1.msra.mxu0 0.0
    %1777 = vmatprep.subr.mxu0 0.0
    %1778 = vmatpush1.msra.mxu0 0.0
    %1779 = vmatprep.subr.mxu0 0.0
    %1780 = vmatpush1.msra.mxu0 0.0
    %1781 = vmatprep.subr.mxu0 0.0
    %1782 = vmatpush1.msra.mxu0 0.0
    %1783 = vmatprep.subr.mxu0 0.0
    %1784 = vmatpush1.msra.mxu0 0.0
    %1785 = vmatprep.mubr.f32.mxu0 0.0
    %1786 = vmatmul.mubr.f32.gmra.mrb[0].mxu0 %v1719
    %v1787 = vpop.f32.mrb[0].mxu0
    %v1788 = vadd.f32 0.0, %v1787
    %v1789 = vpop.f32.mrb[0].mxu0
    %1790 = vdwg.mxu0
    %v1792 = vrot.slane %v1788, 6
    %v1794 = vadd.f32 %v1501, %v1792
    %v1795 = vxor.u32 %v1794, 2147483648
    %v1796 = vmul.f32 %v1795, 1.442695
    %v1797 = vpow.pop %v1796
    %v1798 = vadd.f32 %v1797, 1.0
    %v1799 = vrcp.pop %v1798
    %v1800 = vmul.f32 1.0, %v1799
    %v1801 = vmul.f32 %v1800, 2.0
    %v1802 = vsub.f32 %v1801, 1.0
    %v1804 = vrot.slane %v1703, 7
    %v1806 = vmul.f32 %v1800, %v1804
    %1808 = vrot.lane.b32.xlu0 %v1802, 64
    %v1809 = vpop.permute.xlu0 %1808
    %v1811 = vmul.f32 %v1800, %v1809
    %1813 = vrot.lane.b32.xlu0 %v1811, 32
    %v1814 = vpop.permute.xlu0 %1813
    %v1816 = vadd.f32 %v1806, %v1814
    %v1817 = vtanh.pop %v1816
    %1819 = vrot.lane.b32.xlu0 %v1817, 64
    %v1820 = vpop.permute.xlu0 %1819
    %v1822 = vmul.f32 %v1800, %v1820
    %v1823 = vlaneseq
    %v1824 = vshrl.u32 %v1823, 7
    %v1825 = vsub.s32 2, %v1824
    %v1826 = vrot.slane %v1822, %v1825
    %v1827 = vsel %vm607, %v1826, %v1714
    %v1829 = vrot.slane %v1822, 2
    %1830 = vrot.lane.b32.xlu0 %v1829, 32
    %v1831 = vpop.permute.xlu0 %1830
    %v1832 = vsel %vm123, %v1831, 0
    %1834 = vmatprep.subr.mxu0 0.0
    %1835 = vmatpush1.msra.mxu0 %v1276
    %1836 = vmatprep.subr.mxu0 0.0
    %1837 = vmatpush1.msra.mxu0 %v1277
    %1838 = vmatprep.subr.mxu0 0.0
    %1839 = vmatpush1.msra.mxu0 %v1278
    %1840 = vmatprep.subr.mxu0 0.0
    %1841 = vmatpush1.msra.mxu0 %v1279
    %1842 = vmatprep.subr.mxu0 0.0
    %1843 = vmatpush1.msra.mxu0 0.0
    %1844 = vmatprep.subr.mxu0 0.0
    %1845 = vmatpush1.msra.mxu0 0.0
    %1846 = vmatprep.subr.mxu0 0.0
    %1847 = vmatpush1.msra.mxu0 0.0
    %1848 = vmatprep.subr.mxu0 0.0
    %1849 = vmatpush1.msra.mxu0 0.0
    %1850 = vmatprep.subr.mxu0 0.0
    %1851 = vmatpush1.msra.mxu0 0.0
    %1852 = vmatprep.subr.mxu0 0.0
    %1853 = vmatpush1.msra.mxu0 0.0
    %1854 = vmatprep.subr.mxu0 0.0
    %1855 = vmatpush1.msra.mxu0 0.0
    %1856 = vmatprep.subr.mxu0 0.0
    %1857 = vmatpush1.msra.mxu0 0.0
    %1858 = vmatprep.subr.mxu0 0.0
    %1859 = vmatpush1.msra.mxu0 0.0
    %1860 = vmatprep.subr.mxu0 0.0
    %1861 = vmatpush1.msra.mxu0 0.0
    %1862 = vmatprep.subr.mxu0 0.0
    %1863 = vmatpush1.msra.mxu0 0.0
    %1864 = vmatprep.subr.mxu0 0.0
    %1865 = vmatpush1.msra.mxu0 0.0
    %1866 = vmatprep.subr.mxu0 0.0
    %1867 = vmatpush1.msra.mxu0 0.0
    %1868 = vmatprep.subr.mxu0 0.0
    %1869 = vmatpush1.msra.mxu0 0.0
    %1870 = vmatprep.subr.mxu0 0.0
    %1871 = vmatpush1.msra.mxu0 0.0
    %1872 = vmatprep.subr.mxu0 0.0
    %1873 = vmatpush1.msra.mxu0 0.0
    %1874 = vmatprep.subr.mxu0 0.0
    %1875 = vmatpush1.msra.mxu0 0.0
    %1876 = vmatprep.subr.mxu0 0.0
    %1877 = vmatpush1.msra.mxu0 0.0
    %1878 = vmatprep.subr.mxu0 0.0
    %1879 = vmatpush1.msra.mxu0 0.0
    %1880 = vmatprep.subr.mxu0 0.0
    %1881 = vmatpush1.msra.mxu0 0.0
    %1882 = vmatprep.subr.mxu0 0.0
    %1883 = vmatpush1.msra.mxu0 0.0
    %1884 = vmatprep.subr.mxu0 0.0
    %1885 = vmatpush1.msra.mxu0 0.0
    %1886 = vmatprep.subr.mxu0 0.0
    %1887 = vmatpush1.msra.mxu0 0.0
    %1888 = vmatprep.subr.mxu0 0.0
    %1889 = vmatpush1.msra.mxu0 0.0
    %1890 = vmatprep.subr.mxu0 0.0
    %1891 = vmatpush1.msra.mxu0 0.0
    %1892 = vmatprep.subr.mxu0 0.0
    %1893 = vmatpush1.msra.mxu0 0.0
    %1894 = vmatprep.subr.mxu0 0.0
    %1895 = vmatpush1.msra.mxu0 0.0
    %1896 = vmatprep.subr.mxu0 0.0
    %1897 = vmatpush1.msra.mxu0 0.0
    %1898 = vmatprep.mubr.f32.mxu0 0.0
    %1899 = vmatmul.mubr.f32.gmra.mrb[0].mxu0 %v1832
    %v1900 = vpop.f32.mrb[0].mxu0
    %v1901 = vadd.f32 0.0, %v1900
    %v1902 = vpop.f32.mrb[0].mxu0
    %1903 = vdwg.mxu0
    %v1905 = vrot.slane %v1901, 5
    %v1907 = vadd.f32 %v1501, %v1905
    %v1908 = vxor.u32 %v1907, 2147483648
    %v1909 = vmul.f32 %v1908, 1.442695
    %v1910 = vpow.pop %v1909
    %v1911 = vadd.f32 %v1910, 1.0
    %v1912 = vrcp.pop %v1911
    %v1913 = vmul.f32 1.0, %v1912
    %v1914 = vmul.f32 %v1913, 2.0
    %v1915 = vsub.f32 %v1914, 1.0
    %v1917 = vrot.slane %v1816, 7
    %v1919 = vmul.f32 %v1913, %v1917
    %1921 = vrot.lane.b32.xlu0 %v1915, 64
    %v1922 = vpop.permute.xlu0 %1921
    %v1924 = vmul.f32 %v1913, %v1922
    %1926 = vrot.lane.b32.xlu0 %v1924, 32
    %v1927 = vpop.permute.xlu0 %1926
    %v1929 = vadd.f32 %v1919, %v1927
    %v1930 = vtanh.pop %v1929
    %1932 = vrot.lane.b32.xlu0 %v1930, 64
    %v1933 = vpop.permute.xlu0 %1932
    %v1935 = vmul.f32 %v1913, %v1933
    %v1936 = vlaneseq
    %v1937 = vshrl.u32 %v1936, 7
    %v1938 = vsub.s32 3, %v1937
    %v1939 = vrot.slane %v1935, %v1938
    %v1940 = vsel %vm723, %v1939, %v1827
    %v1942 = vrot.slane %v1935, 3
    %1943 = vrot.lane.b32.xlu0 %v1942, 32
    %v1944 = vpop.permute.xlu0 %1943
    %v1945 = vsel %vm123, %v1944, 0
    %1947 = vmatprep.subr.mxu0 0.0
    %1948 = vmatpush1.msra.mxu0 %v1276
    %1949 = vmatprep.subr.mxu0 0.0
    %1950 = vmatpush1.msra.mxu0 %v1277
    %1951 = vmatprep.subr.mxu0 0.0
    %1952 = vmatpush1.msra.mxu0 %v1278
    %1953 = vmatprep.subr.mxu0 0.0
    %1954 = vmatpush1.msra.mxu0 %v1279
    %1955 = vmatprep.subr.mxu0 0.0
    %1956 = vmatpush1.msra.mxu0 0.0
    %1957 = vmatprep.subr.mxu0 0.0
    %1958 = vmatpush1.msra.mxu0 0.0
    %1959 = vmatprep.subr.mxu0 0.0
    %1960 = vmatpush1.msra.mxu0 0.0
    %1961 = vmatprep.subr.mxu0 0.0
    %1962 = vmatpush1.msra.mxu0 0.0
    %1963 = vmatprep.subr.mxu0 0.0
    %1964 = vmatpush1.msra.mxu0 0.0
    %1965 = vmatprep.subr.mxu0 0.0
    %1966 = vmatpush1.msra.mxu0 0.0
    %1967 = vmatprep.subr.mxu0 0.0
    %1968 = vmatpush1.msra.mxu0 0.0
    %1969 = vmatprep.subr.mxu0 0.0
    %1970 = vmatpush1.msra.mxu0 0.0
    %1971 = vmatprep.subr.mxu0 0.0
    %1972 = vmatpush1.msra.mxu0 0.0
    %1973 = vmatprep.subr.mxu0 0.0
    %1974 = vmatpush1.msra.mxu0 0.0
    %1975 = vmatprep.subr.mxu0 0.0
    %1976 = vmatpush1.msra.mxu0 0.0
    %1977 = vmatprep.subr.mxu0 0.0
    %1978 = vmatpush1.msra.mxu0 0.0
    %1979 = vmatprep.subr.mxu0 0.0
    %1980 = vmatpush1.msra.mxu0 0.0
    %1981 = vmatprep.subr.mxu0 0.0
    %1982 = vmatpush1.msra.mxu0 0.0
    %1983 = vmatprep.subr.mxu0 0.0
    %1984 = vmatpush1.msra.mxu0 0.0
    %1985 = vmatprep.subr.mxu0 0.0
    %1986 = vmatpush1.msra.mxu0 0.0
    %1987 = vmatprep.subr.mxu0 0.0
    %1988 = vmatpush1.msra.mxu0 0.0
    %1989 = vmatprep.subr.mxu0 0.0
    %1990 = vmatpush1.msra.mxu0 0.0
    %1991 = vmatprep.subr.mxu0 0.0
    %1992 = vmatpush1.msra.mxu0 0.0
    %1993 = vmatprep.subr.mxu0 0.0
    %1994 = vmatpush1.msra.mxu0 0.0
    %1995 = vmatprep.subr.mxu0 0.0
    %1996 = vmatpush1.msra.mxu0 0.0
    %1997 = vmatprep.subr.mxu0 0.0
    %1998 = vmatpush1.msra.mxu0 0.0
    %1999 = vmatprep.subr.mxu0 0.0
    %2000 = vmatpush1.msra.mxu0 0.0
    %2001 = vmatprep.subr.mxu0 0.0
    %2002 = vmatpush1.msra.mxu0 0.0
    %2003 = vmatprep.subr.mxu0 0.0
    %2004 = vmatpush1.msra.mxu0 0.0
    %2005 = vmatprep.subr.mxu0 0.0
    %2006 = vmatpush1.msra.mxu0 0.0
    %2007 = vmatprep.subr.mxu0 0.0
    %2008 = vmatpush1.msra.mxu0 0.0
    %2009 = vmatprep.subr.mxu0 0.0
    %2010 = vmatpush1.msra.mxu0 0.0
    %2011 = vmatprep.mubr.f32.mxu0 0.0
    %2012 = vmatmul.mubr.f32.gmra.mrb[0].mxu0 %v1945
    %v2013 = vpop.f32.mrb[0].mxu0
    %v2014 = vadd.f32 0.0, %v2013
    %v2015 = vpop.f32.mrb[0].mxu0
    %2016 = vdwg.mxu0
    %v2018 = vrot.slane %v2014, 4
    %v2020 = vadd.f32 %v1501, %v2018
    %v2021 = vxor.u32 %v2020, 2147483648
    %v2022 = vmul.f32 %v2021, 1.442695
    %v2023 = vpow.pop %v2022
    %v2024 = vadd.f32 %v2023, 1.0
    %v2025 = vrcp.pop %v2024
    %v2026 = vmul.f32 1.0, %v2025
    %v2027 = vmul.f32 %v2026, 2.0
    %v2028 = vsub.f32 %v2027, 1.0
    %v2030 = vrot.slane %v1929, 7
    %v2032 = vmul.f32 %v2026, %v2030
    %2034 = vrot.lane.b32.xlu0 %v2028, 64
    %v2035 = vpop.permute.xlu0 %2034
    %v2037 = vmul.f32 %v2026, %v2035
    %2039 = vrot.lane.b32.xlu0 %v2037, 32
    %v2040 = vpop.permute.xlu0 %2039
    %v2042 = vadd.f32 %v2032, %v2040
    %v2043 = vtanh.pop %v2042
    %2045 = vrot.lane.b32.xlu0 %v2043, 64
    %v2046 = vpop.permute.xlu0 %2045
    %v2048 = vmul.f32 %v2026, %v2046
    %v2049 = vlaneseq
    %v2050 = vshrl.u32 %v2049, 7
    %v2051 = vsub.s32 4, %v2050
    %v2052 = vrot.slane %v2048, %v2051
    %v2053 = vsel %vm839, %v2052, %v1940
    %v2055 = vrot.slane %v2048, 4
    %2056 = vrot.lane.b32.xlu0 %v2055, 32
    %v2057 = vpop.permute.xlu0 %2056
    %v2058 = vsel %vm123, %v2057, 0
    %2060 = vmatprep.subr.mxu0 0.0
    %2061 = vmatpush1.msra.mxu0 %v1276
    %2062 = vmatprep.subr.mxu0 0.0
    %2063 = vmatpush1.msra.mxu0 %v1277
    %2064 = vmatprep.subr.mxu0 0.0
    %2065 = vmatpush1.msra.mxu0 %v1278
    %2066 = vmatprep.subr.mxu0 0.0
    %2067 = vmatpush1.msra.mxu0 %v1279
    %2068 = vmatprep.subr.mxu0 0.0
    %2069 = vmatpush1.msra.mxu0 0.0
    %2070 = vmatprep.subr.mxu0 0.0
    %2071 = vmatpush1.msra.mxu0 0.0
    %2072 = vmatprep.subr.mxu0 0.0
    %2073 = vmatpush1.msra.mxu0 0.0
    %2074 = vmatprep.subr.mxu0 0.0
    %2075 = vmatpush1.msra.mxu0 0.0
    %2076 = vmatprep.subr.mxu0 0.0
    %2077 = vmatpush1.msra.mxu0 0.0
    %2078 = vmatprep.subr.mxu0 0.0
    %2079 = vmatpush1.msra.mxu0 0.0
    %2080 = vmatprep.subr.mxu0 0.0
    %2081 = vmatpush1.msra.mxu0 0.0
    %2082 = vmatprep.subr.mxu0 0.0
    %2083 = vmatpush1.msra.mxu0 0.0
    %2084 = vmatprep.subr.mxu0 0.0
    %2085 = vmatpush1.msra.mxu0 0.0
    %2086 = vmatprep.subr.mxu0 0.0
    %2087 = vmatpush1.msra.mxu0 0.0
    %2088 = vmatprep.subr.mxu0 0.0
    %2089 = vmatpush1.msra.mxu0 0.0
    %2090 = vmatprep.subr.mxu0 0.0
    %2091 = vmatpush1.msra.mxu0 0.0
    %2092 = vmatprep.subr.mxu0 0.0
    %2093 = vmatpush1.msra.mxu0 0.0
    %2094 = vmatprep.subr.mxu0 0.0
    %2095 = vmatpush1.msra.mxu0 0.0
    %2096 = vmatprep.subr.mxu0 0.0
    %2097 = vmatpush1.msra.mxu0 0.0
    %2098 = vmatprep.subr.mxu0 0.0
    %2099 = vmatpush1.msra.mxu0 0.0
    %2100 = vmatprep.subr.mxu0 0.0
    %2101 = vmatpush1.msra.mxu0 0.0
    %2102 = vmatprep.subr.mxu0 0.0
    %2103 = vmatpush1.msra.mxu0 0.0
    %2104 = vmatprep.subr.mxu0 0.0
    %2105 = vmatpush1.msra.mxu0 0.0
    %2106 = vmatprep.subr.mxu0 0.0
    %2107 = vmatpush1.msra.mxu0 0.0
    %2108 = vmatprep.subr.mxu0 0.0
    %2109 = vmatpush1.msra.mxu0 0.0
    %2110 = vmatprep.subr.mxu0 0.0
    %2111 = vmatpush1.msra.mxu0 0.0
    %2112 = vmatprep.subr.mxu0 0.0
    %2113 = vmatpush1.msra.mxu0 0.0
    %2114 = vmatprep.subr.mxu0 0.0
    %2115 = vmatpush1.msra.mxu0 0.0
    %2116 = vmatprep.subr.mxu0 0.0
    %2117 = vmatpush1.msra.mxu0 0.0
    %2118 = vmatprep.subr.mxu0 0.0
    %2119 = vmatpush1.msra.mxu0 0.0
    %2120 = vmatprep.subr.mxu0 0.0
    %2121 = vmatpush1.msra.mxu0 0.0
    %2122 = vmatprep.subr.mxu0 0.0
    %2123 = vmatpush1.msra.mxu0 0.0
    %2124 = vmatprep.mubr.f32.mxu0 0.0
    %2125 = vmatmul.mubr.f32.gmra.mrb[0].mxu0 %v2058
    %v2126 = vpop.f32.mrb[0].mxu0
    %v2127 = vadd.f32 0.0, %v2126
    %v2128 = vpop.f32.mrb[0].mxu0
    %2129 = vdwg.mxu0
    %v2131 = vrot.slane %v2127, 3
    %v2133 = vadd.f32 %v1501, %v2131
    %v2134 = vxor.u32 %v2133, 2147483648
    %v2135 = vmul.f32 %v2134, 1.442695
    %v2136 = vpow.pop %v2135
    %v2137 = vadd.f32 %v2136, 1.0
    %v2138 = vrcp.pop %v2137
    %v2139 = vmul.f32 1.0, %v2138
    %v2140 = vmul.f32 %v2139, 2.0
    %v2141 = vsub.f32 %v2140, 1.0
    %v2143 = vrot.slane %v2042, 7
    %v2145 = vmul.f32 %v2139, %v2143
    %2147 = vrot.lane.b32.xlu0 %v2141, 64
    %v2148 = vpop.permute.xlu0 %2147
    %v2150 = vmul.f32 %v2139, %v2148
    %2152 = vrot.lane.b32.xlu0 %v2150, 32
    %v2153 = vpop.permute.xlu0 %2152
    %v2155 = vadd.f32 %v2145, %v2153
    %v2156 = vtanh.pop %v2155
    %2158 = vrot.lane.b32.xlu0 %v2156, 64
    %v2159 = vpop.permute.xlu0 %2158
    %v2161 = vmul.f32 %v2139, %v2159
    %v2162 = vlaneseq
    %v2163 = vshrl.u32 %v2162, 7
    %v2164 = vsub.s32 5, %v2163
    %v2165 = vrot.slane %v2161, %v2164
    %v2166 = vsel %vm955, %v2165, %v2053
    %v2168 = vrot.slane %v2161, 5
    %2169 = vrot.lane.b32.xlu0 %v2168, 32
    %v2170 = vpop.permute.xlu0 %2169
    %v2171 = vsel %vm123, %v2170, 0
    %2173 = vmatprep.subr.mxu0 0.0
    %2174 = vmatpush1.msra.mxu0 %v1276
    %2175 = vmatprep.subr.mxu0 0.0
    %2176 = vmatpush1.msra.mxu0 %v1277
    %2177 = vmatprep.subr.mxu0 0.0
    %2178 = vmatpush1.msra.mxu0 %v1278
    %2179 = vmatprep.subr.mxu0 0.0
    %2180 = vmatpush1.msra.mxu0 %v1279
    %2181 = vmatprep.subr.mxu0 0.0
    %2182 = vmatpush1.msra.mxu0 0.0
    %2183 = vmatprep.subr.mxu0 0.0
    %2184 = vmatpush1.msra.mxu0 0.0
    %2185 = vmatprep.subr.mxu0 0.0
    %2186 = vmatpush1.msra.mxu0 0.0
    %2187 = vmatprep.subr.mxu0 0.0
    %2188 = vmatpush1.msra.mxu0 0.0
    %2189 = vmatprep.subr.mxu0 0.0
    %2190 = vmatpush1.msra.mxu0 0.0
    %2191 = vmatprep.subr.mxu0 0.0
    %2192 = vmatpush1.msra.mxu0 0.0
    %2193 = vmatprep.subr.mxu0 0.0
    %2194 = vmatpush1.msra.mxu0 0.0
    %2195 = vmatprep.subr.mxu0 0.0
    %2196 = vmatpush1.msra.mxu0 0.0
    %2197 = vmatprep.subr.mxu0 0.0
    %2198 = vmatpush1.msra.mxu0 0.0
    %2199 = vmatprep.subr.mxu0 0.0
    %2200 = vmatpush1.msra.mxu0 0.0
    %2201 = vmatprep.subr.mxu0 0.0
    %2202 = vmatpush1.msra.mxu0 0.0
    %2203 = vmatprep.subr.mxu0 0.0
    %2204 = vmatpush1.msra.mxu0 0.0
    %2205 = vmatprep.subr.mxu0 0.0
    %2206 = vmatpush1.msra.mxu0 0.0
    %2207 = vmatprep.subr.mxu0 0.0
    %2208 = vmatpush1.msra.mxu0 0.0
    %2209 = vmatprep.subr.mxu0 0.0
    %2210 = vmatpush1.msra.mxu0 0.0
    %2211 = vmatprep.subr.mxu0 0.0
    %2212 = vmatpush1.msra.mxu0 0.0
    %2213 = vmatprep.subr.mxu0 0.0
    %2214 = vmatpush1.msra.mxu0 0.0
    %2215 = vmatprep.subr.mxu0 0.0
    %2216 = vmatpush1.msra.mxu0 0.0
    %2217 = vmatprep.subr.mxu0 0.0
    %2218 = vmatpush1.msra.mxu0 0.0
    %2219 = vmatprep.subr.mxu0 0.0
    %2220 = vmatpush1.msra.mxu0 0.0
    %2221 = vmatprep.subr.mxu0 0.0
    %2222 = vmatpush1.msra.mxu0 0.0
    %2223 = vmatprep.subr.mxu0 0.0
    %2224 = vmatpush1.msra.mxu0 0.0
    %2225 = vmatprep.subr.mxu0 0.0
    %2226 = vmatpush1.msra.mxu0 0.0
    %2227 = vmatprep.subr.mxu0 0.0
    %2228 = vmatpush1.msra.mxu0 0.0
    %2229 = vmatprep.subr.mxu0 0.0
    %2230 = vmatpush1.msra.mxu0 0.0
    %2231 = vmatprep.subr.mxu0 0.0
    %2232 = vmatpush1.msra.mxu0 0.0
    %2233 = vmatprep.subr.mxu0 0.0
    %2234 = vmatpush1.msra.mxu0 0.0
    %2235 = vmatprep.subr.mxu0 0.0
    %2236 = vmatpush1.msra.mxu0 0.0
    %2237 = vmatprep.mubr.f32.mxu0 0.0
    %2238 = vmatmul.mubr.f32.gmra.mrb[0].mxu0 %v2171
    %v2239 = vpop.f32.mrb[0].mxu0
    %v2240 = vadd.f32 0.0, %v2239
    %v2241 = vpop.f32.mrb[0].mxu0
    %2242 = vdwg.mxu0
    %v2244 = vrot.slane %v2240, 2
    %v2246 = vadd.f32 %v1501, %v2244
    %v2247 = vxor.u32 %v2246, 2147483648
    %v2248 = vmul.f32 %v2247, 1.442695
    %v2249 = vpow.pop %v2248
    %v2250 = vadd.f32 %v2249, 1.0
    %v2251 = vrcp.pop %v2250
    %v2252 = vmul.f32 1.0, %v2251
    %v2253 = vmul.f32 %v2252, 2.0
    %v2254 = vsub.f32 %v2253, 1.0
    %v2256 = vrot.slane %v2155, 7
    %v2258 = vmul.f32 %v2252, %v2256
    %2260 = vrot.lane.b32.xlu0 %v2254, 64
    %v2261 = vpop.permute.xlu0 %2260
    %v2263 = vmul.f32 %v2252, %v2261
    %2265 = vrot.lane.b32.xlu0 %v2263, 32
    %v2266 = vpop.permute.xlu0 %2265
    %v2268 = vadd.f32 %v2258, %v2266
    %v2269 = vtanh.pop %v2268
    %2271 = vrot.lane.b32.xlu0 %v2269, 64
    %v2272 = vpop.permute.xlu0 %2271
    %v2274 = vmul.f32 %v2252, %v2272
    %v2275 = vlaneseq
    %v2276 = vshrl.u32 %v2275, 7
    %v2277 = vsub.s32 6, %v2276
    %v2278 = vrot.slane %v2274, %v2277
    %v2279 = vsel %vm1071, %v2278, %v2166
    %v2281 = vrot.slane %v2274, 6
    %2282 = vrot.lane.b32.xlu0 %v2281, 32
    %v2283 = vpop.permute.xlu0 %2282
    %v2284 = vsel %vm123, %v2283, 0
    %2286 = vmatprep.subr.mxu0 0.0
    %2287 = vmatpush1.msra.mxu0 %v1276
    %2288 = vmatprep.subr.mxu0 0.0
    %2289 = vmatpush1.msra.mxu0 %v1277
    %2290 = vmatprep.subr.mxu0 0.0
    %2291 = vmatpush1.msra.mxu0 %v1278
    %2292 = vmatprep.subr.mxu0 0.0
    %2293 = vmatpush1.msra.mxu0 %v1279
    %2294 = vmatprep.subr.mxu0 0.0
    %2295 = vmatpush1.msra.mxu0 0.0
    %2296 = vmatprep.subr.mxu0 0.0
    %2297 = vmatpush1.msra.mxu0 0.0
    %2298 = vmatprep.subr.mxu0 0.0
    %2299 = vmatpush1.msra.mxu0 0.0
    %2300 = vmatprep.subr.mxu0 0.0
    %2301 = vmatpush1.msra.mxu0 0.0
    %2302 = vmatprep.subr.mxu0 0.0
    %2303 = vmatpush1.msra.mxu0 0.0
    %2304 = vmatprep.subr.mxu0 0.0
    %2305 = vmatpush1.msra.mxu0 0.0
    %2306 = vmatprep.subr.mxu0 0.0
    %2307 = vmatpush1.msra.mxu0 0.0
    %2308 = vmatprep.subr.mxu0 0.0
    %2309 = vmatpush1.msra.mxu0 0.0
    %2310 = vmatprep.subr.mxu0 0.0
    %2311 = vmatpush1.msra.mxu0 0.0
    %2312 = vmatprep.subr.mxu0 0.0
    %2313 = vmatpush1.msra.mxu0 0.0
    %2314 = vmatprep.subr.mxu0 0.0
    %2315 = vmatpush1.msra.mxu0 0.0
    %2316 = vmatprep.subr.mxu0 0.0
    %2317 = vmatpush1.msra.mxu0 0.0
    %2318 = vmatprep.subr.mxu0 0.0
    %2319 = vmatpush1.msra.mxu0 0.0
    %2320 = vmatprep.subr.mxu0 0.0
    %2321 = vmatpush1.msra.mxu0 0.0
    %2322 = vmatprep.subr.mxu0 0.0
    %2323 = vmatpush1.msra.mxu0 0.0
    %2324 = vmatprep.subr.mxu0 0.0
    %2325 = vmatpush1.msra.mxu0 0.0
    %2326 = vmatprep.subr.mxu0 0.0
    %2327 = vmatpush1.msra.mxu0 0.0
    %2328 = vmatprep.subr.mxu0 0.0
    %2329 = vmatpush1.msra.mxu0 0.0
    %2330 = vmatprep.subr.mxu0 0.0
    %2331 = vmatpush1.msra.mxu0 0.0
    %2332 = vmatprep.subr.mxu0 0.0
    %2333 = vmatpush1.msra.mxu0 0.0
    %2334 = vmatprep.subr.mxu0 0.0
    %2335 = vmatpush1.msra.mxu0 0.0
    %2336 = vmatprep.subr.mxu0 0.0
    %2337 = vmatpush1.msra.mxu0 0.0
    %2338 = vmatprep.subr.mxu0 0.0
    %2339 = vmatpush1.msra.mxu0 0.0
    %2340 = vmatprep.subr.mxu0 0.0
    %2341 = vmatpush1.msra.mxu0 0.0
    %2342 = vmatprep.subr.mxu0 0.0
    %2343 = vmatpush1.msra.mxu0 0.0
    %2344 = vmatprep.subr.mxu0 0.0
    %2345 = vmatpush1.msra.mxu0 0.0
    %2346 = vmatprep.subr.mxu0 0.0
    %2347 = vmatpush1.msra.mxu0 0.0
    %2348 = vmatprep.subr.mxu0 0.0
    %2349 = vmatpush1.msra.mxu0 0.0
    %2350 = vmatprep.mubr.f32.mxu0 0.0
    %2351 = vmatmul.mubr.f32.gmra.mrb[0].mxu0 %v2284
    %v2352 = vpop.f32.mrb[0].mxu0
    %v2353 = vadd.f32 0.0, %v2352
    %v2354 = vpop.f32.mrb[0].mxu0
    %2355 = vdwg.mxu0
    %v2357 = vrot.slane %v2353, 1
    %v2359 = vadd.f32 %v1501, %v2357
    %v2360 = vxor.u32 %v2359, 2147483648
    %v2361 = vmul.f32 %v2360, 1.442695
    %v2362 = vpow.pop %v2361
    %v2363 = vadd.f32 %v2362, 1.0
    %v2364 = vrcp.pop %v2363
    %v2365 = vmul.f32 1.0, %v2364
    %v2366 = vmul.f32 %v2365, 2.0
    %v2367 = vsub.f32 %v2366, 1.0
    %v2369 = vrot.slane %v2268, 7
    %v2371 = vmul.f32 %v2365, %v2369
    %2373 = vrot.lane.b32.xlu0 %v2367, 64
    %v2374 = vpop.permute.xlu0 %2373
    %v2376 = vmul.f32 %v2365, %v2374
    %2378 = vrot.lane.b32.xlu0 %v2376, 32
    %v2379 = vpop.permute.xlu0 %2378
    %v2381 = vadd.f32 %v2371, %v2379
    %v2382 = vtanh.pop %v2381
    %2384 = vrot.lane.b32.xlu0 %v2382, 64
    %v2385 = vpop.permute.xlu0 %2384
    %v2387 = vmul.f32 %v2365, %v2385
    %v2388 = vlaneseq
    %v2389 = vshrl.u32 %v2388, 7
    %v2390 = vsub.s32 7, %v2389
    %v2391 = vrot.slane %v2387, %v2390
    %v2392 = vsel %vm1187, %v2391, %v2279
    %2394 = vrot.lane.b32.xlu0 %v2392, 32
    %v2395 = vpop.permute.xlu0 %2394
    %2397 = vmatprep.subr.mxu0 0.0
    %2398 = vmatpush1.msra.mxu0 %v2395
    %2399 = vmatprep.subr.mxu0 0.0
    %2400 = vmatpush1.msra.mxu0 0.0
    %2401 = vmatprep.subr.mxu0 0.0
    %2402 = vmatpush1.msra.mxu0 0.0
    %2403 = vmatprep.subr.mxu0 0.0
    %2404 = vmatpush1.msra.mxu0 0.0
    %2405 = vmatprep.subr.mxu0 0.0
    %2406 = vmatpush1.msra.mxu0 0.0
    %2407 = vmatprep.subr.mxu0 0.0
    %2408 = vmatpush1.msra.mxu0 0.0
    %2409 = vmatprep.subr.mxu0 0.0
    %2410 = vmatpush1.msra.mxu0 0.0
    %2411 = vmatprep.subr.mxu0 0.0
    %2412 = vmatpush1.msra.mxu0 0.0
    %2413 = vmatprep.subr.mxu0 0.0
    %2414 = vmatpush1.msra.mxu0 0.0
    %2415 = vmatprep.subr.mxu0 0.0
    %2416 = vmatpush1.msra.mxu0 0.0
    %2417 = vmatprep.subr.mxu0 0.0
    %2418 = vmatpush1.msra.mxu0 0.0
    %2419 = vmatprep.subr.mxu0 0.0
    %2420 = vmatpush1.msra.mxu0 0.0
    %2421 = vmatprep.subr.mxu0 0.0
    %2422 = vmatpush1.msra.mxu0 0.0
    %2423 = vmatprep.subr.mxu0 0.0
    %2424 = vmatpush1.msra.mxu0 0.0
    %2425 = vmatprep.subr.mxu0 0.0
    %2426 = vmatpush1.msra.mxu0 0.0
    %2427 = vmatprep.subr.mxu0 0.0
    %2428 = vmatpush1.msra.mxu0 0.0
    %2429 = vmatprep.subr.mxu0 0.0
    %2430 = vmatpush1.msra.mxu0 0.0
    %2431 = vmatprep.subr.mxu0 0.0
    %2432 = vmatpush1.msra.mxu0 0.0
    %2433 = vmatprep.subr.mxu0 0.0
    %2434 = vmatpush1.msra.mxu0 0.0
    %2435 = vmatprep.subr.mxu0 0.0
    %2436 = vmatpush1.msra.mxu0 0.0
    %2437 = vmatprep.subr.mxu0 0.0
    %2438 = vmatpush1.msra.mxu0 0.0
    %2439 = vmatprep.subr.mxu0 0.0
    %2440 = vmatpush1.msra.mxu0 0.0
    %2441 = vmatprep.subr.mxu0 0.0
    %2442 = vmatpush1.msra.mxu0 0.0
    %2443 = vmatprep.subr.mxu0 0.0
    %2444 = vmatpush1.msra.mxu0 0.0
    %2445 = vmatprep.subr.mxu0 0.0
    %2446 = vmatpush1.msra.mxu0 0.0
    %2447 = vmatprep.subr.mxu0 0.0
    %2448 = vmatpush1.msra.mxu0 0.0
    %2449 = vmatprep.subr.mxu0 0.0
    %2450 = vmatpush1.msra.mxu0 0.0
    %2451 = vmatprep.subr.mxu0 0.0
    %2452 = vmatpush1.msra.mxu0 0.0
    %2453 = vmatprep.subr.mxu0 0.0
    %2454 = vmatpush1.msra.mxu0 0.0
    %2455 = vmatprep.subr.mxu0 0.0
    %2456 = vmatpush1.msra.mxu0 0.0
    %2457 = vmatprep.subr.mxu0 0.0
    %2458 = vmatpush1.msra.mxu0 0.0
    %2459 = vmatprep.subr.mxu0 0.0
    %2460 = vmatpush1.msra.mxu0 0.0
    %2461 = vmatprep.mubr.f32.mxu0 0.0
    %2462 = vmatmul.mubr.f32.gmra.mrb[0].mxu0 %v51
    %v2463 = vpop.f32.mrb[0].mxu0
    %v2464 = vadd.f32 0.0, %v2463
    %v2465 = vpop.f32.mrb[0].mxu0
    %2466 = vdwg.mxu0
    %v2467 = vsel %vm34, %v2395, %v2464
    %v2468 = vld [vmem:[%s1 + $0x8] sm:$0xff]
    %v2469 = vld [vmem:[%s1 + $0x10] sm:$0xff]
    %v2470 = vld [vmem:[%s1 + $0x18] sm:$0xff]
    %v2471 = vld [vmem:[%s1 + $0x20] sm:$0xff]
    %v2472 = vld [vmem:[%s1 + $0x28] sm:$0x1]
    %v2473 = vld [vmem:[%s1 + $0x30] sm:$0xff]
    %v2474 = vld [vmem:[%s1 + $0x38] sm:$0xff]
    %v2475 = vld [vmem:[%s1 + $0x40] sm:$0xff]
    %v2476 = vld [vmem:[%s1 + $0x48] sm:$0xff]
    %v2477 = vld [vmem:[%s1 + $0x50] sm:$0x1]
    %v2478 = vlaneseq
    %v2479 = vshrl.u32 %v2478, 7
    %v2480 = vsub.s32 0, %v2479
    %v2481 = vrot.slane %v2472, %v2480
    %v2483 = vsel %vm123, %v2467, 0
    %2485 = vmatprep.subr.mxu0 0.0
    %2486 = vmatpush1.msra.mxu0 %v2468
    %2487 = vmatprep.subr.mxu0 0.0
    %2488 = vmatpush1.msra.mxu0 %v2469
    %2489 = vmatprep.subr.mxu0 0.0
    %2490 = vmatpush1.msra.mxu0 %v2470
    %2491 = vmatprep.subr.mxu0 0.0
    %2492 = vmatpush1.msra.mxu0 %v2471
    %2493 = vmatprep.subr.mxu0 0.0
    %2494 = vmatpush1.msra.mxu0 0.0
    %2495 = vmatprep.subr.mxu0 0.0
    %2496 = vmatpush1.msra.mxu0 0.0
    %2497 = vmatprep.subr.mxu0 0.0
    %2498 = vmatpush1.msra.mxu0 0.0
    %2499 = vmatprep.subr.mxu0 0.0
    %2500 = vmatpush1.msra.mxu0 0.0
    %2501 = vmatprep.subr.mxu0 0.0
    %2502 = vmatpush1.msra.mxu0 0.0
    %2503 = vmatprep.subr.mxu0 0.0
    %2504 = vmatpush1.msra.mxu0 0.0
    %2505 = vmatprep.subr.mxu0 0.0
    %2506 = vmatpush1.msra.mxu0 0.0
    %2507 = vmatprep.subr.mxu0 0.0
    %2508 = vmatpush1.msra.mxu0 0.0
    %2509 = vmatprep.subr.mxu0 0.0
    %2510 = vmatpush1.msra.mxu0 0.0
    %2511 = vmatprep.subr.mxu0 0.0
    %2512 = vmatpush1.msra.mxu0 0.0
    %2513 = vmatprep.subr.mxu0 0.0
    %2514 = vmatpush1.msra.mxu0 0.0
    %2515 = vmatprep.subr.mxu0 0.0
    %2516 = vmatpush1.msra.mxu0 0.0
    %2517 = vmatprep.subr.mxu0 0.0
    %2518 = vmatpush1.msra.mxu0 0.0
    %2519 = vmatprep.subr.mxu0 0.0
    %2520 = vmatpush1.msra.mxu0 0.0
    %2521 = vmatprep.subr.mxu0 0.0
    %2522 = vmatpush1.msra.mxu0 0.0
    %2523 = vmatprep.subr.mxu0 0.0
    %2524 = vmatpush1.msra.mxu0 0.0
    %2525 = vmatprep.subr.mxu0 0.0
    %2526 = vmatpush1.msra.mxu0 0.0
    %2527 = vmatprep.subr.mxu0 0.0
    %2528 = vmatpush1.msra.mxu0 0.0
    %2529 = vmatprep.subr.mxu0 0.0
    %2530 = vmatpush1.msra.mxu0 0.0
    %2531 = vmatprep.subr.mxu0 0.0
    %2532 = vmatpush1.msra.mxu0 0.0
    %2533 = vmatprep.subr.mxu0 0.0
    %2534 = vmatpush1.msra.mxu0 0.0
    %2535 = vmatprep.subr.mxu0 0.0
    %2536 = vmatpush1.msra.mxu0 0.0
    %2537 = vmatprep.subr.mxu0 0.0
    %2538 = vmatpush1.msra.mxu0 0.0
    %2539 = vmatprep.subr.mxu0 0.0
    %2540 = vmatpush1.msra.mxu0 0.0
    %2541 = vmatprep.subr.mxu0 0.0
    %2542 = vmatpush1.msra.mxu0 0.0
    %2543 = vmatprep.subr.mxu0 0.0
    %2544 = vmatpush1.msra.mxu0 0.0
    %2545 = vmatprep.subr.mxu0 0.0
    %2546 = vmatpush1.msra.mxu0 0.0
    %2547 = vmatprep.subr.mxu0 0.0
    %2548 = vmatpush1.msra.mxu0 0.0
    %2549 = vmatprep.mubr.f32.mxu0 0.0
    %2550 = vmatmul.mubr.f32.gmra.mrb[0].mxu0 %v2483
    %v2551 = vpop.f32.mrb[0].mxu0
    %v2552 = vadd.f32 %v2481, %v2551
    %v2553 = vpop.f32.mrb[0].mxu0
    %2554 = vdwg.mxu0
    %v2555 = vmax.f32 %v2552, 0.0
    %v2556 = vlaneseq
    %v2557 = vshrl.u32 %v2556, 7
    %v2558 = vsub.s32 0, %v2557
    %v2559 = vrot.slane %v2477, %v2558
    %v2561 = vsel %vm123, %v2555, 0
    %2563 = vmatprep.subr.mxu0 0.0
    %2564 = vmatpush1.msra.mxu0 %v2473
    %2565 = vmatprep.subr.mxu0 0.0
    %2566 = vmatpush1.msra.mxu0 %v2474
    %2567 = vmatprep.subr.mxu0 0.0
    %2568 = vmatpush1.msra.mxu0 %v2475
    %2569 = vmatprep.subr.mxu0 0.0
    %2570 = vmatpush1.msra.mxu0 %v2476
    %2571 = vmatprep.subr.mxu0 0.0
    %2572 = vmatpush1.msra.mxu0 0.0
    %2573 = vmatprep.subr.mxu0 0.0
    %2574 = vmatpush1.msra.mxu0 0.0
    %2575 = vmatprep.subr.mxu0 0.0
    %2576 = vmatpush1.msra.mxu0 0.0
    %2577 = vmatprep.subr.mxu0 0.0
    %2578 = vmatpush1.msra.mxu0 0.0
    %2579 = vmatprep.subr.mxu0 0.0
    %2580 = vmatpush1.msra.mxu0 0.0
    %2581 = vmatprep.subr.mxu0 0.0
    %2582 = vmatpush1.msra.mxu0 0.0
    %2583 = vmatprep.subr.mxu0 0.0
    %2584 = vmatpush1.msra.mxu0 0.0
    %2585 = vmatprep.subr.mxu0 0.0
    %2586 = vmatpush1.msra.mxu0 0.0
    %2587 = vmatprep.subr.mxu0 0.0
    %2588 = vmatpush1.msra.mxu0 0.0
    %2589 = vmatprep.subr.mxu0 0.0
    %2590 = vmatpush1.msra.mxu0 0.0
    %2591 = vmatprep.subr.mxu0 0.0
    %2592 = vmatpush1.msra.mxu0 0.0
    %2593 = vmatprep.subr.mxu0 0.0
    %2594 = vmatpush1.msra.mxu0 0.0
    %2595 = vmatprep.subr.mxu0 0.0
    %2596 = vmatpush1.msra.mxu0 0.0
    %2597 = vmatprep.subr.mxu0 0.0
    %2598 = vmatpush1.msra.mxu0 0.0
    %2599 = vmatprep.subr.mxu0 0.0
    %2600 = vmatpush1.msra.mxu0 0.0
    %2601 = vmatprep.subr.mxu0 0.0
    %2602 = vmatpush1.msra.mxu0 0.0
    %2603 = vmatprep.subr.mxu0 0.0
    %2604 = vmatpush1.msra.mxu0 0.0
    %2605 = vmatprep.subr.mxu0 0.0
    %2606 = vmatpush1.msra.mxu0 0.0
    %2607 = vmatprep.subr.mxu0 0.0
    %2608 = vmatpush1.msra.mxu0 0.0
    %2609 = vmatprep.subr.mxu0 0.0
    %2610 = vmatpush1.msra.mxu0 0.0
    %2611 = vmatprep.subr.mxu0 0.0
    %2612 = vmatpush1.msra.mxu0 0.0
    %2613 = vmatprep.subr.mxu0 0.0
    %2614 = vmatpush1.msra.mxu0 0.0
    %2615 = vmatprep.subr.mxu0 0.0
    %2616 = vmatpush1.msra.mxu0 0.0
    %2617 = vmatprep.subr.mxu0 0.0
    %2618 = vmatpush1.msra.mxu0 0.0
    %2619 = vmatprep.subr.mxu0 0.0
    %2620 = vmatpush1.msra.mxu0 0.0
    %2621 = vmatprep.subr.mxu0 0.0
    %2622 = vmatpush1.msra.mxu0 0.0
    %2623 = vmatprep.subr.mxu0 0.0
    %2624 = vmatpush1.msra.mxu0 0.0
    %2625 = vmatprep.subr.mxu0 0.0
    %2626 = vmatpush1.msra.mxu0 0.0
    %2627 = vmatprep.mubr.f32.mxu0 0.0
    %2628 = vmatmul.mubr.f32.gmra.mrb[0].mxu0 %v2561
    %v2629 = vpop.f32.mrb[0].mxu0
    %v2630 = vadd.f32 %v2559, %v2629
    %v2631 = vpop.f32.mrb[0].mxu0
    %2632 = vdwg.mxu0
    %2633 = vst.msk [vmem:[#allocation5] sm:$0xff] %vm123, %v2630
    // Predicated region
    $region14: #{tpu_custom_call.1} parent=1 // pred_check
      _
    $region15: #{tpu_custom_call.1} parent=1 // pred_check_branch
      %2635 = sbr.rel (0) target = $region17
    $region16: #{tpu_custom_call.1} parent=1 // pred_region
      %s2637 = ssub.s32 128, 128
      %2638 = vsyncadd [#allocation4], %s2637
      %s2640 = sshll.u32 [#allocation5], 4
      %s2641 = int_to_ptr.vmem [resolvable:$true] %s2640
      %2643 = dma.vmem_to_hbm [thread:$0]  %s2641, 128, %s2, [#allocation4]
    $region17: #{tpu_custom_call.1} parent=1 // pred_fallthru
      _
    // Predicated region
    $region18: #{tpu_custom_call.1} parent=1 // pred_check
      _
    $region19: #{tpu_custom_call.1} parent=1 // pred_check_branch
      %2645 = sbr.rel (0) target = $region21
    $region20: #{tpu_custom_call.1} parent=1 // pred_region
      %2646 = dma.done [#allocation4], 128
    $region21: #{tpu_custom_call.1} parent=1 // pred_fallthru
      _
    %2647 = vsyncpa [#allocation3], 1
    %2648 = vsyncpa [#allocation4], 1

</llo_original>
